<compile_context>
chip_gen: v6e
topology: v6e:2x2x1
jax: 0.10.0
libtpu: 0.0.40
codegen_flags: <defaults>
</compile_context>

<pallas_src>
import jax
import jax.numpy as jnp
from jax import lax
from jax.experimental import pallas as pl
from jax.experimental.pallas import tpu as pltpu


def _dot_prod_attn_kernel(q_ref, k_ref, v_ref, o_ref):
    # Batch-in-lanes layout (TB = batch tile on the lane axis):
    #   q_ref: (Lq, D, TB)   k_ref: (Lk, D, TB)
    #   v_ref: (Lk, Dv, TB)  o_ref: (Lq, Dv, TB)
    Lq = q_ref.shape[0]
    Lk = k_ref.shape[0]

    for qi in range(Lq):                         # Lq = 8 -> small static unroll
        q_row = q_ref[qi].astype(jnp.float32)    # (D, TB)
        z = None                                 # (Dv, TB) accumulator
        for ki in range(Lk):
            k_row = k_ref[ki].astype(jnp.float32)            # (D, TB)
            # score[qi, ki, :] = sum_d Q[qi, d, :] * K[ki, d, :]  -> (1, TB)
            s_qk = jnp.sum(q_row * k_row, axis=0, keepdims=True)
            # z[qi, :, :] += score[qi, ki, :] * V[ki, :, :]        (VPU bcast)
            term = s_qk * v_ref[ki].astype(jnp.float32)          # (Dv, TB)
            z = term if z is None else z + term

        # softmax over the feature axis Dv (torch dim=2), per (qi, batch lane).
        m = jnp.max(z, axis=0, keepdims=True)                    # (1, TB)
        e = jnp.exp(z - m)                                       # (Dv, TB)
        denom = jnp.sum(e, axis=0, keepdims=True)                # (1, TB)
        o_ref[qi] = (e / denom).astype(o_ref.dtype)              # lane-dense store


def _choose_batch_tiling(B, max_tb):
    """Pick (tb, n_blocks, padded_B) for the lane-axis batch tiling.

    Block count is chosen first (>=2 whenever B>128, more if a single block
    would exceed max_tb lanes), then tb = cdiv(chunks, n_blocks) * 128, so the
    padding waste is at most ~one 128-lane chunk per block.
    """
    LANE = 128
    if B <= LANE:
        return B, 1, B                       # single full-extent block, no pad
    max_tb = max(LANE, (max_tb // LANE) * LANE)
    chunks = pl.cdiv(B, LANE)                # 128-lane chunks needed
    n_blocks = max(2, pl.cdiv(chunks * LANE, max_tb))
    tb_chunks = pl.cdiv(chunks, n_blocks)
    tb = tb_chunks * LANE
    n_blocks = pl.cdiv(chunks, tb_chunks)    # drop empty trailing blocks
    return tb, n_blocks, n_blocks * tb


def dot_prod_attention(Q, K, V, *, block_b=1024):
    """Pallas TPU implementation of Dot_Prod_Attention.forward."""
    B, Lq, D = Q.shape
    _, Lk, _ = K.shape
    Dv = V.shape[-1]
    dtype = Q.dtype
    itemsize = jnp.dtype(dtype).itemsize

    # --- batch-in-lanes layout: put B on the minor (lane) axis ---
    Qt = jnp.transpose(Q, (1, 2, 0))         # (Lq, D, B)
    Kt = jnp.transpose(K, (1, 2, 0))         # (Lk, D, B)
    Vt = jnp.transpose(V, (1, 2, 0))         # (Lk, Dv, B)

    tb, n_blocks, Bp = _choose_batch_tiling(B, block_b)
    if Bp != B:
        pad = Bp - B
        Qt = jnp.pad(Qt, ((0, 0), (0, 0), (0, pad)))
        Kt = jnp.pad(Kt, ((0, 0), (0, 0), (0, pad)))
        Vt = jnp.pad(Vt, ((0, 0), (0, 0), (0, pad)))

    # Double-buffered tiles + headroom for in-kernel temporaries; clamp to a
    # budget that is safe on every generation (v7x: 64 MiB physical per TC).
    tile_bytes = itemsize * tb * (Lq * D + Lk * D + Lk * Dv + Lq * Dv)
    vmem_limit = int(min(48 << 20, max(32 << 20, 2 * tile_bytes + (8 << 20))))

    cost = pl.CostEstimate(
        flops=2 * Bp * Lq * Lk * (D + Dv),
        transcendentals=Bp * Lq * Dv,
        bytes_accessed=itemsize * Bp * (Lq * D + Lk * D + Lk * Dv + Lq * Dv),
    )

    out_t = pl.pallas_call(
        _dot_prod_attn_kernel,
        out_shape=jax.ShapeDtypeStruct((Lq, Dv, Bp), dtype),
        grid=(n_blocks,),
        in_specs=[
            pl.BlockSpec((Lq, D, tb), lambda b: (0, 0, b)),
            pl.BlockSpec((Lk, D, tb), lambda b: (0, 0, b)),
            pl.BlockSpec((Lk, Dv, tb), lambda b: (0, 0, b)),
        ],
        out_specs=pl.BlockSpec((Lq, Dv, tb), lambda b: (0, 0, b)),
        compiler_params=pltpu.CompilerParams(
            dimension_semantics=("parallel",),
            vmem_limit_bytes=vmem_limit,
        ),
        cost_estimate=cost,
    )(Qt, Kt, Vt)

    # Back to the module's (B, Lq, Dv) layout, dropping padded batches.
    return jnp.transpose(out_t[:, :, :B], (2, 0, 1))


def _reference(Q, K, V):
    hi = lax.Precision.HIGHEST
    s = jnp.einsum("bqd,bkd->bqk", Q, K, precision=hi)
    z = jnp.einsum("bqk,bkv->bqv", s, V, precision=hi)
    return jax.nn.softmax(z, axis=2)


if __name__ == "__main__":
    # Small shapes consistent with the module: batch=2, seq=8, hidden=32.
    B, Lq, Lk, D, Dv = 2, 8, 8, 32, 32
    kq, kk, kv = jax.random.split(jax.random.PRNGKey(0), 3)
    Q = jax.random.normal(kq, (B, Lq, D), dtype=jnp.float32)
    K = jax.random.normal(kk, (B, Lk, D), dtype=jnp.float32)
    V = jax.random.normal(kv, (B, Lk, Dv), dtype=jnp.float32)

    out = dot_prod_attention(Q, K, V)
    jax.block_until_ready(out)
    ref = _reference(Q, K, V)
    assert out.shape == (B, Lq, Dv)
    assert jnp.allclose(out, ref, atol=2e-3, rtol=2e-3), (
        float(jnp.max(jnp.abs(out - ref))))

    # Ragged batch: exercises lane padding and the 2-block grid (dual-TC path).
    B2 = 130
    kq2, kk2, kv2 = jax.random.split(jax.random.PRNGKey(1), 3)
    Q2 = jax.random.normal(kq2, (B2, Lq, D), dtype=jnp.float32)
    K2 = jax.random.normal(kk2, (B2, Lk, D), dtype=jnp.float32)
    V2 = jax.random.normal(kv2, (B2, Lk, Dv), dtype=jnp.float32)
    out2 = dot_prod_attention(Q2, K2, V2)
    jax.block_until_ready(out2)
    ref2 = _reference(Q2, K2, V2)
    assert out2.shape == (B2, Lq, Dv)
    assert jnp.allclose(out2, ref2, atol=2e-3, rtol=2e-3), (
        float(jnp.max(jnp.abs(out2 - ref2))))

    # Larger batch: multi-lane-chunk tiles (tb=256) across 2 grid blocks.
    B3 = 384
    kq3, kk3, kv3 = jax.random.split(jax.random.PRNGKey(2), 3)
    Q3 = jax.random.normal(kq3, (B3, Lq, D), dtype=jnp.float32)
    K3 = jax.random.normal(kk3, (B3, Lk, D), dtype=jnp.float32)
    V3 = jax.random.normal(kv3, (B3, Lk, Dv), dtype=jnp.float32)
    out3 = dot_prod_attention(Q3, K3, V3)
    jax.block_until_ready(out3)
    ref3 = _reference(Q3, K3, V3)
    assert out3.shape == (B3, Lq, Dv)
    assert jnp.allclose(out3, ref3, atol=2e-3, rtol=2e-3), (
        float(jnp.max(jnp.abs(out3 - ref3))))

    print("KERNEL_OK")
</pallas_src>

<mosaic_0001>
module attributes {stable_mosaic.version = 11 : i64} {
  func.func @_dot_prod_attn_kernel(%arg0: i32, %arg1: memref<8x32x2xf32, #tpu.memory_space<vmem>>, %arg2: memref<8x32x2xf32, #tpu.memory_space<vmem>>, %arg3: memref<8x32x2xf32, #tpu.memory_space<vmem>>, %arg4: memref<8x32x2xf32, #tpu.memory_space<vmem>>) attributes {dimension_semantics = [#tpu.dimension_semantics<parallel>], iteration_bounds = array<i64: 1>, scalar_prefetch = 0 : i64, scratch_operands = 0 : i64, tpu.core_type = #tpu.core_type<tc>, window_params = [{transform_indices = @transform_0, window_bounds = array<i64: 8, 32, 2>}, {transform_indices = @transform_1, window_bounds = array<i64: 8, 32, 2>}, {transform_indices = @transform_2, window_bounds = array<i64: 8, 32, 2>}, {transform_indices = @transform_3, window_bounds = array<i64: 8, 32, 2>}]} {
    %c0 = arith.constant 0 : index
    %c0_0 = arith.constant 0 : index
    %c0_1 = arith.constant 0 : index
    %0 = vector.load %arg1[%c0, %c0_0, %c0_1] : memref<8x32x2xf32, #tpu.memory_space<vmem>>, vector<1x32x2xf32>
    %1 = vector.shape_cast %0 : vector<1x32x2xf32> to vector<32x2xf32>
    %c0_2 = arith.constant 0 : index
    %c0_3 = arith.constant 0 : index
    %c0_4 = arith.constant 0 : index
    %2 = vector.load %arg2[%c0_2, %c0_3, %c0_4] : memref<8x32x2xf32, #tpu.memory_space<vmem>>, vector<1x32x2xf32>
    %3 = vector.shape_cast %2 : vector<1x32x2xf32> to vector<32x2xf32>
    %4 = arith.mulf %1, %3 : vector<32x2xf32>
    %cst = arith.constant dense<0.000000e+00> : vector<2xf32>
    %5 = vector.multi_reduction <add>, %4, %cst [0] : vector<32x2xf32> to vector<2xf32>
    %6 = vector.shape_cast %5 : vector<2xf32> to vector<1x2xf32>
    %c0_5 = arith.constant 0 : index
    %c0_6 = arith.constant 0 : index
    %c0_7 = arith.constant 0 : index
    %7 = vector.load %arg3[%c0_5, %c0_6, %c0_7] : memref<8x32x2xf32, #tpu.memory_space<vmem>>, vector<1x32x2xf32>
    %8 = vector.shape_cast %7 : vector<1x32x2xf32> to vector<32x2xf32>
    %9 = vector.broadcast %6 : vector<1x2xf32> to vector<32x2xf32>
    %10 = arith.mulf %9, %8 : vector<32x2xf32>
    %c1 = arith.constant 1 : index
    %c0_8 = arith.constant 0 : index
    %c0_9 = arith.constant 0 : index
    %11 = vector.load %arg2[%c1, %c0_8, %c0_9] : memref<8x32x2xf32, #tpu.memory_space<vmem>>, vector<1x32x2xf32>
    %12 = vector.shape_cast %11 : vector<1x32x2xf32> to vector<32x2xf32>
    %13 = arith.mulf %1, %12 : vector<32x2xf32>
    %cst_10 = arith.constant dense<0.000000e+00> : vector<2xf32>
    %14 = vector.multi_reduction <add>, %13, %cst_10 [0] : vector<32x2xf32> to vector<2xf32>
    %15 = vector.shape_cast %14 : vector<2xf32> to vector<1x2xf32>
    %c1_11 = arith.constant 1 : index
    %c0_12 = arith.constant 0 : index
    %c0_13 = arith.constant 0 : index
    %16 = vector.load %arg3[%c1_11, %c0_12, %c0_13] : memref<8x32x2xf32, #tpu.memory_space<vmem>>, vector<1x32x2xf32>
    %17 = vector.shape_cast %16 : vector<1x32x2xf32> to vector<32x2xf32>
    %18 = vector.broadcast %15 : vector<1x2xf32> to vector<32x2xf32>
    %19 = arith.mulf %18, %17 : vector<32x2xf32>
    %20 = arith.addf %10, %19 : vector<32x2xf32>
    %c2 = arith.constant 2 : index
    %c0_14 = arith.constant 0 : index
    %c0_15 = arith.constant 0 : index
    %21 = vector.load %arg2[%c2, %c0_14, %c0_15] : memref<8x32x2xf32, #tpu.memory_space<vmem>>, vector<1x32x2xf32>
    %22 = vector.shape_cast %21 : vector<1x32x2xf32> to vector<32x2xf32>
    %23 = arith.mulf %1, %22 : vector<32x2xf32>
    %cst_16 = arith.constant dense<0.000000e+00> : vector<2xf32>
    %24 = vector.multi_reduction <add>, %23, %cst_16 [0] : vector<32x2xf32> to vector<2xf32>
    %25 = vector.shape_cast %24 : vector<2xf32> to vector<1x2xf32>
    %c2_17 = arith.constant 2 : index
    %c0_18 = arith.constant 0 : index
    %c0_19 = arith.constant 0 : index
    %26 = vector.load %arg3[%c2_17, %c0_18, %c0_19] : memref<8x32x2xf32, #tpu.memory_space<vmem>>, vector<1x32x2xf32>
    %27 = vector.shape_cast %26 : vector<1x32x2xf32> to vector<32x2xf32>
    %28 = vector.broadcast %25 : vector<1x2xf32> to vector<32x2xf32>
    %29 = arith.mulf %28, %27 : vector<32x2xf32>
    %30 = arith.addf %20, %29 : vector<32x2xf32>
    %c3 = arith.constant 3 : index
    %c0_20 = arith.constant 0 : index
    %c0_21 = arith.constant 0 : index
    %31 = vector.load %arg2[%c3, %c0_20, %c0_21] : memref<8x32x2xf32, #tpu.memory_space<vmem>>, vector<1x32x2xf32>
    %32 = vector.shape_cast %31 : vector<1x32x2xf32> to vector<32x2xf32>
    %33 = arith.mulf %1, %32 : vector<32x2xf32>
    %cst_22 = arith.constant dense<0.000000e+00> : vector<2xf32>
    %34 = vector.multi_reduction <add>, %33, %cst_22 [0] : vector<32x2xf32> to vector<2xf32>
    %35 = vector.shape_cast %34 : vector<2xf32> to vector<1x2xf32>
    %c3_23 = arith.constant 3 : index
    %c0_24 = arith.constant 0 : index
    %c0_25 = arith.constant 0 : index
    %36 = vector.load %arg3[%c3_23, %c0_24, %c0_25] : memref<8x32x2xf32, #tpu.memory_space<vmem>>, vector<1x32x2xf32>
    %37 = vector.shape_cast %36 : vector<1x32x2xf32> to vector<32x2xf32>
    %38 = vector.broadcast %35 : vector<1x2xf32> to vector<32x2xf32>
    %39 = arith.mulf %38, %37 : vector<32x2xf32>
    %40 = arith.addf %30, %39 : vector<32x2xf32>
    %c4 = arith.constant 4 : index
    %c0_26 = arith.constant 0 : index
    %c0_27 = arith.constant 0 : index
    %41 = vector.load %arg2[%c4, %c0_26, %c0_27] : memref<8x32x2xf32, #tpu.memory_space<vmem>>, vector<1x32x2xf32>
    %42 = vector.shape_cast %41 : vector<1x32x2xf32> to vector<32x2xf32>
    %43 = arith.mulf %1, %42 : vector<32x2xf32>
    %cst_28 = arith.constant dense<0.000000e+00> : vector<2xf32>
    %44 = vector.multi_reduction <add>, %43, %cst_28 [0] : vector<32x2xf32> to vector<2xf32>
    %45 = vector.shape_cast %44 : vector<2xf32> to vector<1x2xf32>
    %c4_29 = arith.constant 4 : index
    %c0_30 = arith.constant 0 : index
    %c0_31 = arith.constant 0 : index
    %46 = vector.load %arg3[%c4_29, %c0_30, %c0_31] : memref<8x32x2xf32, #tpu.memory_space<vmem>>, vector<1x32x2xf32>
    %47 = vector.shape_cast %46 : vector<1x32x2xf32> to vector<32x2xf32>
    %48 = vector.broadcast %45 : vector<1x2xf32> to vector<32x2xf32>
    %49 = arith.mulf %48, %47 : vector<32x2xf32>
    %50 = arith.addf %40, %49 : vector<32x2xf32>
    %c5 = arith.constant 5 : index
    %c0_32 = arith.constant 0 : index
    %c0_33 = arith.constant 0 : index
    %51 = vector.load %arg2[%c5, %c0_32, %c0_33] : memref<8x32x2xf32, #tpu.memory_space<vmem>>, vector<1x32x2xf32>
    %52 = vector.shape_cast %51 : vector<1x32x2xf32> to vector<32x2xf32>
    %53 = arith.mulf %1, %52 : vector<32x2xf32>
    %cst_34 = arith.constant dense<0.000000e+00> : vector<2xf32>
    %54 = vector.multi_reduction <add>, %53, %cst_34 [0] : vector<32x2xf32> to vector<2xf32>
    %55 = vector.shape_cast %54 : vector<2xf32> to vector<1x2xf32>
    %c5_35 = arith.constant 5 : index
    %c0_36 = arith.constant 0 : index
    %c0_37 = arith.constant 0 : index
    %56 = vector.load %arg3[%c5_35, %c0_36, %c0_37] : memref<8x32x2xf32, #tpu.memory_space<vmem>>, vector<1x32x2xf32>
    %57 = vector.shape_cast %56 : vector<1x32x2xf32> to vector<32x2xf32>
    %58 = vector.broadcast %55 : vector<1x2xf32> to vector<32x2xf32>
    %59 = arith.mulf %58, %57 : vector<32x2xf32>
    %60 = arith.addf %50, %59 : vector<32x2xf32>
    %c6 = arith.constant 6 : index
    %c0_38 = arith.constant 0 : index
    %c0_39 = arith.constant 0 : index
    %61 = vector.load %arg2[%c6, %c0_38, %c0_39] : memref<8x32x2xf32, #tpu.memory_space<vmem>>, vector<1x32x2xf32>
    %62 = vector.shape_cast %61 : vector<1x32x2xf32> to vector<32x2xf32>
    %63 = arith.mulf %1, %62 : vector<32x2xf32>
    %cst_40 = arith.constant dense<0.000000e+00> : vector<2xf32>
    %64 = vector.multi_reduction <add>, %63, %cst_40 [0] : vector<32x2xf32> to vector<2xf32>
    %65 = vector.shape_cast %64 : vector<2xf32> to vector<1x2xf32>
    %c6_41 = arith.constant 6 : index
    %c0_42 = arith.constant 0 : index
    %c0_43 = arith.constant 0 : index
    %66 = vector.load %arg3[%c6_41, %c0_42, %c0_43] : memref<8x32x2xf32, #tpu.memory_space<vmem>>, vector<1x32x2xf32>
    %67 = vector.shape_cast %66 : vector<1x32x2xf32> to vector<32x2xf32>
    %68 = vector.broadcast %65 : vector<1x2xf32> to vector<32x2xf32>
    %69 = arith.mulf %68, %67 : vector<32x2xf32>
    %70 = arith.addf %60, %69 : vector<32x2xf32>
    %c7 = arith.constant 7 : index
    %c0_44 = arith.constant 0 : index
    %c0_45 = arith.constant 0 : index
    %71 = vector.load %arg2[%c7, %c0_44, %c0_45] : memref<8x32x2xf32, #tpu.memory_space<vmem>>, vector<1x32x2xf32>
    %72 = vector.shape_cast %71 : vector<1x32x2xf32> to vector<32x2xf32>
    %73 = arith.mulf %1, %72 : vector<32x2xf32>
    %cst_46 = arith.constant dense<0.000000e+00> : vector<2xf32>
    %74 = vector.multi_reduction <add>, %73, %cst_46 [0] : vector<32x2xf32> to vector<2xf32>
    %75 = vector.shape_cast %74 : vector<2xf32> to vector<1x2xf32>
    %c7_47 = arith.constant 7 : index
    %c0_48 = arith.constant 0 : index
    %c0_49 = arith.constant 0 : index
    %76 = vector.load %arg3[%c7_47, %c0_48, %c0_49] : memref<8x32x2xf32, #tpu.memory_space<vmem>>, vector<1x32x2xf32>
    %77 = vector.shape_cast %76 : vector<1x32x2xf32> to vector<32x2xf32>
    %78 = vector.broadcast %75 : vector<1x2xf32> to vector<32x2xf32>
    %79 = arith.mulf %78, %77 : vector<32x2xf32>
    %80 = arith.addf %70, %79 : vector<32x2xf32>
    %cst_50 = arith.constant dense<0xFF800000> : vector<2xf32>
    %81 = vector.multi_reduction <maximumf>, %80, %cst_50 [0] : vector<32x2xf32> to vector<2xf32>
    %82 = vector.shape_cast %81 : vector<2xf32> to vector<1x2xf32>
    %83 = vector.broadcast %82 : vector<1x2xf32> to vector<32x2xf32>
    %84 = arith.subf %80, %83 : vector<32x2xf32>
    %85 = math.exp %84 : vector<32x2xf32>
    %cst_51 = arith.constant dense<0.000000e+00> : vector<2xf32>
    %86 = vector.multi_reduction <add>, %85, %cst_51 [0] : vector<32x2xf32> to vector<2xf32>
    %87 = vector.shape_cast %86 : vector<2xf32> to vector<1x2xf32>
    %88 = vector.broadcast %87 : vector<1x2xf32> to vector<32x2xf32>
    %89 = arith.divf %85, %88 : vector<32x2xf32>
    %c0_52 = arith.constant 0 : index
    %c0_53 = arith.constant 0 : index
    %c0_54 = arith.constant 0 : index
    %90 = vector.load %arg4[%c0_52, %c0_53, %c0_54] : memref<8x32x2xf32, #tpu.memory_space<vmem>>, vector<1x32x2xf32>
    %91 = vector.shape_cast %90 : vector<1x32x2xf32> to vector<32x2xf32>
    %92 = vector.shape_cast %89 : vector<32x2xf32> to vector<1x32x2xf32>
    tpu.vector_store %arg4[%c0_52, %c0_53, %c0_54], %92 {strides = array<i32>} : memref<8x32x2xf32, #tpu.memory_space<vmem>>, vector<1x32x2xf32>,
    %c1_55 = arith.constant 1 : index
    %c0_56 = arith.constant 0 : index
    %c0_57 = arith.constant 0 : index
    %93 = vector.load %arg1[%c1_55, %c0_56, %c0_57] : memref<8x32x2xf32, #tpu.memory_space<vmem>>, vector<1x32x2xf32>
    %94 = vector.shape_cast %93 : vector<1x32x2xf32> to vector<32x2xf32>
    %c0_58 = arith.constant 0 : index
    %c0_59 = arith.constant 0 : index
    %c0_60 = arith.constant 0 : index
    %95 = vector.load %arg2[%c0_58, %c0_59, %c0_60] : memref<8x32x2xf32, #tpu.memory_space<vmem>>, vector<1x32x2xf32>
    %96 = vector.shape_cast %95 : vector<1x32x2xf32> to vector<32x2xf32>
    %97 = arith.mulf %94, %96 : vector<32x2xf32>
    %cst_61 = arith.constant dense<0.000000e+00> : vector<2xf32>
    %98 = vector.multi_reduction <add>, %97, %cst_61 [0] : vector<32x2xf32> to vector<2xf32>
    %99 = vector.shape_cast %98 : vector<2xf32> to vector<1x2xf32>
    %c0_62 = arith.constant 0 : index
    %c0_63 = arith.constant 0 : index
    %c0_64 = arith.constant 0 : index
    %100 = vector.load %arg3[%c0_62, %c0_63, %c0_64] : memref<8x32x2xf32, #tpu.memory_space<vmem>>, vector<1x32x2xf32>
    %101 = vector.shape_cast %100 : vector<1x32x2xf32> to vector<32x2xf32>
    %102 = vector.broadcast %99 : vector<1x2xf32> to vector<32x2xf32>
    %103 = arith.mulf %102, %101 : vector<32x2xf32>
    %c1_65 = arith.constant 1 : index
    %c0_66 = arith.constant 0 : index
    %c0_67 = arith.constant 0 : index
    %104 = vector.load %arg2[%c1_65, %c0_66, %c0_67] : memref<8x32x2xf32, #tpu.memory_space<vmem>>, vector<1x32x2xf32>
    %105 = vector.shape_cast %104 : vector<1x32x2xf32> to vector<32x2xf32>
    %106 = arith.mulf %94, %105 : vector<32x2xf32>
    %cst_68 = arith.constant dense<0.000000e+00> : vector<2xf32>
    %107 = vector.multi_reduction <add>, %106, %cst_68 [0] : vector<32x2xf32> to vector<2xf32>
    %108 = vector.shape_cast %107 : vector<2xf32> to vector<1x2xf32>
    %c1_69 = arith.constant 1 : index
    %c0_70 = arith.constant 0 : index
    %c0_71 = arith.constant 0 : index
    %109 = vector.load %arg3[%c1_69, %c0_70, %c0_71] : memref<8x32x2xf32, #tpu.memory_space<vmem>>, vector<1x32x2xf32>
    %110 = vector.shape_cast %109 : vector<1x32x2xf32> to vector<32x2xf32>
    %111 = vector.broadcast %108 : vector<1x2xf32> to vector<32x2xf32>
    %112 = arith.mulf %111, %110 : vector<32x2xf32>
    %113 = arith.addf %103, %112 : vector<32x2xf32>
    %c2_72 = arith.constant 2 : index
    %c0_73 = arith.constant 0 : index
    %c0_74 = arith.constant 0 : index
    %114 = vector.load %arg2[%c2_72, %c0_73, %c0_74] : memref<8x32x2xf32, #tpu.memory_space<vmem>>, vector<1x32x2xf32>
    %115 = vector.shape_cast %114 : vector<1x32x2xf32> to vector<32x2xf32>
    %116 = arith.mulf %94, %115 : vector<32x2xf32>
    %cst_75 = arith.constant dense<0.000000e+00> : vector<2xf32>
    %117 = vector.multi_reduction <add>, %116, %cst_75 [0] : vector<32x2xf32> to vector<2xf32>
    %118 = vector.shape_cast %117 : vector<2xf32> to vector<1x2xf32>
    %c2_76 = arith.constant 2 : index
    %c0_77 = arith.constant 0 : index
    %c0_78 = arith.constant 0 : index
    %119 = vector.load %arg3[%c2_76, %c0_77, %c0_78] : memref<8x32x2xf32, #tpu.memory_space<vmem>>, vector<1x32x2xf32>
    %120 = vector.shape_cast %119 : vector<1x32x2xf32> to vector<32x2xf32>
    %121 = vector.broadcast %118 : vector<1x2xf32> to vector<32x2xf32>
    %122 = arith.mulf %121, %120 : vector<32x2xf32>
    %123 = arith.addf %113, %122 : vector<32x2xf32>
    %c3_79 = arith.constant 3 : index
    %c0_80 = arith.constant 0 : index
    %c0_81 = arith.constant 0 : index
    %124 = vector.load %arg2[%c3_79, %c0_80, %c0_81] : memref<8x32x2xf32, #tpu.memory_space<vmem>>, vector<1x32x2xf32>
    %125 = vector.shape_cast %124 : vector<1x32x2xf32> to vector<32x2xf32>
    %126 = arith.mulf %94, %125 : vector<32x2xf32>
    %cst_82 = arith.constant dense<0.000000e+00> : vector<2xf32>
    %127 = vector.multi_reduction <add>, %126, %cst_82 [0] : vector<32x2xf32> to vector<2xf32>
    %128 = vector.shape_cast %127 : vector<2xf32> to vector<1x2xf32>
    %c3_83 = arith.constant 3 : index
    %c0_84 = arith.constant 0 : index
    %c0_85 = arith.constant 0 : index
    %129 = vector.load %arg3[%c3_83, %c0_84, %c0_85] : memref<8x32x2xf32, #tpu.memory_space<vmem>>, vector<1x32x2xf32>
    %130 = vector.shape_cast %129 : vector<1x32x2xf32> to vector<32x2xf32>
    %131 = vector.broadcast %128 : vector<1x2xf32> to vector<32x2xf32>
    %132 = arith.mulf %131, %130 : vector<32x2xf32>
    %133 = arith.addf %123, %132 : vector<32x2xf32>
    %c4_86 = arith.constant 4 : index
    %c0_87 = arith.constant 0 : index
    %c0_88 = arith.constant 0 : index
    %134 = vector.load %arg2[%c4_86, %c0_87, %c0_88] : memref<8x32x2xf32, #tpu.memory_space<vmem>>, vector<1x32x2xf32>
    %135 = vector.shape_cast %134 : vector<1x32x2xf32> to vector<32x2xf32>
    %136 = arith.mulf %94, %135 : vector<32x2xf32>
    %cst_89 = arith.constant dense<0.000000e+00> : vector<2xf32>
    %137 = vector.multi_reduction <add>, %136, %cst_89 [0] : vector<32x2xf32> to vector<2xf32>
    %138 = vector.shape_cast %137 : vector<2xf32> to vector<1x2xf32>
    %c4_90 = arith.constant 4 : index
    %c0_91 = arith.constant 0 : index
    %c0_92 = arith.constant 0 : index
    %139 = vector.load %arg3[%c4_90, %c0_91, %c0_92] : memref<8x32x2xf32, #tpu.memory_space<vmem>>, vector<1x32x2xf32>
    %140 = vector.shape_cast %139 : vector<1x32x2xf32> to vector<32x2xf32>
    %141 = vector.broadcast %138 : vector<1x2xf32> to vector<32x2xf32>
    %142 = arith.mulf %141, %140 : vector<32x2xf32>
    %143 = arith.addf %133, %142 : vector<32x2xf32>
    %c5_93 = arith.constant 5 : index
    %c0_94 = arith.constant 0 : index
    %c0_95 = arith.constant 0 : index
    %144 = vector.load %arg2[%c5_93, %c0_94, %c0_95] : memref<8x32x2xf32, #tpu.memory_space<vmem>>, vector<1x32x2xf32>
    %145 = vector.shape_cast %144 : vector<1x32x2xf32> to vector<32x2xf32>
    %146 = arith.mulf %94, %145 : vector<32x2xf32>
    %cst_96 = arith.constant dense<0.000000e+00> : vector<2xf32>
    %147 = vector.multi_reduction <add>, %146, %cst_96 [0] : vector<32x2xf32> to vector<2xf32>
    %148 = vector.shape_cast %147 : vector<2xf32> to vector<1x2xf32>
    %c5_97 = arith.constant 5 : index
    %c0_98 = arith.constant 0 : index
    %c0_99 = arith.constant 0 : index
    %149 = vector.load %arg3[%c5_97, %c0_98, %c0_99] : memref<8x32x2xf32, #tpu.memory_space<vmem>>, vector<1x32x2xf32>
    %150 = vector.shape_cast %149 : vector<1x32x2xf32> to vector<32x2xf32>
    %151 = vector.broadcast %148 : vector<1x2xf32> to vector<32x2xf32>
    %152 = arith.mulf %151, %150 : vector<32x2xf32>
    %153 = arith.addf %143, %152 : vector<32x2xf32>
    %c6_100 = arith.constant 6 : index
    %c0_101 = arith.constant 0 : index
    %c0_102 = arith.constant 0 : index
    %154 = vector.load %arg2[%c6_100, %c0_101, %c0_102] : memref<8x32x2xf32, #tpu.memory_space<vmem>>, vector<1x32x2xf32>
    %155 = vector.shape_cast %154 : vector<1x32x2xf32> to vector<32x2xf32>
    %156 = arith.mulf %94, %155 : vector<32x2xf32>
    %cst_103 = arith.constant dense<0.000000e+00> : vector<2xf32>
    %157 = vector.multi_reduction <add>, %156, %cst_103 [0] : vector<32x2xf32> to vector<2xf32>
    %158 = vector.shape_cast %157 : vector<2xf32> to vector<1x2xf32>
    %c6_104 = arith.constant 6 : index
    %c0_105 = arith.constant 0 : index
    %c0_106 = arith.constant 0 : index
    %159 = vector.load %arg3[%c6_104, %c0_105, %c0_106] : memref<8x32x2xf32, #tpu.memory_space<vmem>>, vector<1x32x2xf32>
    %160 = vector.shape_cast %159 : vector<1x32x2xf32> to vector<32x2xf32>
    %161 = vector.broadcast %158 : vector<1x2xf32> to vector<32x2xf32>
    %162 = arith.mulf %161, %160 : vector<32x2xf32>
    %163 = arith.addf %153, %162 : vector<32x2xf32>
    %c7_107 = arith.constant 7 : index
    %c0_108 = arith.constant 0 : index
    %c0_109 = arith.constant 0 : index
    %164 = vector.load %arg2[%c7_107, %c0_108, %c0_109] : memref<8x32x2xf32, #tpu.memory_space<vmem>>, vector<1x32x2xf32>
    %165 = vector.shape_cast %164 : vector<1x32x2xf32> to vector<32x2xf32>
    %166 = arith.mulf %94, %165 : vector<32x2xf32>
    %cst_110 = arith.constant dense<0.000000e+00> : vector<2xf32>
    %167 = vector.multi_reduction <add>, %166, %cst_110 [0] : vector<32x2xf32> to vector<2xf32>
    %168 = vector.shape_cast %167 : vector<2xf32> to vector<1x2xf32>
    %c7_111 = arith.constant 7 : index
    %c0_112 = arith.constant 0 : index
    %c0_113 = arith.constant 0 : index
    %169 = vector.load %arg3[%c7_111, %c0_112, %c0_113] : memref<8x32x2xf32, #tpu.memory_space<vmem>>, vector<1x32x2xf32>
    %170 = vector.shape_cast %169 : vector<1x32x2xf32> to vector<32x2xf32>
    %171 = vector.broadcast %168 : vector<1x2xf32> to vector<32x2xf32>
    %172 = arith.mulf %171, %170 : vector<32x2xf32>
    %173 = arith.addf %163, %172 : vector<32x2xf32>
    %cst_114 = arith.constant dense<0xFF800000> : vector<2xf32>
    %174 = vector.multi_reduction <maximumf>, %173, %cst_114 [0] : vector<32x2xf32> to vector<2xf32>
    %175 = vector.shape_cast %174 : vector<2xf32> to vector<1x2xf32>
    %176 = vector.broadcast %175 : vector<1x2xf32> to vector<32x2xf32>
    %177 = arith.subf %173, %176 : vector<32x2xf32>
    %178 = math.exp %177 : vector<32x2xf32>
    %cst_115 = arith.constant dense<0.000000e+00> : vector<2xf32>
    %179 = vector.multi_reduction <add>, %178, %cst_115 [0] : vector<32x2xf32> to vector<2xf32>
    %180 = vector.shape_cast %179 : vector<2xf32> to vector<1x2xf32>
    %181 = vector.broadcast %180 : vector<1x2xf32> to vector<32x2xf32>
    %182 = arith.divf %178, %181 : vector<32x2xf32>
    %c1_116 = arith.constant 1 : index
    %c0_117 = arith.constant 0 : index
    %c0_118 = arith.constant 0 : index
    %183 = vector.load %arg4[%c1_116, %c0_117, %c0_118] : memref<8x32x2xf32, #tpu.memory_space<vmem>>, vector<1x32x2xf32>
    %184 = vector.shape_cast %183 : vector<1x32x2xf32> to vector<32x2xf32>
    %185 = vector.shape_cast %182 : vector<32x2xf32> to vector<1x32x2xf32>
    tpu.vector_store %arg4[%c1_116, %c0_117, %c0_118], %185 {strides = array<i32>} : memref<8x32x2xf32, #tpu.memory_space<vmem>>, vector<1x32x2xf32>,
    %c2_119 = arith.constant 2 : index
    %c0_120 = arith.constant 0 : index
    %c0_121 = arith.constant 0 : index
    %186 = vector.load %arg1[%c2_119, %c0_120, %c0_121] : memref<8x32x2xf32, #tpu.memory_space<vmem>>, vector<1x32x2xf32>
    %187 = vector.shape_cast %186 : vector<1x32x2xf32> to vector<32x2xf32>
    %c0_122 = arith.constant 0 : index
    %c0_123 = arith.constant 0 : index
    %c0_124 = arith.constant 0 : index
    %188 = vector.load %arg2[%c0_122, %c0_123, %c0_124] : memref<8x32x2xf32, #tpu.memory_space<vmem>>, vector<1x32x2xf32>
    %189 = vector.shape_cast %188 : vector<1x32x2xf32> to vector<32x2xf32>
    %190 = arith.mulf %187, %189 : vector<32x2xf32>
    %cst_125 = arith.constant dense<0.000000e+00> : vector<2xf32>
    %191 = vector.multi_reduction <add>, %190, %cst_125 [0] : vector<32x2xf32> to vector<2xf32>
    %192 = vector.shape_cast %191 : vector<2xf32> to vector<1x2xf32>
    %c0_126 = arith.constant 0 : index
    %c0_127 = arith.constant 0 : index
    %c0_128 = arith.constant 0 : index
    %193 = vector.load %arg3[%c0_126, %c0_127, %c0_128] : memref<8x32x2xf32, #tpu.memory_space<vmem>>, vector<1x32x2xf32>
    %194 = vector.shape_cast %193 : vector<1x32x2xf32> to vector<32x2xf32>
    %195 = vector.broadcast %192 : vector<1x2xf32> to vector<32x2xf32>
    %196 = arith.mulf %195, %194 : vector<32x2xf32>
    %c1_129 = arith.constant 1 : index
    %c0_130 = arith.constant 0 : index
    %c0_131 = arith.constant 0 : index
    %197 = vector.load %arg2[%c1_129, %c0_130, %c0_131] : memref<8x32x2xf32, #tpu.memory_space<vmem>>, vector<1x32x2xf32>
    %198 = vector.shape_cast %197 : vector<1x32x2xf32> to vector<32x2xf32>
    %199 = arith.mulf %187, %198 : vector<32x2xf32>
    %cst_132 = arith.constant dense<0.000000e+00> : vector<2xf32>
    %200 = vector.multi_reduction <add>, %199, %cst_132 [0] : vector<32x2xf32> to vector<2xf32>
    %201 = vector.shape_cast %200 : vector<2xf32> to vector<1x2xf32>
    %c1_133 = arith.constant 1 : index
    %c0_134 = arith.constant 0 : index
    %c0_135 = arith.constant 0 : index
    %202 = vector.load %arg3[%c1_133, %c0_134, %c0_135] : memref<8x32x2xf32, #tpu.memory_space<vmem>>, vector<1x32x2xf32>
    %203 = vector.shape_cast %202 : vector<1x32x2xf32> to vector<32x2xf32>
    %204 = vector.broadcast %201 : vector<1x2xf32> to vector<32x2xf32>
    %205 = arith.mulf %204, %203 : vector<32x2xf32>
    %206 = arith.addf %196, %205 : vector<32x2xf32>
    %c2_136 = arith.constant 2 : index
    %c0_137 = arith.constant 0 : index
    %c0_138 = arith.constant 0 : index
    %207 = vector.load %arg2[%c2_136, %c0_137, %c0_138] : memref<8x32x2xf32, #tpu.memory_space<vmem>>, vector<1x32x2xf32>
    %208 = vector.shape_cast %207 : vector<1x32x2xf32> to vector<32x2xf32>
    %209 = arith.mulf %187, %208 : vector<32x2xf32>
    %cst_139 = arith.constant dense<0.000000e+00> : vector<2xf32>
    %210 = vector.multi_reduction <add>, %209, %cst_139 [0] : vector<32x2xf32> to vector<2xf32>
    %211 = vector.shape_cast %210 : vector<2xf32> to vector<1x2xf32>
    %c2_140 = arith.constant 2 : index
    %c0_141 = arith.constant 0 : index
    %c0_142 = arith.constant 0 : index
    %212 = vector.load %arg3[%c2_140, %c0_141, %c0_142] : memref<8x32x2xf32, #tpu.memory_space<vmem>>, vector<1x32x2xf32>
    %213 = vector.shape_cast %212 : vector<1x32x2xf32> to vector<32x2xf32>
    %214 = vector.broadcast %211 : vector<1x2xf32> to vector<32x2xf32>
    %215 = arith.mulf %214, %213 : vector<32x2xf32>
    %216 = arith.addf %206, %215 : vector<32x2xf32>
    %c3_143 = arith.constant 3 : index
    %c0_144 = arith.constant 0 : index
    %c0_145 = arith.constant 0 : index
    %217 = vector.load %arg2[%c3_143, %c0_144, %c0_145] : memref<8x32x2xf32, #tpu.memory_space<vmem>>, vector<1x32x2xf32>
    %218 = vector.shape_cast %217 : vector<1x32x2xf32> to vector<32x2xf32>
    %219 = arith.mulf %187, %218 : vector<32x2xf32>
    %cst_146 = arith.constant dense<0.000000e+00> : vector<2xf32>
    %220 = vector.multi_reduction <add>, %219, %cst_146 [0] : vector<32x2xf32> to vector<2xf32>
    %221 = vector.shape_cast %220 : vector<2xf32> to vector<1x2xf32>
    %c3_147 = arith.constant 3 : index
    %c0_148 = arith.constant 0 : index
    %c0_149 = arith.constant 0 : index
    %222 = vector.load %arg3[%c3_147, %c0_148, %c0_149] : memref<8x32x2xf32, #tpu.memory_space<vmem>>, vector<1x32x2xf32>
    %223 = vector.shape_cast %222 : vector<1x32x2xf32> to vector<32x2xf32>
    %224 = vector.broadcast %221 : vector<1x2xf32> to vector<32x2xf32>
    %225 = arith.mulf %224, %223 : vector<32x2xf32>
    %226 = arith.addf %216, %225 : vector<32x2xf32>
    %c4_150 = arith.constant 4 : index
    %c0_151 = arith.constant 0 : index
    %c0_152 = arith.constant 0 : index
    %227 = vector.load %arg2[%c4_150, %c0_151, %c0_152] : memref<8x32x2xf32, #tpu.memory_space<vmem>>, vector<1x32x2xf32>
    %228 = vector.shape_cast %227 : vector<1x32x2xf32> to vector<32x2xf32>
    %229 = arith.mulf %187, %228 : vector<32x2xf32>
    %cst_153 = arith.constant dense<0.000000e+00> : vector<2xf32>
    %230 = vector.multi_reduction <add>, %229, %cst_153 [0] : vector<32x2xf32> to vector<2xf32>
    %231 = vector.shape_cast %230 : vector<2xf32> to vector<1x2xf32>
    %c4_154 = arith.constant 4 : index
    %c0_155 = arith.constant 0 : index
    %c0_156 = arith.constant 0 : index
    %232 = vector.load %arg3[%c4_154, %c0_155, %c0_156] : memref<8x32x2xf32, #tpu.memory_space<vmem>>, vector<1x32x2xf32>
    %233 = vector.shape_cast %232 : vector<1x32x2xf32> to vector<32x2xf32>
    %234 = vector.broadcast %231 : vector<1x2xf32> to vector<32x2xf32>
    %235 = arith.mulf %234, %233 : vector<32x2xf32>
    %236 = arith.addf %226, %235 : vector<32x2xf32>
    %c5_157 = arith.constant 5 : index
    %c0_158 = arith.constant 0 : index
    %c0_159 = arith.constant 0 : index
    %237 = vector.load %arg2[%c5_157, %c0_158, %c0_159] : memref<8x32x2xf32, #tpu.memory_space<vmem>>, vector<1x32x2xf32>
    %238 = vector.shape_cast %237 : vector<1x32x2xf32> to vector<32x2xf32>
    %239 = arith.mulf %187, %238 : vector<32x2xf32>
    %cst_160 = arith.constant dense<0.000000e+00> : vector<2xf32>
    %240 = vector.multi_reduction <add>, %239, %cst_160 [0] : vector<32x2xf32> to vector<2xf32>
    %241 = vector.shape_cast %240 : vector<2xf32> to vector<1x2xf32>
    %c5_161 = arith.constant 5 : index
    %c0_162 = arith.constant 0 : index
    %c0_163 = arith.constant 0 : index
    %242 = vector.load %arg3[%c5_161, %c0_162, %c0_163] : memref<8x32x2xf32, #tpu.memory_space<vmem>>, vector<1x32x2xf32>
    %243 = vector.shape_cast %242 : vector<1x32x2xf32> to vector<32x2xf32>
    %244 = vector.broadcast %241 : vector<1x2xf32> to vector<32x2xf32>
    %245 = arith.mulf %244, %243 : vector<32x2xf32>
    %246 = arith.addf %236, %245 : vector<32x2xf32>
    %c6_164 = arith.constant 6 : index
    %c0_165 = arith.constant 0 : index
    %c0_166 = arith.constant 0 : index
    %247 = vector.load %arg2[%c6_164, %c0_165, %c0_166] : memref<8x32x2xf32, #tpu.memory_space<vmem>>, vector<1x32x2xf32>
    %248 = vector.shape_cast %247 : vector<1x32x2xf32> to vector<32x2xf32>
    %249 = arith.mulf %187, %248 : vector<32x2xf32>
    %cst_167 = arith.constant dense<0.000000e+00> : vector<2xf32>
    %250 = vector.multi_reduction <add>, %249, %cst_167 [0] : vector<32x2xf32> to vector<2xf32>
    %251 = vector.shape_cast %250 : vector<2xf32> to vector<1x2xf32>
    %c6_168 = arith.constant 6 : index
    %c0_169 = arith.constant 0 : index
    %c0_170 = arith.constant 0 : index
    %252 = vector.load %arg3[%c6_168, %c0_169, %c0_170] : memref<8x32x2xf32, #tpu.memory_space<vmem>>, vector<1x32x2xf32>
    %253 = vector.shape_cast %252 : vector<1x32x2xf32> to vector<32x2xf32>
    %254 = vector.broadcast %251 : vector<1x2xf32> to vector<32x2xf32>
    %255 = arith.mulf %254, %253 : vector<32x2xf32>
    %256 = arith.addf %246, %255 : vector<32x2xf32>
    %c7_171 = arith.constant 7 : index
    %c0_172 = arith.constant 0 : index
    %c0_173 = arith.constant 0 : index
    %257 = vector.load %arg2[%c7_171, %c0_172, %c0_173] : memref<8x32x2xf32, #tpu.memory_space<vmem>>, vector<1x32x2xf32>
    %258 = vector.shape_cast %257 : vector<1x32x2xf32> to vector<32x2xf32>
    %259 = arith.mulf %187, %258 : vector<32x2xf32>
    %cst_174 = arith.constant dense<0.000000e+00> : vector<2xf32>
    %260 = vector.multi_reduction <add>, %259, %cst_174 [0] : vector<32x2xf32> to vector<2xf32>
    %261 = vector.shape_cast %260 : vector<2xf32> to vector<1x2xf32>
    %c7_175 = arith.constant 7 : index
    %c0_176 = arith.constant 0 : index
    %c0_177 = arith.constant 0 : index
    %262 = vector.load %arg3[%c7_175, %c0_176, %c0_177] : memref<8x32x2xf32, #tpu.memory_space<vmem>>, vector<1x32x2xf32>
    %263 = vector.shape_cast %262 : vector<1x32x2xf32> to vector<32x2xf32>
    %264 = vector.broadcast %261 : vector<1x2xf32> to vector<32x2xf32>
    %265 = arith.mulf %264, %263 : vector<32x2xf32>
    %266 = arith.addf %256, %265 : vector<32x2xf32>
    %cst_178 = arith.constant dense<0xFF800000> : vector<2xf32>
    %267 = vector.multi_reduction <maximumf>, %266, %cst_178 [0] : vector<32x2xf32> to vector<2xf32>
    %268 = vector.shape_cast %267 : vector<2xf32> to vector<1x2xf32>
    %269 = vector.broadcast %268 : vector<1x2xf32> to vector<32x2xf32>
    %270 = arith.subf %266, %269 : vector<32x2xf32>
    %271 = math.exp %270 : vector<32x2xf32>
    %cst_179 = arith.constant dense<0.000000e+00> : vector<2xf32>
    %272 = vector.multi_reduction <add>, %271, %cst_179 [0] : vector<32x2xf32> to vector<2xf32>
    %273 = vector.shape_cast %272 : vector<2xf32> to vector<1x2xf32>
    %274 = vector.broadcast %273 : vector<1x2xf32> to vector<32x2xf32>
    %275 = arith.divf %271, %274 : vector<32x2xf32>
    %c2_180 = arith.constant 2 : index
    %c0_181 = arith.constant 0 : index
    %c0_182 = arith.constant 0 : index
    %276 = vector.load %arg4[%c2_180, %c0_181, %c0_182] : memref<8x32x2xf32, #tpu.memory_space<vmem>>, vector<1x32x2xf32>
    %277 = vector.shape_cast %276 : vector<1x32x2xf32> to vector<32x2xf32>
    %278 = vector.shape_cast %275 : vector<32x2xf32> to vector<1x32x2xf32>
    tpu.vector_store %arg4[%c2_180, %c0_181, %c0_182], %278 {strides = array<i32>} : memref<8x32x2xf32, #tpu.memory_space<vmem>>, vector<1x32x2xf32>,
    %c3_183 = arith.constant 3 : index
    %c0_184 = arith.constant 0 : index
    %c0_185 = arith.constant 0 : index
    %279 = vector.load %arg1[%c3_183, %c0_184, %c0_185] : memref<8x32x2xf32, #tpu.memory_space<vmem>>, vector<1x32x2xf32>
    %280 = vector.shape_cast %279 : vector<1x32x2xf32> to vector<32x2xf32>
    %c0_186 = arith.constant 0 : index
    %c0_187 = arith.constant 0 : index
    %c0_188 = arith.constant 0 : index
    %281 = vector.load %arg2[%c0_186, %c0_187, %c0_188] : memref<8x32x2xf32, #tpu.memory_space<vmem>>, vector<1x32x2xf32>
    %282 = vector.shape_cast %281 : vector<1x32x2xf32> to vector<32x2xf32>
    %283 = arith.mulf %280, %282 : vector<32x2xf32>
    %cst_189 = arith.constant dense<0.000000e+00> : vector<2xf32>
    %284 = vector.multi_reduction <add>, %283, %cst_189 [0] : vector<32x2xf32> to vector<2xf32>
    %285 = vector.shape_cast %284 : vector<2xf32> to vector<1x2xf32>
    %c0_190 = arith.constant 0 : index
    %c0_191 = arith.constant 0 : index
    %c0_192 = arith.constant 0 : index
    %286 = vector.load %arg3[%c0_190, %c0_191, %c0_192] : memref<8x32x2xf32, #tpu.memory_space<vmem>>, vector<1x32x2xf32>
    %287 = vector.shape_cast %286 : vector<1x32x2xf32> to vector<32x2xf32>
    %288 = vector.broadcast %285 : vector<1x2xf32> to vector<32x2xf32>
    %289 = arith.mulf %288, %287 : vector<32x2xf32>
    %c1_193 = arith.constant 1 : index
    %c0_194 = arith.constant 0 : index
    %c0_195 = arith.constant 0 : index
    %290 = vector.load %arg2[%c1_193, %c0_194, %c0_195] : memref<8x32x2xf32, #tpu.memory_space<vmem>>, vector<1x32x2xf32>
    %291 = vector.shape_cast %290 : vector<1x32x2xf32> to vector<32x2xf32>
    %292 = arith.mulf %280, %291 : vector<32x2xf32>
    %cst_196 = arith.constant dense<0.000000e+00> : vector<2xf32>
    %293 = vector.multi_reduction <add>, %292, %cst_196 [0] : vector<32x2xf32> to vector<2xf32>
    %294 = vector.shape_cast %293 : vector<2xf32> to vector<1x2xf32>
    %c1_197 = arith.constant 1 : index
    %c0_198 = arith.constant 0 : index
    %c0_199 = arith.constant 0 : index
    %295 = vector.load %arg3[%c1_197, %c0_198, %c0_199] : memref<8x32x2xf32, #tpu.memory_space<vmem>>, vector<1x32x2xf32>
    %296 = vector.shape_cast %295 : vector<1x32x2xf32> to vector<32x2xf32>
    %297 = vector.broadcast %294 : vector<1x2xf32> to vector<32x2xf32>
    %298 = arith.mulf %297, %296 : vector<32x2xf32>
    %299 = arith.addf %289, %298 : vector<32x2xf32>
    %c2_200 = arith.constant 2 : index
    %c0_201 = arith.constant 0 : index
    %c0_202 = arith.constant 0 : index
    %300 = vector.load %arg2[%c2_200, %c0_201, %c0_202] : memref<8x32x2xf32, #tpu.memory_space<vmem>>, vector<1x32x2xf32>
    %301 = vector.shape_cast %300 : vector<1x32x2xf32> to vector<32x2xf32>
    %302 = arith.mulf %280, %301 : vector<32x2xf32>
    %cst_203 = arith.constant dense<0.000000e+00> : vector<2xf32>
    %303 = vector.multi_reduction <add>, %302, %cst_203 [0] : vector<32x2xf32> to vector<2xf32>
    %304 = vector.shape_cast %303 : vector<2xf32> to vector<1x2xf32>
    %c2_204 = arith.constant 2 : index
    %c0_205 = arith.constant 0 : index
    %c0_206 = arith.constant 0 : index
    %305 = vector.load %arg3[%c2_204, %c0_205, %c0_206] : memref<8x32x2xf32, #tpu.memory_space<vmem>>, vector<1x32x2xf32>
    %306 = vector.shape_cast %305 : vector<1x32x2xf32> to vector<32x2xf32>
    %307 = vector.broadcast %304 : vector<1x2xf32> to vector<32x2xf32>
    %308 = arith.mulf %307, %306 : vector<32x2xf32>
    %309 = arith.addf %299, %308 : vector<32x2xf32>
    %c3_207 = arith.constant 3 : index
    %c0_208 = arith.constant 0 : index
    %c0_209 = arith.constant 0 : index
    %310 = vector.load %arg2[%c3_207, %c0_208, %c0_209] : memref<8x32x2xf32, #tpu.memory_space<vmem>>, vector<1x32x2xf32>
    %311 = vector.shape_cast %310 : vector<1x32x2xf32> to vector<32x2xf32>
    %312 = arith.mulf %280, %311 : vector<32x2xf32>
    %cst_210 = arith.constant dense<0.000000e+00> : vector<2xf32>
    %313 = vector.multi_reduction <add>, %312, %cst_210 [0] : vector<32x2xf32> to vector<2xf32>
    %314 = vector.shape_cast %313 : vector<2xf32> to vector<1x2xf32>
    %c3_211 = arith.constant 3 : index
    %c0_212 = arith.constant 0 : index
    %c0_213 = arith.constant 0 : index
    %315 = vector.load %arg3[%c3_211, %c0_212, %c0_213] : memref<8x32x2xf32, #tpu.memory_space<vmem>>, vector<1x32x2xf32>
    %316 = vector.shape_cast %315 : vector<1x32x2xf32> to vector<32x2xf32>
    %317 = vector.broadcast %314 : vector<1x2xf32> to vector<32x2xf32>
    %318 = arith.mulf %317, %316 : vector<32x2xf32>
    %319 = arith.addf %309, %318 : vector<32x2xf32>
    %c4_214 = arith.constant 4 : index
    %c0_215 = arith.constant 0 : index
    %c0_216 = arith.constant 0 : index
    %320 = vector.load %arg2[%c4_214, %c0_215, %c0_216] : memref<8x32x2xf32, #tpu.memory_space<vmem>>, vector<1x32x2xf32>
    %321 = vector.shape_cast %320 : vector<1x32x2xf32> to vector<32x2xf32>
    %322 = arith.mulf %280, %321 : vector<32x2xf32>
    %cst_217 = arith.constant dense<0.000000e+00> : vector<2xf32>
    %323 = vector.multi_reduction <add>, %322, %cst_217 [0] : vector<32x2xf32> to vector<2xf32>
    %324 = vector.shape_cast %323 : vector<2xf32> to vector<1x2xf32>
    %c4_218 = arith.constant 4 : index
    %c0_219 = arith.constant 0 : index
    %c0_220 = arith.constant 0 : index
    %325 = vector.load %arg3[%c4_218, %c0_219, %c0_220] : memref<8x32x2xf32, #tpu.memory_space<vmem>>, vector<1x32x2xf32>
    %326 = vector.shape_cast %325 : vector<1x32x2xf32> to vector<32x2xf32>
    %327 = vector.broadcast %324 : vector<1x2xf32> to vector<32x2xf32>
    %328 = arith.mulf %327, %326 : vector<32x2xf32>
    %329 = arith.addf %319, %328 : vector<32x2xf32>
    %c5_221 = arith.constant 5 : index
    %c0_222 = arith.constant 0 : index
    %c0_223 = arith.constant 0 : index
    %330 = vector.load %arg2[%c5_221, %c0_222, %c0_223] : memref<8x32x2xf32, #tpu.memory_space<vmem>>, vector<1x32x2xf32>
    %331 = vector.shape_cast %330 : vector<1x32x2xf32> to vector<32x2xf32>
    %332 = arith.mulf %280, %331 : vector<32x2xf32>
    %cst_224 = arith.constant dense<0.000000e+00> : vector<2xf32>
    %333 = vector.multi_reduction <add>, %332, %cst_224 [0] : vector<32x2xf32> to vector<2xf32>
    %334 = vector.shape_cast %333 : vector<2xf32> to vector<1x2xf32>
    %c5_225 = arith.constant 5 : index
    %c0_226 = arith.constant 0 : index
    %c0_227 = arith.constant 0 : index
    %335 = vector.load %arg3[%c5_225, %c0_226, %c0_227] : memref<8x32x2xf32, #tpu.memory_space<vmem>>, vector<1x32x2xf32>
    %336 = vector.shape_cast %335 : vector<1x32x2xf32> to vector<32x2xf32>
    %337 = vector.broadcast %334 : vector<1x2xf32> to vector<32x2xf32>
    %338 = arith.mulf %337, %336 : vector<32x2xf32>
    %339 = arith.addf %329, %338 : vector<32x2xf32>
    %c6_228 = arith.constant 6 : index
    %c0_229 = arith.constant 0 : index
    %c0_230 = arith.constant 0 : index
    %340 = vector.load %arg2[%c6_228, %c0_229, %c0_230] : memref<8x32x2xf32, #tpu.memory_space<vmem>>, vector<1x32x2xf32>
    %341 = vector.shape_cast %340 : vector<1x32x2xf32> to vector<32x2xf32>
    %342 = arith.mulf %280, %341 : vector<32x2xf32>
    %cst_231 = arith.constant dense<0.000000e+00> : vector<2xf32>
    %343 = vector.multi_reduction <add>, %342, %cst_231 [0] : vector<32x2xf32> to vector<2xf32>
    %344 = vector.shape_cast %343 : vector<2xf32> to vector<1x2xf32>
    %c6_232 = arith.constant 6 : index
    %c0_233 = arith.constant 0 : index
    %c0_234 = arith.constant 0 : index
    %345 = vector.load %arg3[%c6_232, %c0_233, %c0_234] : memref<8x32x2xf32, #tpu.memory_space<vmem>>, vector<1x32x2xf32>
    %346 = vector.shape_cast %345 : vector<1x32x2xf32> to vector<32x2xf32>
    %347 = vector.broadcast %344 : vector<1x2xf32> to vector<32x2xf32>
    %348 = arith.mulf %347, %346 : vector<32x2xf32>
    %349 = arith.addf %339, %348 : vector<32x2xf32>
    %c7_235 = arith.constant 7 : index
    %c0_236 = arith.constant 0 : index
    %c0_237 = arith.constant 0 : index
    %350 = vector.load %arg2[%c7_235, %c0_236, %c0_237] : memref<8x32x2xf32, #tpu.memory_space<vmem>>, vector<1x32x2xf32>
    %351 = vector.shape_cast %350 : vector<1x32x2xf32> to vector<32x2xf32>
    %352 = arith.mulf %280, %351 : vector<32x2xf32>
    %cst_238 = arith.constant dense<0.000000e+00> : vector<2xf32>
    %353 = vector.multi_reduction <add>, %352, %cst_238 [0] : vector<32x2xf32> to vector<2xf32>
    %354 = vector.shape_cast %353 : vector<2xf32> to vector<1x2xf32>
    %c7_239 = arith.constant 7 : index
    %c0_240 = arith.constant 0 : index
    %c0_241 = arith.constant 0 : index
    %355 = vector.load %arg3[%c7_239, %c0_240, %c0_241] : memref<8x32x2xf32, #tpu.memory_space<vmem>>, vector<1x32x2xf32>
    %356 = vector.shape_cast %355 : vector<1x32x2xf32> to vector<32x2xf32>
    %357 = vector.broadcast %354 : vector<1x2xf32> to vector<32x2xf32>
    %358 = arith.mulf %357, %356 : vector<32x2xf32>
    %359 = arith.addf %349, %358 : vector<32x2xf32>
    %cst_242 = arith.constant dense<0xFF800000> : vector<2xf32>
    %360 = vector.multi_reduction <maximumf>, %359, %cst_242 [0] : vector<32x2xf32> to vector<2xf32>
    %361 = vector.shape_cast %360 : vector<2xf32> to vector<1x2xf32>
    %362 = vector.broadcast %361 : vector<1x2xf32> to vector<32x2xf32>
    %363 = arith.subf %359, %362 : vector<32x2xf32>
    %364 = math.exp %363 : vector<32x2xf32>
    %cst_243 = arith.constant dense<0.000000e+00> : vector<2xf32>
    %365 = vector.multi_reduction <add>, %364, %cst_243 [0] : vector<32x2xf32> to vector<2xf32>
    %366 = vector.shape_cast %365 : vector<2xf32> to vector<1x2xf32>
    %367 = vector.broadcast %366 : vector<1x2xf32> to vector<32x2xf32>
    %368 = arith.divf %364, %367 : vector<32x2xf32>
    %c3_244 = arith.constant 3 : index
    %c0_245 = arith.constant 0 : index
    %c0_246 = arith.constant 0 : index
    %369 = vector.load %arg4[%c3_244, %c0_245, %c0_246] : memref<8x32x2xf32, #tpu.memory_space<vmem>>, vector<1x32x2xf32>
    %370 = vector.shape_cast %369 : vector<1x32x2xf32> to vector<32x2xf32>
    %371 = vector.shape_cast %368 : vector<32x2xf32> to vector<1x32x2xf32>
    tpu.vector_store %arg4[%c3_244, %c0_245, %c0_246], %371 {strides = array<i32>} : memref<8x32x2xf32, #tpu.memory_space<vmem>>, vector<1x32x2xf32>,
    %c4_247 = arith.constant 4 : index
    %c0_248 = arith.constant 0 : index
    %c0_249 = arith.constant 0 : index
    %372 = vector.load %arg1[%c4_247, %c0_248, %c0_249] : memref<8x32x2xf32, #tpu.memory_space<vmem>>, vector<1x32x2xf32>
    %373 = vector.shape_cast %372 : vector<1x32x2xf32> to vector<32x2xf32>
    %c0_250 = arith.constant 0 : index
    %c0_251 = arith.constant 0 : index
    %c0_252 = arith.constant 0 : index
    %374 = vector.load %arg2[%c0_250, %c0_251, %c0_252] : memref<8x32x2xf32, #tpu.memory_space<vmem>>, vector<1x32x2xf32>
    %375 = vector.shape_cast %374 : vector<1x32x2xf32> to vector<32x2xf32>
    %376 = arith.mulf %373, %375 : vector<32x2xf32>
    %cst_253 = arith.constant dense<0.000000e+00> : vector<2xf32>
    %377 = vector.multi_reduction <add>, %376, %cst_253 [0] : vector<32x2xf32> to vector<2xf32>
    %378 = vector.shape_cast %377 : vector<2xf32> to vector<1x2xf32>
    %c0_254 = arith.constant 0 : index
    %c0_255 = arith.constant 0 : index
    %c0_256 = arith.constant 0 : index
    %379 = vector.load %arg3[%c0_254, %c0_255, %c0_256] : memref<8x32x2xf32, #tpu.memory_space<vmem>>, vector<1x32x2xf32>
    %380 = vector.shape_cast %379 : vector<1x32x2xf32> to vector<32x2xf32>
    %381 = vector.broadcast %378 : vector<1x2xf32> to vector<32x2xf32>
    %382 = arith.mulf %381, %380 : vector<32x2xf32>
    %c1_257 = arith.constant 1 : index
    %c0_258 = arith.constant 0 : index
    %c0_259 = arith.constant 0 : index
    %383 = vector.load %arg2[%c1_257, %c0_258, %c0_259] : memref<8x32x2xf32, #tpu.memory_space<vmem>>, vector<1x32x2xf32>
    %384 = vector.shape_cast %383 : vector<1x32x2xf32> to vector<32x2xf32>
    %385 = arith.mulf %373, %384 : vector<32x2xf32>
    %cst_260 = arith.constant dense<0.000000e+00> : vector<2xf32>
    %386 = vector.multi_reduction <add>, %385, %cst_260 [0] : vector<32x2xf32> to vector<2xf32>
    %387 = vector.shape_cast %386 : vector<2xf32> to vector<1x2xf32>
    %c1_261 = arith.constant 1 : index
    %c0_262 = arith.constant 0 : index
    %c0_263 = arith.constant 0 : index
    %388 = vector.load %arg3[%c1_261, %c0_262, %c0_263] : memref<8x32x2xf32, #tpu.memory_space<vmem>>, vector<1x32x2xf32>
    %389 = vector.shape_cast %388 : vector<1x32x2xf32> to vector<32x2xf32>
    %390 = vector.broadcast %387 : vector<1x2xf32> to vector<32x2xf32>
    %391 = arith.mulf %390, %389 : vector<32x2xf32>
    %392 = arith.addf %382, %391 : vector<32x2xf32>
    %c2_264 = arith.constant 2 : index
    %c0_265 = arith.constant 0 : index
    %c0_266 = arith.constant 0 : index
    %393 = vector.load %arg2[%c2_264, %c0_265, %c0_266] : memref<8x32x2xf32, #tpu.memory_space<vmem>>, vector<1x32x2xf32>
    %394 = vector.shape_cast %393 : vector<1x32x2xf32> to vector<32x2xf32>
    %395 = arith.mulf %373, %394 : vector<32x2xf32>
    %cst_267 = arith.constant dense<0.000000e+00> : vector<2xf32>
    %396 = vector.multi_reduction <add>, %395, %cst_267 [0] : vector<32x2xf32> to vector<2xf32>
    %397 = vector.shape_cast %396 : vector<2xf32> to vector<1x2xf32>
    %c2_268 = arith.constant 2 : index
    %c0_269 = arith.constant 0 : index
    %c0_270 = arith.constant 0 : index
    %398 = vector.load %arg3[%c2_268, %c0_269, %c0_270] : memref<8x32x2xf32, #tpu.memory_space<vmem>>, vector<1x32x2xf32>
    %399 = vector.shape_cast %398 : vector<1x32x2xf32> to vector<32x2xf32>
    %400 = vector.broadcast %397 : vector<1x2xf32> to vector<32x2xf32>
    %401 = arith.mulf %400, %399 : vector<32x2xf32>
    %402 = arith.addf %392, %401 : vector<32x2xf32>
    %c3_271 = arith.constant 3 : index
    %c0_272 = arith.constant 0 : index
    %c0_273 = arith.constant 0 : index
    %403 = vector.load %arg2[%c3_271, %c0_272, %c0_273] : memref<8x32x2xf32, #tpu.memory_space<vmem>>, vector<1x32x2xf32>
    %404 = vector.shape_cast %403 : vector<1x32x2xf32> to vector<32x2xf32>
    %405 = arith.mulf %373, %404 : vector<32x2xf32>
    %cst_274 = arith.constant dense<0.000000e+00> : vector<2xf32>
    %406 = vector.multi_reduction <add>, %405, %cst_274 [0] : vector<32x2xf32> to vector<2xf32>
    %407 = vector.shape_cast %406 : vector<2xf32> to vector<1x2xf32>
    %c3_275 = arith.constant 3 : index
    %c0_276 = arith.constant 0 : index
    %c0_277 = arith.constant 0 : index
    %408 = vector.load %arg3[%c3_275, %c0_276, %c0_277] : memref<8x32x2xf32, #tpu.memory_space<vmem>>, vector<1x32x2xf32>
    %409 = vector.shape_cast %408 : vector<1x32x2xf32> to vector<32x2xf32>
    %410 = vector.broadcast %407 : vector<1x2xf32> to vector<32x2xf32>
    %411 = arith.mulf %410, %409 : vector<32x2xf32>
    %412 = arith.addf %402, %411 : vector<32x2xf32>
    %c4_278 = arith.constant 4 : index
    %c0_279 = arith.constant 0 : index
    %c0_280 = arith.constant 0 : index
    %413 = vector.load %arg2[%c4_278, %c0_279, %c0_280] : memref<8x32x2xf32, #tpu.memory_space<vmem>>, vector<1x32x2xf32>
    %414 = vector.shape_cast %413 : vector<1x32x2xf32> to vector<32x2xf32>
    %415 = arith.mulf %373, %414 : vector<32x2xf32>
    %cst_281 = arith.constant dense<0.000000e+00> : vector<2xf32>
    %416 = vector.multi_reduction <add>, %415, %cst_281 [0] : vector<32x2xf32> to vector<2xf32>
    %417 = vector.shape_cast %416 : vector<2xf32> to vector<1x2xf32>
    %c4_282 = arith.constant 4 : index
    %c0_283 = arith.constant 0 : index
    %c0_284 = arith.constant 0 : index
    %418 = vector.load %arg3[%c4_282, %c0_283, %c0_284] : memref<8x32x2xf32, #tpu.memory_space<vmem>>, vector<1x32x2xf32>
    %419 = vector.shape_cast %418 : vector<1x32x2xf32> to vector<32x2xf32>
    %420 = vector.broadcast %417 : vector<1x2xf32> to vector<32x2xf32>
    %421 = arith.mulf %420, %419 : vector<32x2xf32>
    %422 = arith.addf %412, %421 : vector<32x2xf32>
    %c5_285 = arith.constant 5 : index
    %c0_286 = arith.constant 0 : index
    %c0_287 = arith.constant 0 : index
    %423 = vector.load %arg2[%c5_285, %c0_286, %c0_287] : memref<8x32x2xf32, #tpu.memory_space<vmem>>, vector<1x32x2xf32>
    %424 = vector.shape_cast %423 : vector<1x32x2xf32> to vector<32x2xf32>
    %425 = arith.mulf %373, %424 : vector<32x2xf32>
    %cst_288 = arith.constant dense<0.000000e+00> : vector<2xf32>
    %426 = vector.multi_reduction <add>, %425, %cst_288 [0] : vector<32x2xf32> to vector<2xf32>
    %427 = vector.shape_cast %426 : vector<2xf32> to vector<1x2xf32>
    %c5_289 = arith.constant 5 : index
    %c0_290 = arith.constant 0 : index
    %c0_291 = arith.constant 0 : index
    %428 = vector.load %arg3[%c5_289, %c0_290, %c0_291] : memref<8x32x2xf32, #tpu.memory_space<vmem>>, vector<1x32x2xf32>
    %429 = vector.shape_cast %428 : vector<1x32x2xf32> to vector<32x2xf32>
    %430 = vector.broadcast %427 : vector<1x2xf32> to vector<32x2xf32>
    %431 = arith.mulf %430, %429 : vector<32x2xf32>
    %432 = arith.addf %422, %431 : vector<32x2xf32>
    %c6_292 = arith.constant 6 : index
    %c0_293 = arith.constant 0 : index
    %c0_294 = arith.constant 0 : index
    %433 = vector.load %arg2[%c6_292, %c0_293, %c0_294] : memref<8x32x2xf32, #tpu.memory_space<vmem>>, vector<1x32x2xf32>
    %434 = vector.shape_cast %433 : vector<1x32x2xf32> to vector<32x2xf32>
    %435 = arith.mulf %373, %434 : vector<32x2xf32>
    %cst_295 = arith.constant dense<0.000000e+00> : vector<2xf32>
    %436 = vector.multi_reduction <add>, %435, %cst_295 [0] : vector<32x2xf32> to vector<2xf32>
    %437 = vector.shape_cast %436 : vector<2xf32> to vector<1x2xf32>
    %c6_296 = arith.constant 6 : index
    %c0_297 = arith.constant 0 : index
    %c0_298 = arith.constant 0 : index
    %438 = vector.load %arg3[%c6_296, %c0_297, %c0_298] : memref<8x32x2xf32, #tpu.memory_space<vmem>>, vector<1x32x2xf32>
    %439 = vector.shape_cast %438 : vector<1x32x2xf32> to vector<32x2xf32>
    %440 = vector.broadcast %437 : vector<1x2xf32> to vector<32x2xf32>
    %441 = arith.mulf %440, %439 : vector<32x2xf32>
    %442 = arith.addf %432, %441 : vector<32x2xf32>
    %c7_299 = arith.constant 7 : index
    %c0_300 = arith.constant 0 : index
    %c0_301 = arith.constant 0 : index
    %443 = vector.load %arg2[%c7_299, %c0_300, %c0_301] : memref<8x32x2xf32, #tpu.memory_space<vmem>>, vector<1x32x2xf32>
    %444 = vector.shape_cast %443 : vector<1x32x2xf32> to vector<32x2xf32>
    %445 = arith.mulf %373, %444 : vector<32x2xf32>
    %cst_302 = arith.constant dense<0.000000e+00> : vector<2xf32>
    %446 = vector.multi_reduction <add>, %445, %cst_302 [0] : vector<32x2xf32> to vector<2xf32>
    %447 = vector.shape_cast %446 : vector<2xf32> to vector<1x2xf32>
    %c7_303 = arith.constant 7 : index
    %c0_304 = arith.constant 0 : index
    %c0_305 = arith.constant 0 : index
    %448 = vector.load %arg3[%c7_303, %c0_304, %c0_305] : memref<8x32x2xf32, #tpu.memory_space<vmem>>, vector<1x32x2xf32>
    %449 = vector.shape_cast %448 : vector<1x32x2xf32> to vector<32x2xf32>
    %450 = vector.broadcast %447 : vector<1x2xf32> to vector<32x2xf32>
    %451 = arith.mulf %450, %449 : vector<32x2xf32>
    %452 = arith.addf %442, %451 : vector<32x2xf32>
    %cst_306 = arith.constant dense<0xFF800000> : vector<2xf32>
    %453 = vector.multi_reduction <maximumf>, %452, %cst_306 [0] : vector<32x2xf32> to vector<2xf32>
    %454 = vector.shape_cast %453 : vector<2xf32> to vector<1x2xf32>
    %455 = vector.broadcast %454 : vector<1x2xf32> to vector<32x2xf32>
    %456 = arith.subf %452, %455 : vector<32x2xf32>
    %457 = math.exp %456 : vector<32x2xf32>
    %cst_307 = arith.constant dense<0.000000e+00> : vector<2xf32>
    %458 = vector.multi_reduction <add>, %457, %cst_307 [0] : vector<32x2xf32> to vector<2xf32>
    %459 = vector.shape_cast %458 : vector<2xf32> to vector<1x2xf32>
    %460 = vector.broadcast %459 : vector<1x2xf32> to vector<32x2xf32>
    %461 = arith.divf %457, %460 : vector<32x2xf32>
    %c4_308 = arith.constant 4 : index
    %c0_309 = arith.constant 0 : index
    %c0_310 = arith.constant 0 : index
    %462 = vector.load %arg4[%c4_308, %c0_309, %c0_310] : memref<8x32x2xf32, #tpu.memory_space<vmem>>, vector<1x32x2xf32>
    %463 = vector.shape_cast %462 : vector<1x32x2xf32> to vector<32x2xf32>
    %464 = vector.shape_cast %461 : vector<32x2xf32> to vector<1x32x2xf32>
    tpu.vector_store %arg4[%c4_308, %c0_309, %c0_310], %464 {strides = array<i32>} : memref<8x32x2xf32, #tpu.memory_space<vmem>>, vector<1x32x2xf32>,
    %c5_311 = arith.constant 5 : index
    %c0_312 = arith.constant 0 : index
    %c0_313 = arith.constant 0 : index
    %465 = vector.load %arg1[%c5_311, %c0_312, %c0_313] : memref<8x32x2xf32, #tpu.memory_space<vmem>>, vector<1x32x2xf32>
    %466 = vector.shape_cast %465 : vector<1x32x2xf32> to vector<32x2xf32>
    %c0_314 = arith.constant 0 : index
    %c0_315 = arith.constant 0 : index
    %c0_316 = arith.constant 0 : index
    %467 = vector.load %arg2[%c0_314, %c0_315, %c0_316] : memref<8x32x2xf32, #tpu.memory_space<vmem>>, vector<1x32x2xf32>
    %468 = vector.shape_cast %467 : vector<1x32x2xf32> to vector<32x2xf32>
    %469 = arith.mulf %466, %468 : vector<32x2xf32>
    %cst_317 = arith.constant dense<0.000000e+00> : vector<2xf32>
    %470 = vector.multi_reduction <add>, %469, %cst_317 [0] : vector<32x2xf32> to vector<2xf32>
    %471 = vector.shape_cast %470 : vector<2xf32> to vector<1x2xf32>
    %c0_318 = arith.constant 0 : index
    %c0_319 = arith.constant 0 : index
    %c0_320 = arith.constant 0 : index
    %472 = vector.load %arg3[%c0_318, %c0_319, %c0_320] : memref<8x32x2xf32, #tpu.memory_space<vmem>>, vector<1x32x2xf32>
    %473 = vector.shape_cast %472 : vector<1x32x2xf32> to vector<32x2xf32>
    %474 = vector.broadcast %471 : vector<1x2xf32> to vector<32x2xf32>
    %475 = arith.mulf %474, %473 : vector<32x2xf32>
    %c1_321 = arith.constant 1 : index
    %c0_322 = arith.constant 0 : index
    %c0_323 = arith.constant 0 : index
    %476 = vector.load %arg2[%c1_321, %c0_322, %c0_323] : memref<8x32x2xf32, #tpu.memory_space<vmem>>, vector<1x32x2xf32>
    %477 = vector.shape_cast %476 : vector<1x32x2xf32> to vector<32x2xf32>
    %478 = arith.mulf %466, %477 : vector<32x2xf32>
    %cst_324 = arith.constant dense<0.000000e+00> : vector<2xf32>
    %479 = vector.multi_reduction <add>, %478, %cst_324 [0] : vector<32x2xf32> to vector<2xf32>
    %480 = vector.shape_cast %479 : vector<2xf32> to vector<1x2xf32>
    %c1_325 = arith.constant 1 : index
    %c0_326 = arith.constant 0 : index
    %c0_327 = arith.constant 0 : index
    %481 = vector.load %arg3[%c1_325, %c0_326, %c0_327] : memref<8x32x2xf32, #tpu.memory_space<vmem>>, vector<1x32x2xf32>
    %482 = vector.shape_cast %481 : vector<1x32x2xf32> to vector<32x2xf32>
    %483 = vector.broadcast %480 : vector<1x2xf32> to vector<32x2xf32>
    %484 = arith.mulf %483, %482 : vector<32x2xf32>
    %485 = arith.addf %475, %484 : vector<32x2xf32>
    %c2_328 = arith.constant 2 : index
    %c0_329 = arith.constant 0 : index
    %c0_330 = arith.constant 0 : index
    %486 = vector.load %arg2[%c2_328, %c0_329, %c0_330] : memref<8x32x2xf32, #tpu.memory_space<vmem>>, vector<1x32x2xf32>
    %487 = vector.shape_cast %486 : vector<1x32x2xf32> to vector<32x2xf32>
    %488 = arith.mulf %466, %487 : vector<32x2xf32>
    %cst_331 = arith.constant dense<0.000000e+00> : vector<2xf32>
    %489 = vector.multi_reduction <add>, %488, %cst_331 [0] : vector<32x2xf32> to vector<2xf32>
    %490 = vector.shape_cast %489 : vector<2xf32> to vector<1x2xf32>
    %c2_332 = arith.constant 2 : index
    %c0_333 = arith.constant 0 : index
    %c0_334 = arith.constant 0 : index
    %491 = vector.load %arg3[%c2_332, %c0_333, %c0_334] : memref<8x32x2xf32, #tpu.memory_space<vmem>>, vector<1x32x2xf32>
    %492 = vector.shape_cast %491 : vector<1x32x2xf32> to vector<32x2xf32>
    %493 = vector.broadcast %490 : vector<1x2xf32> to vector<32x2xf32>
    %494 = arith.mulf %493, %492 : vector<32x2xf32>
    %495 = arith.addf %485, %494 : vector<32x2xf32>
    %c3_335 = arith.constant 3 : index
    %c0_336 = arith.constant 0 : index
    %c0_337 = arith.constant 0 : index
    %496 = vector.load %arg2[%c3_335, %c0_336, %c0_337] : memref<8x32x2xf32, #tpu.memory_space<vmem>>, vector<1x32x2xf32>
    %497 = vector.shape_cast %496 : vector<1x32x2xf32> to vector<32x2xf32>
    %498 = arith.mulf %466, %497 : vector<32x2xf32>
    %cst_338 = arith.constant dense<0.000000e+00> : vector<2xf32>
    %499 = vector.multi_reduction <add>, %498, %cst_338 [0] : vector<32x2xf32> to vector<2xf32>
    %500 = vector.shape_cast %499 : vector<2xf32> to vector<1x2xf32>
    %c3_339 = arith.constant 3 : index
    %c0_340 = arith.constant 0 : index
    %c0_341 = arith.constant 0 : index
    %501 = vector.load %arg3[%c3_339, %c0_340, %c0_341] : memref<8x32x2xf32, #tpu.memory_space<vmem>>, vector<1x32x2xf32>
    %502 = vector.shape_cast %501 : vector<1x32x2xf32> to vector<32x2xf32>
    %503 = vector.broadcast %500 : vector<1x2xf32> to vector<32x2xf32>
    %504 = arith.mulf %503, %502 : vector<32x2xf32>
    %505 = arith.addf %495, %504 : vector<32x2xf32>
    %c4_342 = arith.constant 4 : index
    %c0_343 = arith.constant 0 : index
    %c0_344 = arith.constant 0 : index
    %506 = vector.load %arg2[%c4_342, %c0_343, %c0_344] : memref<8x32x2xf32, #tpu.memory_space<vmem>>, vector<1x32x2xf32>
    %507 = vector.shape_cast %506 : vector<1x32x2xf32> to vector<32x2xf32>
    %508 = arith.mulf %466, %507 : vector<32x2xf32>
    %cst_345 = arith.constant dense<0.000000e+00> : vector<2xf32>
    %509 = vector.multi_reduction <add>, %508, %cst_345 [0] : vector<32x2xf32> to vector<2xf32>
    %510 = vector.shape_cast %509 : vector<2xf32> to vector<1x2xf32>
    %c4_346 = arith.constant 4 : index
    %c0_347 = arith.constant 0 : index
    %c0_348 = arith.constant 0 : index
    %511 = vector.load %arg3[%c4_346, %c0_347, %c0_348] : memref<8x32x2xf32, #tpu.memory_space<vmem>>, vector<1x32x2xf32>
    %512 = vector.shape_cast %511 : vector<1x32x2xf32> to vector<32x2xf32>
    %513 = vector.broadcast %510 : vector<1x2xf32> to vector<32x2xf32>
    %514 = arith.mulf %513, %512 : vector<32x2xf32>
    %515 = arith.addf %505, %514 : vector<32x2xf32>
    %c5_349 = arith.constant 5 : index
    %c0_350 = arith.constant 0 : index
    %c0_351 = arith.constant 0 : index
    %516 = vector.load %arg2[%c5_349, %c0_350, %c0_351] : memref<8x32x2xf32, #tpu.memory_space<vmem>>, vector<1x32x2xf32>
    %517 = vector.shape_cast %516 : vector<1x32x2xf32> to vector<32x2xf32>
    %518 = arith.mulf %466, %517 : vector<32x2xf32>
    %cst_352 = arith.constant dense<0.000000e+00> : vector<2xf32>
    %519 = vector.multi_reduction <add>, %518, %cst_352 [0] : vector<32x2xf32> to vector<2xf32>
    %520 = vector.shape_cast %519 : vector<2xf32> to vector<1x2xf32>
    %c5_353 = arith.constant 5 : index
    %c0_354 = arith.constant 0 : index
    %c0_355 = arith.constant 0 : index
    %521 = vector.load %arg3[%c5_353, %c0_354, %c0_355] : memref<8x32x2xf32, #tpu.memory_space<vmem>>, vector<1x32x2xf32>
    %522 = vector.shape_cast %521 : vector<1x32x2xf32> to vector<32x2xf32>
    %523 = vector.broadcast %520 : vector<1x2xf32> to vector<32x2xf32>
    %524 = arith.mulf %523, %522 : vector<32x2xf32>
    %525 = arith.addf %515, %524 : vector<32x2xf32>
    %c6_356 = arith.constant 6 : index
    %c0_357 = arith.constant 0 : index
    %c0_358 = arith.constant 0 : index
    %526 = vector.load %arg2[%c6_356, %c0_357, %c0_358] : memref<8x32x2xf32, #tpu.memory_space<vmem>>, vector<1x32x2xf32>
    %527 = vector.shape_cast %526 : vector<1x32x2xf32> to vector<32x2xf32>
    %528 = arith.mulf %466, %527 : vector<32x2xf32>
    %cst_359 = arith.constant dense<0.000000e+00> : vector<2xf32>
    %529 = vector.multi_reduction <add>, %528, %cst_359 [0] : vector<32x2xf32> to vector<2xf32>
    %530 = vector.shape_cast %529 : vector<2xf32> to vector<1x2xf32>
    %c6_360 = arith.constant 6 : index
    %c0_361 = arith.constant 0 : index
    %c0_362 = arith.constant 0 : index
    %531 = vector.load %arg3[%c6_360, %c0_361, %c0_362] : memref<8x32x2xf32, #tpu.memory_space<vmem>>, vector<1x32x2xf32>
    %532 = vector.shape_cast %531 : vector<1x32x2xf32> to vector<32x2xf32>
    %533 = vector.broadcast %530 : vector<1x2xf32> to vector<32x2xf32>
    %534 = arith.mulf %533, %532 : vector<32x2xf32>
    %535 = arith.addf %525, %534 : vector<32x2xf32>
    %c7_363 = arith.constant 7 : index
    %c0_364 = arith.constant 0 : index
    %c0_365 = arith.constant 0 : index
    %536 = vector.load %arg2[%c7_363, %c0_364, %c0_365] : memref<8x32x2xf32, #tpu.memory_space<vmem>>, vector<1x32x2xf32>
    %537 = vector.shape_cast %536 : vector<1x32x2xf32> to vector<32x2xf32>
    %538 = arith.mulf %466, %537 : vector<32x2xf32>
    %cst_366 = arith.constant dense<0.000000e+00> : vector<2xf32>
    %539 = vector.multi_reduction <add>, %538, %cst_366 [0] : vector<32x2xf32> to vector<2xf32>
    %540 = vector.shape_cast %539 : vector<2xf32> to vector<1x2xf32>
    %c7_367 = arith.constant 7 : index
    %c0_368 = arith.constant 0 : index
    %c0_369 = arith.constant 0 : index
    %541 = vector.load %arg3[%c7_367, %c0_368, %c0_369] : memref<8x32x2xf32, #tpu.memory_space<vmem>>, vector<1x32x2xf32>
    %542 = vector.shape_cast %541 : vector<1x32x2xf32> to vector<32x2xf32>
    %543 = vector.broadcast %540 : vector<1x2xf32> to vector<32x2xf32>
    %544 = arith.mulf %543, %542 : vector<32x2xf32>
    %545 = arith.addf %535, %544 : vector<32x2xf32>
    %cst_370 = arith.constant dense<0xFF800000> : vector<2xf32>
    %546 = vector.multi_reduction <maximumf>, %545, %cst_370 [0] : vector<32x2xf32> to vector<2xf32>
    %547 = vector.shape_cast %546 : vector<2xf32> to vector<1x2xf32>
    %548 = vector.broadcast %547 : vector<1x2xf32> to vector<32x2xf32>
    %549 = arith.subf %545, %548 : vector<32x2xf32>
    %550 = math.exp %549 : vector<32x2xf32>
    %cst_371 = arith.constant dense<0.000000e+00> : vector<2xf32>
    %551 = vector.multi_reduction <add>, %550, %cst_371 [0] : vector<32x2xf32> to vector<2xf32>
    %552 = vector.shape_cast %551 : vector<2xf32> to vector<1x2xf32>
    %553 = vector.broadcast %552 : vector<1x2xf32> to vector<32x2xf32>
    %554 = arith.divf %550, %553 : vector<32x2xf32>
    %c5_372 = arith.constant 5 : index
    %c0_373 = arith.constant 0 : index
    %c0_374 = arith.constant 0 : index
    %555 = vector.load %arg4[%c5_372, %c0_373, %c0_374] : memref<8x32x2xf32, #tpu.memory_space<vmem>>, vector<1x32x2xf32>
    %556 = vector.shape_cast %555 : vector<1x32x2xf32> to vector<32x2xf32>
    %557 = vector.shape_cast %554 : vector<32x2xf32> to vector<1x32x2xf32>
    tpu.vector_store %arg4[%c5_372, %c0_373, %c0_374], %557 {strides = array<i32>} : memref<8x32x2xf32, #tpu.memory_space<vmem>>, vector<1x32x2xf32>,
    %c6_375 = arith.constant 6 : index
    %c0_376 = arith.constant 0 : index
    %c0_377 = arith.constant 0 : index
    %558 = vector.load %arg1[%c6_375, %c0_376, %c0_377] : memref<8x32x2xf32, #tpu.memory_space<vmem>>, vector<1x32x2xf32>
    %559 = vector.shape_cast %558 : vector<1x32x2xf32> to vector<32x2xf32>
    %c0_378 = arith.constant 0 : index
    %c0_379 = arith.constant 0 : index
    %c0_380 = arith.constant 0 : index
    %560 = vector.load %arg2[%c0_378, %c0_379, %c0_380] : memref<8x32x2xf32, #tpu.memory_space<vmem>>, vector<1x32x2xf32>
    %561 = vector.shape_cast %560 : vector<1x32x2xf32> to vector<32x2xf32>
    %562 = arith.mulf %559, %561 : vector<32x2xf32>
    %cst_381 = arith.constant dense<0.000000e+00> : vector<2xf32>
    %563 = vector.multi_reduction <add>, %562, %cst_381 [0] : vector<32x2xf32> to vector<2xf32>
    %564 = vector.shape_cast %563 : vector<2xf32> to vector<1x2xf32>
    %c0_382 = arith.constant 0 : index
    %c0_383 = arith.constant 0 : index
    %c0_384 = arith.constant 0 : index
    %565 = vector.load %arg3[%c0_382, %c0_383, %c0_384] : memref<8x32x2xf32, #tpu.memory_space<vmem>>, vector<1x32x2xf32>
    %566 = vector.shape_cast %565 : vector<1x32x2xf32> to vector<32x2xf32>
    %567 = vector.broadcast %564 : vector<1x2xf32> to vector<32x2xf32>
    %568 = arith.mulf %567, %566 : vector<32x2xf32>
    %c1_385 = arith.constant 1 : index
    %c0_386 = arith.constant 0 : index
    %c0_387 = arith.constant 0 : index
    %569 = vector.load %arg2[%c1_385, %c0_386, %c0_387] : memref<8x32x2xf32, #tpu.memory_space<vmem>>, vector<1x32x2xf32>
    %570 = vector.shape_cast %569 : vector<1x32x2xf32> to vector<32x2xf32>
    %571 = arith.mulf %559, %570 : vector<32x2xf32>
    %cst_388 = arith.constant dense<0.000000e+00> : vector<2xf32>
    %572 = vector.multi_reduction <add>, %571, %cst_388 [0] : vector<32x2xf32> to vector<2xf32>
    %573 = vector.shape_cast %572 : vector<2xf32> to vector<1x2xf32>
    %c1_389 = arith.constant 1 : index
    %c0_390 = arith.constant 0 : index
    %c0_391 = arith.constant 0 : index
    %574 = vector.load %arg3[%c1_389, %c0_390, %c0_391] : memref<8x32x2xf32, #tpu.memory_space<vmem>>, vector<1x32x2xf32>
    %575 = vector.shape_cast %574 : vector<1x32x2xf32> to vector<32x2xf32>
    %576 = vector.broadcast %573 : vector<1x2xf32> to vector<32x2xf32>
    %577 = arith.mulf %576, %575 : vector<32x2xf32>
    %578 = arith.addf %568, %577 : vector<32x2xf32>
    %c2_392 = arith.constant 2 : index
    %c0_393 = arith.constant 0 : index
    %c0_394 = arith.constant 0 : index
    %579 = vector.load %arg2[%c2_392, %c0_393, %c0_394] : memref<8x32x2xf32, #tpu.memory_space<vmem>>, vector<1x32x2xf32>
    %580 = vector.shape_cast %579 : vector<1x32x2xf32> to vector<32x2xf32>
    %581 = arith.mulf %559, %580 : vector<32x2xf32>
    %cst_395 = arith.constant dense<0.000000e+00> : vector<2xf32>
    %582 = vector.multi_reduction <add>, %581, %cst_395 [0] : vector<32x2xf32> to vector<2xf32>
    %583 = vector.shape_cast %582 : vector<2xf32> to vector<1x2xf32>
    %c2_396 = arith.constant 2 : index
    %c0_397 = arith.constant 0 : index
    %c0_398 = arith.constant 0 : index
    %584 = vector.load %arg3[%c2_396, %c0_397, %c0_398] : memref<8x32x2xf32, #tpu.memory_space<vmem>>, vector<1x32x2xf32>
    %585 = vector.shape_cast %584 : vector<1x32x2xf32> to vector<32x2xf32>
    %586 = vector.broadcast %583 : vector<1x2xf32> to vector<32x2xf32>
    %587 = arith.mulf %586, %585 : vector<32x2xf32>
    %588 = arith.addf %578, %587 : vector<32x2xf32>
    %c3_399 = arith.constant 3 : index
    %c0_400 = arith.constant 0 : index
    %c0_401 = arith.constant 0 : index
    %589 = vector.load %arg2[%c3_399, %c0_400, %c0_401] : memref<8x32x2xf32, #tpu.memory_space<vmem>>, vector<1x32x2xf32>
    %590 = vector.shape_cast %589 : vector<1x32x2xf32> to vector<32x2xf32>
    %591 = arith.mulf %559, %590 : vector<32x2xf32>
    %cst_402 = arith.constant dense<0.000000e+00> : vector<2xf32>
    %592 = vector.multi_reduction <add>, %591, %cst_402 [0] : vector<32x2xf32> to vector<2xf32>
    %593 = vector.shape_cast %592 : vector<2xf32> to vector<1x2xf32>
    %c3_403 = arith.constant 3 : index
    %c0_404 = arith.constant 0 : index
    %c0_405 = arith.constant 0 : index
    %594 = vector.load %arg3[%c3_403, %c0_404, %c0_405] : memref<8x32x2xf32, #tpu.memory_space<vmem>>, vector<1x32x2xf32>
    %595 = vector.shape_cast %594 : vector<1x32x2xf32> to vector<32x2xf32>
    %596 = vector.broadcast %593 : vector<1x2xf32> to vector<32x2xf32>
    %597 = arith.mulf %596, %595 : vector<32x2xf32>
    %598 = arith.addf %588, %597 : vector<32x2xf32>
    %c4_406 = arith.constant 4 : index
    %c0_407 = arith.constant 0 : index
    %c0_408 = arith.constant 0 : index
    %599 = vector.load %arg2[%c4_406, %c0_407, %c0_408] : memref<8x32x2xf32, #tpu.memory_space<vmem>>, vector<1x32x2xf32>
    %600 = vector.shape_cast %599 : vector<1x32x2xf32> to vector<32x2xf32>
    %601 = arith.mulf %559, %600 : vector<32x2xf32>
    %cst_409 = arith.constant dense<0.000000e+00> : vector<2xf32>
    %602 = vector.multi_reduction <add>, %601, %cst_409 [0] : vector<32x2xf32> to vector<2xf32>
    %603 = vector.shape_cast %602 : vector<2xf32> to vector<1x2xf32>
    %c4_410 = arith.constant 4 : index
    %c0_411 = arith.constant 0 : index
    %c0_412 = arith.constant 0 : index
    %604 = vector.load %arg3[%c4_410, %c0_411, %c0_412] : memref<8x32x2xf32, #tpu.memory_space<vmem>>, vector<1x32x2xf32>
    %605 = vector.shape_cast %604 : vector<1x32x2xf32> to vector<32x2xf32>
    %606 = vector.broadcast %603 : vector<1x2xf32> to vector<32x2xf32>
    %607 = arith.mulf %606, %605 : vector<32x2xf32>
    %608 = arith.addf %598, %607 : vector<32x2xf32>
    %c5_413 = arith.constant 5 : index
    %c0_414 = arith.constant 0 : index
    %c0_415 = arith.constant 0 : index
    %609 = vector.load %arg2[%c5_413, %c0_414, %c0_415] : memref<8x32x2xf32, #tpu.memory_space<vmem>>, vector<1x32x2xf32>
    %610 = vector.shape_cast %609 : vector<1x32x2xf32> to vector<32x2xf32>
    %611 = arith.mulf %559, %610 : vector<32x2xf32>
    %cst_416 = arith.constant dense<0.000000e+00> : vector<2xf32>
    %612 = vector.multi_reduction <add>, %611, %cst_416 [0] : vector<32x2xf32> to vector<2xf32>
    %613 = vector.shape_cast %612 : vector<2xf32> to vector<1x2xf32>
    %c5_417 = arith.constant 5 : index
    %c0_418 = arith.constant 0 : index
    %c0_419 = arith.constant 0 : index
    %614 = vector.load %arg3[%c5_417, %c0_418, %c0_419] : memref<8x32x2xf32, #tpu.memory_space<vmem>>, vector<1x32x2xf32>
    %615 = vector.shape_cast %614 : vector<1x32x2xf32> to vector<32x2xf32>
    %616 = vector.broadcast %613 : vector<1x2xf32> to vector<32x2xf32>
    %617 = arith.mulf %616, %615 : vector<32x2xf32>
    %618 = arith.addf %608, %617 : vector<32x2xf32>
    %c6_420 = arith.constant 6 : index
    %c0_421 = arith.constant 0 : index
    %c0_422 = arith.constant 0 : index
    %619 = vector.load %arg2[%c6_420, %c0_421, %c0_422] : memref<8x32x2xf32, #tpu.memory_space<vmem>>, vector<1x32x2xf32>
    %620 = vector.shape_cast %619 : vector<1x32x2xf32> to vector<32x2xf32>
    %621 = arith.mulf %559, %620 : vector<32x2xf32>
    %cst_423 = arith.constant dense<0.000000e+00> : vector<2xf32>
    %622 = vector.multi_reduction <add>, %621, %cst_423 [0] : vector<32x2xf32> to vector<2xf32>
    %623 = vector.shape_cast %622 : vector<2xf32> to vector<1x2xf32>
    %c6_424 = arith.constant 6 : index
    %c0_425 = arith.constant 0 : index
    %c0_426 = arith.constant 0 : index
    %624 = vector.load %arg3[%c6_424, %c0_425, %c0_426] : memref<8x32x2xf32, #tpu.memory_space<vmem>>, vector<1x32x2xf32>
    %625 = vector.shape_cast %624 : vector<1x32x2xf32> to vector<32x2xf32>
    %626 = vector.broadcast %623 : vector<1x2xf32> to vector<32x2xf32>
    %627 = arith.mulf %626, %625 : vector<32x2xf32>
    %628 = arith.addf %618, %627 : vector<32x2xf32>
    %c7_427 = arith.constant 7 : index
    %c0_428 = arith.constant 0 : index
    %c0_429 = arith.constant 0 : index
    %629 = vector.load %arg2[%c7_427, %c0_428, %c0_429] : memref<8x32x2xf32, #tpu.memory_space<vmem>>, vector<1x32x2xf32>
    %630 = vector.shape_cast %629 : vector<1x32x2xf32> to vector<32x2xf32>
    %631 = arith.mulf %559, %630 : vector<32x2xf32>
    %cst_430 = arith.constant dense<0.000000e+00> : vector<2xf32>
    %632 = vector.multi_reduction <add>, %631, %cst_430 [0] : vector<32x2xf32> to vector<2xf32>
    %633 = vector.shape_cast %632 : vector<2xf32> to vector<1x2xf32>
    %c7_431 = arith.constant 7 : index
    %c0_432 = arith.constant 0 : index
    %c0_433 = arith.constant 0 : index
    %634 = vector.load %arg3[%c7_431, %c0_432, %c0_433] : memref<8x32x2xf32, #tpu.memory_space<vmem>>, vector<1x32x2xf32>
    %635 = vector.shape_cast %634 : vector<1x32x2xf32> to vector<32x2xf32>
    %636 = vector.broadcast %633 : vector<1x2xf32> to vector<32x2xf32>
    %637 = arith.mulf %636, %635 : vector<32x2xf32>
    %638 = arith.addf %628, %637 : vector<32x2xf32>
    %cst_434 = arith.constant dense<0xFF800000> : vector<2xf32>
    %639 = vector.multi_reduction <maximumf>, %638, %cst_434 [0] : vector<32x2xf32> to vector<2xf32>
    %640 = vector.shape_cast %639 : vector<2xf32> to vector<1x2xf32>
    %641 = vector.broadcast %640 : vector<1x2xf32> to vector<32x2xf32>
    %642 = arith.subf %638, %641 : vector<32x2xf32>
    %643 = math.exp %642 : vector<32x2xf32>
    %cst_435 = arith.constant dense<0.000000e+00> : vector<2xf32>
    %644 = vector.multi_reduction <add>, %643, %cst_435 [0] : vector<32x2xf32> to vector<2xf32>
    %645 = vector.shape_cast %644 : vector<2xf32> to vector<1x2xf32>
    %646 = vector.broadcast %645 : vector<1x2xf32> to vector<32x2xf32>
    %647 = arith.divf %643, %646 : vector<32x2xf32>
    %c6_436 = arith.constant 6 : index
    %c0_437 = arith.constant 0 : index
    %c0_438 = arith.constant 0 : index
    %648 = vector.load %arg4[%c6_436, %c0_437, %c0_438] : memref<8x32x2xf32, #tpu.memory_space<vmem>>, vector<1x32x2xf32>
    %649 = vector.shape_cast %648 : vector<1x32x2xf32> to vector<32x2xf32>
    %650 = vector.shape_cast %647 : vector<32x2xf32> to vector<1x32x2xf32>
    tpu.vector_store %arg4[%c6_436, %c0_437, %c0_438], %650 {strides = array<i32>} : memref<8x32x2xf32, #tpu.memory_space<vmem>>, vector<1x32x2xf32>,
    %c7_439 = arith.constant 7 : index
    %c0_440 = arith.constant 0 : index
    %c0_441 = arith.constant 0 : index
    %651 = vector.load %arg1[%c7_439, %c0_440, %c0_441] : memref<8x32x2xf32, #tpu.memory_space<vmem>>, vector<1x32x2xf32>
    %652 = vector.shape_cast %651 : vector<1x32x2xf32> to vector<32x2xf32>
    %c0_442 = arith.constant 0 : index
    %c0_443 = arith.constant 0 : index
    %c0_444 = arith.constant 0 : index
    %653 = vector.load %arg2[%c0_442, %c0_443, %c0_444] : memref<8x32x2xf32, #tpu.memory_space<vmem>>, vector<1x32x2xf32>
    %654 = vector.shape_cast %653 : vector<1x32x2xf32> to vector<32x2xf32>
    %655 = arith.mulf %652, %654 : vector<32x2xf32>
    %cst_445 = arith.constant dense<0.000000e+00> : vector<2xf32>
    %656 = vector.multi_reduction <add>, %655, %cst_445 [0] : vector<32x2xf32> to vector<2xf32>
    %657 = vector.shape_cast %656 : vector<2xf32> to vector<1x2xf32>
    %c0_446 = arith.constant 0 : index
    %c0_447 = arith.constant 0 : index
    %c0_448 = arith.constant 0 : index
    %658 = vector.load %arg3[%c0_446, %c0_447, %c0_448] : memref<8x32x2xf32, #tpu.memory_space<vmem>>, vector<1x32x2xf32>
    %659 = vector.shape_cast %658 : vector<1x32x2xf32> to vector<32x2xf32>
    %660 = vector.broadcast %657 : vector<1x2xf32> to vector<32x2xf32>
    %661 = arith.mulf %660, %659 : vector<32x2xf32>
    %c1_449 = arith.constant 1 : index
    %c0_450 = arith.constant 0 : index
    %c0_451 = arith.constant 0 : index
    %662 = vector.load %arg2[%c1_449, %c0_450, %c0_451] : memref<8x32x2xf32, #tpu.memory_space<vmem>>, vector<1x32x2xf32>
    %663 = vector.shape_cast %662 : vector<1x32x2xf32> to vector<32x2xf32>
    %664 = arith.mulf %652, %663 : vector<32x2xf32>
    %cst_452 = arith.constant dense<0.000000e+00> : vector<2xf32>
    %665 = vector.multi_reduction <add>, %664, %cst_452 [0] : vector<32x2xf32> to vector<2xf32>
    %666 = vector.shape_cast %665 : vector<2xf32> to vector<1x2xf32>
    %c1_453 = arith.constant 1 : index
    %c0_454 = arith.constant 0 : index
    %c0_455 = arith.constant 0 : index
    %667 = vector.load %arg3[%c1_453, %c0_454, %c0_455] : memref<8x32x2xf32, #tpu.memory_space<vmem>>, vector<1x32x2xf32>
    %668 = vector.shape_cast %667 : vector<1x32x2xf32> to vector<32x2xf32>
    %669 = vector.broadcast %666 : vector<1x2xf32> to vector<32x2xf32>
    %670 = arith.mulf %669, %668 : vector<32x2xf32>
    %671 = arith.addf %661, %670 : vector<32x2xf32>
    %c2_456 = arith.constant 2 : index
    %c0_457 = arith.constant 0 : index
    %c0_458 = arith.constant 0 : index
    %672 = vector.load %arg2[%c2_456, %c0_457, %c0_458] : memref<8x32x2xf32, #tpu.memory_space<vmem>>, vector<1x32x2xf32>
    %673 = vector.shape_cast %672 : vector<1x32x2xf32> to vector<32x2xf32>
    %674 = arith.mulf %652, %673 : vector<32x2xf32>
    %cst_459 = arith.constant dense<0.000000e+00> : vector<2xf32>
    %675 = vector.multi_reduction <add>, %674, %cst_459 [0] : vector<32x2xf32> to vector<2xf32>
    %676 = vector.shape_cast %675 : vector<2xf32> to vector<1x2xf32>
    %c2_460 = arith.constant 2 : index
    %c0_461 = arith.constant 0 : index
    %c0_462 = arith.constant 0 : index
    %677 = vector.load %arg3[%c2_460, %c0_461, %c0_462] : memref<8x32x2xf32, #tpu.memory_space<vmem>>, vector<1x32x2xf32>
    %678 = vector.shape_cast %677 : vector<1x32x2xf32> to vector<32x2xf32>
    %679 = vector.broadcast %676 : vector<1x2xf32> to vector<32x2xf32>
    %680 = arith.mulf %679, %678 : vector<32x2xf32>
    %681 = arith.addf %671, %680 : vector<32x2xf32>
    %c3_463 = arith.constant 3 : index
    %c0_464 = arith.constant 0 : index
    %c0_465 = arith.constant 0 : index
    %682 = vector.load %arg2[%c3_463, %c0_464, %c0_465] : memref<8x32x2xf32, #tpu.memory_space<vmem>>, vector<1x32x2xf32>
    %683 = vector.shape_cast %682 : vector<1x32x2xf32> to vector<32x2xf32>
    %684 = arith.mulf %652, %683 : vector<32x2xf32>
    %cst_466 = arith.constant dense<0.000000e+00> : vector<2xf32>
    %685 = vector.multi_reduction <add>, %684, %cst_466 [0] : vector<32x2xf32> to vector<2xf32>
    %686 = vector.shape_cast %685 : vector<2xf32> to vector<1x2xf32>
    %c3_467 = arith.constant 3 : index
    %c0_468 = arith.constant 0 : index
    %c0_469 = arith.constant 0 : index
    %687 = vector.load %arg3[%c3_467, %c0_468, %c0_469] : memref<8x32x2xf32, #tpu.memory_space<vmem>>, vector<1x32x2xf32>
    %688 = vector.shape_cast %687 : vector<1x32x2xf32> to vector<32x2xf32>
    %689 = vector.broadcast %686 : vector<1x2xf32> to vector<32x2xf32>
    %690 = arith.mulf %689, %688 : vector<32x2xf32>
    %691 = arith.addf %681, %690 : vector<32x2xf32>
    %c4_470 = arith.constant 4 : index
    %c0_471 = arith.constant 0 : index
    %c0_472 = arith.constant 0 : index
    %692 = vector.load %arg2[%c4_470, %c0_471, %c0_472] : memref<8x32x2xf32, #tpu.memory_space<vmem>>, vector<1x32x2xf32>
    %693 = vector.shape_cast %692 : vector<1x32x2xf32> to vector<32x2xf32>
    %694 = arith.mulf %652, %693 : vector<32x2xf32>
    %cst_473 = arith.constant dense<0.000000e+00> : vector<2xf32>
    %695 = vector.multi_reduction <add>, %694, %cst_473 [0] : vector<32x2xf32> to vector<2xf32>
    %696 = vector.shape_cast %695 : vector<2xf32> to vector<1x2xf32>
    %c4_474 = arith.constant 4 : index
    %c0_475 = arith.constant 0 : index
    %c0_476 = arith.constant 0 : index
    %697 = vector.load %arg3[%c4_474, %c0_475, %c0_476] : memref<8x32x2xf32, #tpu.memory_space<vmem>>, vector<1x32x2xf32>
    %698 = vector.shape_cast %697 : vector<1x32x2xf32> to vector<32x2xf32>
    %699 = vector.broadcast %696 : vector<1x2xf32> to vector<32x2xf32>
    %700 = arith.mulf %699, %698 : vector<32x2xf32>
    %701 = arith.addf %691, %700 : vector<32x2xf32>
    %c5_477 = arith.constant 5 : index
    %c0_478 = arith.constant 0 : index
    %c0_479 = arith.constant 0 : index
    %702 = vector.load %arg2[%c5_477, %c0_478, %c0_479] : memref<8x32x2xf32, #tpu.memory_space<vmem>>, vector<1x32x2xf32>
    %703 = vector.shape_cast %702 : vector<1x32x2xf32> to vector<32x2xf32>
    %704 = arith.mulf %652, %703 : vector<32x2xf32>
    %cst_480 = arith.constant dense<0.000000e+00> : vector<2xf32>
    %705 = vector.multi_reduction <add>, %704, %cst_480 [0] : vector<32x2xf32> to vector<2xf32>
    %706 = vector.shape_cast %705 : vector<2xf32> to vector<1x2xf32>
    %c5_481 = arith.constant 5 : index
    %c0_482 = arith.constant 0 : index
    %c0_483 = arith.constant 0 : index
    %707 = vector.load %arg3[%c5_481, %c0_482, %c0_483] : memref<8x32x2xf32, #tpu.memory_space<vmem>>, vector<1x32x2xf32>
    %708 = vector.shape_cast %707 : vector<1x32x2xf32> to vector<32x2xf32>
    %709 = vector.broadcast %706 : vector<1x2xf32> to vector<32x2xf32>
    %710 = arith.mulf %709, %708 : vector<32x2xf32>
    %711 = arith.addf %701, %710 : vector<32x2xf32>
    %c6_484 = arith.constant 6 : index
    %c0_485 = arith.constant 0 : index
    %c0_486 = arith.constant 0 : index
    %712 = vector.load %arg2[%c6_484, %c0_485, %c0_486] : memref<8x32x2xf32, #tpu.memory_space<vmem>>, vector<1x32x2xf32>
    %713 = vector.shape_cast %712 : vector<1x32x2xf32> to vector<32x2xf32>
    %714 = arith.mulf %652, %713 : vector<32x2xf32>
    %cst_487 = arith.constant dense<0.000000e+00> : vector<2xf32>
    %715 = vector.multi_reduction <add>, %714, %cst_487 [0] : vector<32x2xf32> to vector<2xf32>
    %716 = vector.shape_cast %715 : vector<2xf32> to vector<1x2xf32>
    %c6_488 = arith.constant 6 : index
    %c0_489 = arith.constant 0 : index
    %c0_490 = arith.constant 0 : index
    %717 = vector.load %arg3[%c6_488, %c0_489, %c0_490] : memref<8x32x2xf32, #tpu.memory_space<vmem>>, vector<1x32x2xf32>
    %718 = vector.shape_cast %717 : vector<1x32x2xf32> to vector<32x2xf32>
    %719 = vector.broadcast %716 : vector<1x2xf32> to vector<32x2xf32>
    %720 = arith.mulf %719, %718 : vector<32x2xf32>
    %721 = arith.addf %711, %720 : vector<32x2xf32>
    %c7_491 = arith.constant 7 : index
    %c0_492 = arith.constant 0 : index
    %c0_493 = arith.constant 0 : index
    %722 = vector.load %arg2[%c7_491, %c0_492, %c0_493] : memref<8x32x2xf32, #tpu.memory_space<vmem>>, vector<1x32x2xf32>
    %723 = vector.shape_cast %722 : vector<1x32x2xf32> to vector<32x2xf32>
    %724 = arith.mulf %652, %723 : vector<32x2xf32>
    %cst_494 = arith.constant dense<0.000000e+00> : vector<2xf32>
    %725 = vector.multi_reduction <add>, %724, %cst_494 [0] : vector<32x2xf32> to vector<2xf32>
    %726 = vector.shape_cast %725 : vector<2xf32> to vector<1x2xf32>
    %c7_495 = arith.constant 7 : index
    %c0_496 = arith.constant 0 : index
    %c0_497 = arith.constant 0 : index
    %727 = vector.load %arg3[%c7_495, %c0_496, %c0_497] : memref<8x32x2xf32, #tpu.memory_space<vmem>>, vector<1x32x2xf32>
    %728 = vector.shape_cast %727 : vector<1x32x2xf32> to vector<32x2xf32>
    %729 = vector.broadcast %726 : vector<1x2xf32> to vector<32x2xf32>
    %730 = arith.mulf %729, %728 : vector<32x2xf32>
    %731 = arith.addf %721, %730 : vector<32x2xf32>
    %cst_498 = arith.constant dense<0xFF800000> : vector<2xf32>
    %732 = vector.multi_reduction <maximumf>, %731, %cst_498 [0] : vector<32x2xf32> to vector<2xf32>
    %733 = vector.shape_cast %732 : vector<2xf32> to vector<1x2xf32>
    %734 = vector.broadcast %733 : vector<1x2xf32> to vector<32x2xf32>
    %735 = arith.subf %731, %734 : vector<32x2xf32>
    %736 = math.exp %735 : vector<32x2xf32>
    %cst_499 = arith.constant dense<0.000000e+00> : vector<2xf32>
    %737 = vector.multi_reduction <add>, %736, %cst_499 [0] : vector<32x2xf32> to vector<2xf32>
    %738 = vector.shape_cast %737 : vector<2xf32> to vector<1x2xf32>
    %739 = vector.broadcast %738 : vector<1x2xf32> to vector<32x2xf32>
    %740 = arith.divf %736, %739 : vector<32x2xf32>
    %c7_500 = arith.constant 7 : index
    %c0_501 = arith.constant 0 : index
    %c0_502 = arith.constant 0 : index
    %741 = vector.load %arg4[%c7_500, %c0_501, %c0_502] : memref<8x32x2xf32, #tpu.memory_space<vmem>>, vector<1x32x2xf32>
    %742 = vector.shape_cast %741 : vector<1x32x2xf32> to vector<32x2xf32>
    %743 = vector.shape_cast %740 : vector<32x2xf32> to vector<1x32x2xf32>
    tpu.vector_store %arg4[%c7_500, %c0_501, %c0_502], %743 {strides = array<i32>} : memref<8x32x2xf32, #tpu.memory_space<vmem>>, vector<1x32x2xf32>,
    return
  }
  func.func @transform_0(%arg0: i32) -> (i32, i32, i32) {
    %c0_i32 = arith.constant 0 : i32
    %c0_i32_0 = arith.constant 0 : i32
    %c0_i32_1 = arith.constant 0 : i32
    return %c0_i32, %c0_i32_0, %arg0 : i32, i32, i32
  }
  func.func @transform_1(%arg0: i32) -> (i32, i32, i32) {
    %c0_i32 = arith.constant 0 : i32
    %c0_i32_0 = arith.constant 0 : i32
    %c0_i32_1 = arith.constant 0 : i32
    return %c0_i32, %c0_i32_0, %arg0 : i32, i32, i32
  }
  func.func @transform_2(%arg0: i32) -> (i32, i32, i32) {
    %c0_i32 = arith.constant 0 : i32
    %c0_i32_0 = arith.constant 0 : i32
    %c0_i32_1 = arith.constant 0 : i32
    return %c0_i32, %c0_i32_0, %arg0 : i32, i32, i32
  }
  func.func @transform_3(%arg0: i32) -> (i32, i32, i32) {
    %c0_i32 = arith.constant 0 : i32
    %c0_i32_0 = arith.constant 0 : i32
    %c0_i32_1 = arith.constant 0 : i32
    return %c0_i32, %c0_i32_0, %arg0 : i32, i32, i32
  }
}

</mosaic_0001>

<llo_original>
// kernel: tpu_custom_call.1
$region0: #{tpu_custom_call.1}
  #allocation0 [shape = 'u32[]', space=smem, size = 0x4, offset = 0x4, fixed_abs, tag = 'smem constant byte address 0x4 - core index']
  #allocation1 [shape = 'u32[144,128]{1,0:T(1,128)}', space=vmem, size = 0x12000, scoped, tag = 'internal scratch']
  %s0 = inlined_call_operand.vmem [shape: f32[8,32,2], index: 0, kind: input, shape index: {}]
  %s1 = inlined_call_operand.vmem [shape: f32[8,32,2], index: 1, kind: input, shape index: {}]
  %s2 = inlined_call_operand.vmem [shape: f32[8,32,2], index: 2, kind: input, shape index: {}]
  %s3 = inlined_call_operand.vmem [shape: f32[8,32,2], index: 3, kind: output, shape index: {}]
  %s4 = sld [smem:[#allocation0]]
  $region22: #{tpu_custom_call.1} parent=0
    _
  %s6 = ssub.s32 1, %s4
  %s7 = scalar_select 0, %s6, %s4
  // Predicated region
  $region2: #{tpu_custom_call.1} parent=0 // pred_check
    _
  $region3: #{tpu_custom_call.1} parent=0 // pred_check_branch
    %9 = sbr.rel (0) target = $region5
  $region4: #{tpu_custom_call.1} parent=0 // pred_region
    _
  $region5: #{tpu_custom_call.1} parent=0 // pred_fallthru
    _
  // Predicated region
  $region6: #{tpu_custom_call.1} parent=0 // pred_check
    _
  $region7: #{tpu_custom_call.1} parent=0 // pred_check_branch
    %11 = sbr.rel (0) target = $region9
  $region8: #{tpu_custom_call.1} parent=0 // pred_region
    _
  $region9: #{tpu_custom_call.1} parent=0 // pred_fallthru
    _
  // Predicated region
  $region10: #{tpu_custom_call.1} parent=0 // pred_check
    _
  $region11: #{tpu_custom_call.1} parent=0 // pred_check_branch
    %13 = sbr.rel (0) target = $region13
  $region12: #{tpu_custom_call.1} parent=0 // pred_region
    _
  $region13: #{tpu_custom_call.1} parent=0 // pred_fallthru
    _
  %v14 = vld [vmem:[%s0] sm:$0xff]
  %v15 = vld [vmem:[%s0 + $0x8] sm:$0xff]
  %v16 = vld [vmem:[%s0 + $0x10] sm:$0xff]
  %v17 = vld [vmem:[%s0 + $0x18] sm:$0xff]
  %v18 = vld [vmem:[%s1] sm:$0xff]
  %v19 = vld [vmem:[%s1 + $0x8] sm:$0xff]
  %v20 = vld [vmem:[%s1 + $0x10] sm:$0xff]
  %v21 = vld [vmem:[%s1 + $0x18] sm:$0xff]
  %v22 = vmul.f32 %v14, %v18
  %v23 = vmul.f32 %v15, %v19
  %v24 = vmul.f32 %v16, %v20
  %v25 = vmul.f32 %v17, %v21
  %vm26 = vcmask 15360
  %v27 = vsel %vm26, %v22, 0.0
  %v28 = vsel %vm26, %v23, 0.0
  %v29 = vadd.f32 %v27, %v28
  %v30 = vsel %vm26, %v24, 0.0
  %v31 = vadd.f32 %v29, %v30
  %v32 = vsel %vm26, %v25, 0.0
  %v33 = vadd.f32 %v31, %v32
  %v34 = vrot.slane %v33, 4
  %v35 = vadd.f32 %v33, %v34
  %v36 = vrot.slane %v35, 2
  %v37 = vadd.f32 %v35, %v36
  %v38 = vrot.slane %v37, 1
  %v39 = vadd.f32 %v37, %v38
  %v40 = vld [vmem:[%s2] sm:$0xff]
  %v41 = vld [vmem:[%s2 + $0x8] sm:$0xff]
  %v42 = vld [vmem:[%s2 + $0x10] sm:$0xff]
  %v43 = vld [vmem:[%s2 + $0x18] sm:$0xff]
  %v44 = vmul.f32 %v39, %v40
  %v45 = vmul.f32 %v39, %v41
  %v46 = vmul.f32 %v39, %v42
  %v47 = vmul.f32 %v39, %v43
  %s48 = scalar_lea.vmem %s1, 32
  %v49 = vld [vmem:[%s48] sm:$0xff]
  %v50 = vld [vmem:[%s48 + $0x8] sm:$0xff]
  %v51 = vld [vmem:[%s48 + $0x10] sm:$0xff]
  %v52 = vld [vmem:[%s48 + $0x18] sm:$0xff]
  %v53 = vmul.f32 %v14, %v49
  %v54 = vmul.f32 %v15, %v50
  %v55 = vmul.f32 %v16, %v51
  %v56 = vmul.f32 %v17, %v52
  %v57 = vsel %vm26, %v53, 0.0
  %v58 = vsel %vm26, %v54, 0.0
  %v59 = vadd.f32 %v57, %v58
  %v60 = vsel %vm26, %v55, 0.0
  %v61 = vadd.f32 %v59, %v60
  %v62 = vsel %vm26, %v56, 0.0
  %v63 = vadd.f32 %v61, %v62
  %v64 = vrot.slane %v63, 4
  %v65 = vadd.f32 %v63, %v64
  %v66 = vrot.slane %v65, 2
  %v67 = vadd.f32 %v65, %v66
  %v68 = vrot.slane %v67, 1
  %v69 = vadd.f32 %v67, %v68
  %s70 = scalar_lea.vmem %s2, 32
  %v71 = vld [vmem:[%s70] sm:$0xff]
  %v72 = vld [vmem:[%s70 + $0x8] sm:$0xff]
  %v73 = vld [vmem:[%s70 + $0x10] sm:$0xff]
  %v74 = vld [vmem:[%s70 + $0x18] sm:$0xff]
  %v75 = vmul.f32 %v69, %v71
  %v76 = vmul.f32 %v69, %v72
  %v77 = vmul.f32 %v69, %v73
  %v78 = vmul.f32 %v69, %v74
  %v79 = vadd.f32 %v44, %v75
  %v80 = vadd.f32 %v45, %v76
  %v81 = vadd.f32 %v46, %v77
  %v82 = vadd.f32 %v47, %v78
  %s83 = scalar_lea.vmem %s1, 64
  %v84 = vld [vmem:[%s83] sm:$0xff]
  %v85 = vld [vmem:[%s83 + $0x8] sm:$0xff]
  %v86 = vld [vmem:[%s83 + $0x10] sm:$0xff]
  %v87 = vld [vmem:[%s83 + $0x18] sm:$0xff]
  %v88 = vmul.f32 %v14, %v84
  %v89 = vmul.f32 %v15, %v85
  %v90 = vmul.f32 %v16, %v86
  %v91 = vmul.f32 %v17, %v87
  %v92 = vsel %vm26, %v88, 0.0
  %v93 = vsel %vm26, %v89, 0.0
  %v94 = vadd.f32 %v92, %v93
  %v95 = vsel %vm26, %v90, 0.0
  %v96 = vadd.f32 %v94, %v95
  %v97 = vsel %vm26, %v91, 0.0
  %v98 = vadd.f32 %v96, %v97
  %v99 = vrot.slane %v98, 4
  %v100 = vadd.f32 %v98, %v99
  %v101 = vrot.slane %v100, 2
  %v102 = vadd.f32 %v100, %v101
  %v103 = vrot.slane %v102, 1
  %v104 = vadd.f32 %v102, %v103
  %s105 = scalar_lea.vmem %s2, 64
  %v106 = vld [vmem:[%s105] sm:$0xff]
  %v107 = vld [vmem:[%s105 + $0x8] sm:$0xff]
  %v108 = vld [vmem:[%s105 + $0x10] sm:$0xff]
  %v109 = vld [vmem:[%s105 + $0x18] sm:$0xff]
  %v110 = vmul.f32 %v104, %v106
  %v111 = vmul.f32 %v104, %v107
  %v112 = vmul.f32 %v104, %v108
  %v113 = vmul.f32 %v104, %v109
  %v114 = vadd.f32 %v79, %v110
  %v115 = vadd.f32 %v80, %v111
  %v116 = vadd.f32 %v81, %v112
  %v117 = vadd.f32 %v82, %v113
  %s118 = scalar_lea.vmem %s1, 96
  %v119 = vld [vmem:[%s118] sm:$0xff]
  %v120 = vld [vmem:[%s118 + $0x8] sm:$0xff]
  %v121 = vld [vmem:[%s118 + $0x10] sm:$0xff]
  %v122 = vld [vmem:[%s118 + $0x18] sm:$0xff]
  %v123 = vmul.f32 %v14, %v119
  %v124 = vmul.f32 %v15, %v120
  %v125 = vmul.f32 %v16, %v121
  %v126 = vmul.f32 %v17, %v122
  %v127 = vsel %vm26, %v123, 0.0
  %v128 = vsel %vm26, %v124, 0.0
  %v129 = vadd.f32 %v127, %v128
  %v130 = vsel %vm26, %v125, 0.0
  %v131 = vadd.f32 %v129, %v130
  %v132 = vsel %vm26, %v126, 0.0
  %v133 = vadd.f32 %v131, %v132
  %v134 = vrot.slane %v133, 4
  %v135 = vadd.f32 %v133, %v134
  %v136 = vrot.slane %v135, 2
  %v137 = vadd.f32 %v135, %v136
  %v138 = vrot.slane %v137, 1
  %v139 = vadd.f32 %v137, %v138
  %s140 = scalar_lea.vmem %s2, 96
  %v141 = vld [vmem:[%s140] sm:$0xff]
  %v142 = vld [vmem:[%s140 + $0x8] sm:$0xff]
  %v143 = vld [vmem:[%s140 + $0x10] sm:$0xff]
  %v144 = vld [vmem:[%s140 + $0x18] sm:$0xff]
  %v145 = vmul.f32 %v139, %v141
  %v146 = vmul.f32 %v139, %v142
  %v147 = vmul.f32 %v139, %v143
  %v148 = vmul.f32 %v139, %v144
  %v149 = vadd.f32 %v114, %v145
  %v150 = vadd.f32 %v115, %v146
  %v151 = vadd.f32 %v116, %v147
  %v152 = vadd.f32 %v117, %v148
  %s153 = scalar_lea.vmem %s1, 128
  %v154 = vld [vmem:[%s153] sm:$0xff]
  %v155 = vld [vmem:[%s153 + $0x8] sm:$0xff]
  %v156 = vld [vmem:[%s153 + $0x10] sm:$0xff]
  %v157 = vld [vmem:[%s153 + $0x18] sm:$0xff]
  %v158 = vmul.f32 %v14, %v154
  %v159 = vmul.f32 %v15, %v155
  %v160 = vmul.f32 %v16, %v156
  %v161 = vmul.f32 %v17, %v157
  %v162 = vsel %vm26, %v158, 0.0
  %v163 = vsel %vm26, %v159, 0.0
  %v164 = vadd.f32 %v162, %v163
  %v165 = vsel %vm26, %v160, 0.0
  %v166 = vadd.f32 %v164, %v165
  %v167 = vsel %vm26, %v161, 0.0
  %v168 = vadd.f32 %v166, %v167
  %v169 = vrot.slane %v168, 4
  %v170 = vadd.f32 %v168, %v169
  %v171 = vrot.slane %v170, 2
  %v172 = vadd.f32 %v170, %v171
  %v173 = vrot.slane %v172, 1
  %v174 = vadd.f32 %v172, %v173
  %s175 = scalar_lea.vmem %s2, 128
  %v176 = vld [vmem:[%s175] sm:$0xff]
  %v177 = vld [vmem:[%s175 + $0x8] sm:$0xff]
  %v178 = vld [vmem:[%s175 + $0x10] sm:$0xff]
  %v179 = vld [vmem:[%s175 + $0x18] sm:$0xff]
  %v180 = vmul.f32 %v174, %v176
  %v181 = vmul.f32 %v174, %v177
  %v182 = vmul.f32 %v174, %v178
  %v183 = vmul.f32 %v174, %v179
  %v184 = vadd.f32 %v149, %v180
  %v185 = vadd.f32 %v150, %v181
  %v186 = vadd.f32 %v151, %v182
  %v187 = vadd.f32 %v152, %v183
  %s188 = scalar_lea.vmem %s1, 160
  %v189 = vld [vmem:[%s188] sm:$0xff]
  %v190 = vld [vmem:[%s188 + $0x8] sm:$0xff]
  %v191 = vld [vmem:[%s188 + $0x10] sm:$0xff]
  %v192 = vld [vmem:[%s188 + $0x18] sm:$0xff]
  %v193 = vmul.f32 %v14, %v189
  %v194 = vmul.f32 %v15, %v190
  %v195 = vmul.f32 %v16, %v191
  %v196 = vmul.f32 %v17, %v192
  %v197 = vsel %vm26, %v193, 0.0
  %v198 = vsel %vm26, %v194, 0.0
  %v199 = vadd.f32 %v197, %v198
  %v200 = vsel %vm26, %v195, 0.0
  %v201 = vadd.f32 %v199, %v200
  %v202 = vsel %vm26, %v196, 0.0
  %v203 = vadd.f32 %v201, %v202
  %v204 = vrot.slane %v203, 4
  %v205 = vadd.f32 %v203, %v204
  %v206 = vrot.slane %v205, 2
  %v207 = vadd.f32 %v205, %v206
  %v208 = vrot.slane %v207, 1
  %v209 = vadd.f32 %v207, %v208
  %s210 = scalar_lea.vmem %s2, 160
  %v211 = vld [vmem:[%s210] sm:$0xff]
  %v212 = vld [vmem:[%s210 + $0x8] sm:$0xff]
  %v213 = vld [vmem:[%s210 + $0x10] sm:$0xff]
  %v214 = vld [vmem:[%s210 + $0x18] sm:$0xff]
  %v215 = vmul.f32 %v209, %v211
  %v216 = vmul.f32 %v209, %v212
  %v217 = vmul.f32 %v209, %v213
  %v218 = vmul.f32 %v209, %v214
  %v219 = vadd.f32 %v184, %v215
  %v220 = vadd.f32 %v185, %v216
  %v221 = vadd.f32 %v186, %v217
  %v222 = vadd.f32 %v187, %v218
  %s223 = scalar_lea.vmem %s1, 192
  %v224 = vld [vmem:[%s223] sm:$0xff]
  %v225 = vld [vmem:[%s223 + $0x8] sm:$0xff]
  %v226 = vld [vmem:[%s223 + $0x10] sm:$0xff]
  %v227 = vld [vmem:[%s223 + $0x18] sm:$0xff]
  %v228 = vmul.f32 %v14, %v224
  %v229 = vmul.f32 %v15, %v225
  %v230 = vmul.f32 %v16, %v226
  %v231 = vmul.f32 %v17, %v227
  %v232 = vsel %vm26, %v228, 0.0
  %v233 = vsel %vm26, %v229, 0.0
  %v234 = vadd.f32 %v232, %v233
  %v235 = vsel %vm26, %v230, 0.0
  %v236 = vadd.f32 %v234, %v235
  %v237 = vsel %vm26, %v231, 0.0
  %v238 = vadd.f32 %v236, %v237
  %v239 = vrot.slane %v238, 4
  %v240 = vadd.f32 %v238, %v239
  %v241 = vrot.slane %v240, 2
  %v242 = vadd.f32 %v240, %v241
  %v243 = vrot.slane %v242, 1
  %v244 = vadd.f32 %v242, %v243
  %s245 = scalar_lea.vmem %s2, 192
  %v246 = vld [vmem:[%s245] sm:$0xff]
  %v247 = vld [vmem:[%s245 + $0x8] sm:$0xff]
  %v248 = vld [vmem:[%s245 + $0x10] sm:$0xff]
  %v249 = vld [vmem:[%s245 + $0x18] sm:$0xff]
  %v250 = vmul.f32 %v244, %v246
  %v251 = vmul.f32 %v244, %v247
  %v252 = vmul.f32 %v244, %v248
  %v253 = vmul.f32 %v244, %v249
  %v254 = vadd.f32 %v219, %v250
  %v255 = vadd.f32 %v220, %v251
  %v256 = vadd.f32 %v221, %v252
  %v257 = vadd.f32 %v222, %v253
  %s258 = scalar_lea.vmem %s1, 224
  %v259 = vld [vmem:[%s258] sm:$0xff]
  %v260 = vld [vmem:[%s258 + $0x8] sm:$0xff]
  %v261 = vld [vmem:[%s258 + $0x10] sm:$0xff]
  %v262 = vld [vmem:[%s258 + $0x18] sm:$0xff]
  %v263 = vmul.f32 %v14, %v259
  %v264 = vmul.f32 %v15, %v260
  %v265 = vmul.f32 %v16, %v261
  %v266 = vmul.f32 %v17, %v262
  %v267 = vsel %vm26, %v263, 0.0
  %v268 = vsel %vm26, %v264, 0.0
  %v269 = vadd.f32 %v267, %v268
  %v270 = vsel %vm26, %v265, 0.0
  %v271 = vadd.f32 %v269, %v270
  %v272 = vsel %vm26, %v266, 0.0
  %v273 = vadd.f32 %v271, %v272
  %v274 = vrot.slane %v273, 4
  %v275 = vadd.f32 %v273, %v274
  %v276 = vrot.slane %v275, 2
  %v277 = vadd.f32 %v275, %v276
  %v278 = vrot.slane %v277, 1
  %v279 = vadd.f32 %v277, %v278
  %s280 = scalar_lea.vmem %s2, 224
  %v281 = vld [vmem:[%s280] sm:$0xff]
  %v282 = vld [vmem:[%s280 + $0x8] sm:$0xff]
  %v283 = vld [vmem:[%s280 + $0x10] sm:$0xff]
  %v284 = vld [vmem:[%s280 + $0x18] sm:$0xff]
  %v285 = vmul.f32 %v279, %v281
  %v286 = vmul.f32 %v279, %v282
  %v287 = vmul.f32 %v279, %v283
  %v288 = vmul.f32 %v279, %v284
  %v289 = vadd.f32 %v254, %v285
  %v290 = vadd.f32 %v255, %v286
  %v291 = vadd.f32 %v256, %v287
  %v292 = vadd.f32 %v257, %v288
  %v293 = vsel %vm26, %v289, -inf
  %v294 = vsel %vm26, %v290, -inf
  %v295 = vsel %vm26, %v291, -inf
  %v296 = vsel %vm26, %v292, -inf
  %v297 = vmax.f32 %v293, %v294
  %v298 = vmax.f32 %v295, %v296
  %v299 = vmax.f32 %v297, %v298
  %v300 = vrot.slane %v299, 4
  %v301 = vmax.f32 %v299, %v300
  %v302 = vrot.slane %v301, 2
  %v303 = vmax.f32 %v301, %v302
  %v304 = vrot.slane %v303, 1
  %v305 = vmax.f32 %v303, %v304
  %v306 = vsub.f32 %v289, %v305
  %v307 = vsub.f32 %v290, %v305
  %v308 = vsub.f32 %v291, %v305
  %v309 = vsub.f32 %v292, %v305
  %v310 = vmul.f32 %v306, 1.442695
  %v311 = vpow.pop %v310
  %v312 = vmul.f32 %v307, 1.442695
  %v313 = vpow.pop %v312
  %v314 = vmul.f32 %v308, 1.442695
  %v315 = vpow.pop %v314
  %v316 = vmul.f32 %v309, 1.442695
  %v317 = vpow.pop %v316
  %v318 = vsel %vm26, %v311, 0.0
  %v319 = vsel %vm26, %v313, 0.0
  %v320 = vadd.f32 %v318, %v319
  %v321 = vsel %vm26, %v315, 0.0
  %v322 = vadd.f32 %v320, %v321
  %v323 = vsel %vm26, %v317, 0.0
  %v324 = vadd.f32 %v322, %v323
  %v325 = vrot.slane %v324, 4
  %v326 = vadd.f32 %v324, %v325
  %v327 = vrot.slane %v326, 2
  %v328 = vadd.f32 %v326, %v327
  %v329 = vrot.slane %v328, 1
  %v330 = vadd.f32 %v328, %v329
  %v331 = vrcp.pop %v330
  %v332 = vmul.f32 %v311, %v331
  %v333 = vmul.f32 %v313, %v331
  %v334 = vmul.f32 %v315, %v331
  %v335 = vmul.f32 %v317, %v331
  %336 = vst.msk [vmem:[%s3] sm:$0xff] %vm26, %v332
  %337 = vst.msk [vmem:[%s3 + $0x8] sm:$0xff] %vm26, %v333
  %338 = vst.msk [vmem:[%s3 + $0x10] sm:$0xff] %vm26, %v334
  %339 = vst.msk [vmem:[%s3 + $0x18] sm:$0xff] %vm26, %v335
  %s340 = scalar_lea.vmem %s0, 32
  %v341 = vld [vmem:[%s340] sm:$0xff]
  %v342 = vld [vmem:[%s340 + $0x8] sm:$0xff]
  %v343 = vld [vmem:[%s340 + $0x10] sm:$0xff]
  %v344 = vld [vmem:[%s340 + $0x18] sm:$0xff]
  %v345 = vld [vmem:[%s1] sm:$0xff]
  %v346 = vld [vmem:[%s1 + $0x8] sm:$0xff]
  %v347 = vld [vmem:[%s1 + $0x10] sm:$0xff]
  %v348 = vld [vmem:[%s1 + $0x18] sm:$0xff]
  %v349 = vmul.f32 %v341, %v345
  %v350 = vmul.f32 %v342, %v346
  %v351 = vmul.f32 %v343, %v347
  %v352 = vmul.f32 %v344, %v348
  %v353 = vsel %vm26, %v349, 0.0
  %v354 = vsel %vm26, %v350, 0.0
  %v355 = vadd.f32 %v353, %v354
  %v356 = vsel %vm26, %v351, 0.0
  %v357 = vadd.f32 %v355, %v356
  %v358 = vsel %vm26, %v352, 0.0
  %v359 = vadd.f32 %v357, %v358
  %v360 = vrot.slane %v359, 4
  %v361 = vadd.f32 %v359, %v360
  %v362 = vrot.slane %v361, 2
  %v363 = vadd.f32 %v361, %v362
  %v364 = vrot.slane %v363, 1
  %v365 = vadd.f32 %v363, %v364
  %v366 = vld [vmem:[%s2] sm:$0xff]
  %v367 = vld [vmem:[%s2 + $0x8] sm:$0xff]
  %v368 = vld [vmem:[%s2 + $0x10] sm:$0xff]
  %v369 = vld [vmem:[%s2 + $0x18] sm:$0xff]
  %v370 = vmul.f32 %v365, %v366
  %v371 = vmul.f32 %v365, %v367
  %v372 = vmul.f32 %v365, %v368
  %v373 = vmul.f32 %v365, %v369
  %v374 = vld [vmem:[%s48] sm:$0xff]
  %v375 = vld [vmem:[%s48 + $0x8] sm:$0xff]
  %v376 = vld [vmem:[%s48 + $0x10] sm:$0xff]
  %v377 = vld [vmem:[%s48 + $0x18] sm:$0xff]
  %v378 = vmul.f32 %v341, %v374
  %v379 = vmul.f32 %v342, %v375
  %v380 = vmul.f32 %v343, %v376
  %v381 = vmul.f32 %v344, %v377
  %v382 = vsel %vm26, %v378, 0.0
  %v383 = vsel %vm26, %v379, 0.0
  %v384 = vadd.f32 %v382, %v383
  %v385 = vsel %vm26, %v380, 0.0
  %v386 = vadd.f32 %v384, %v385
  %v387 = vsel %vm26, %v381, 0.0
  %v388 = vadd.f32 %v386, %v387
  %v389 = vrot.slane %v388, 4
  %v390 = vadd.f32 %v388, %v389
  %v391 = vrot.slane %v390, 2
  %v392 = vadd.f32 %v390, %v391
  %v393 = vrot.slane %v392, 1
  %v394 = vadd.f32 %v392, %v393
  %v395 = vld [vmem:[%s70] sm:$0xff]
  %v396 = vld [vmem:[%s70 + $0x8] sm:$0xff]
  %v397 = vld [vmem:[%s70 + $0x10] sm:$0xff]
  %v398 = vld [vmem:[%s70 + $0x18] sm:$0xff]
  %v399 = vmul.f32 %v394, %v395
  %v400 = vmul.f32 %v394, %v396
  %v401 = vmul.f32 %v394, %v397
  %v402 = vmul.f32 %v394, %v398
  %v403 = vadd.f32 %v370, %v399
  %v404 = vadd.f32 %v371, %v400
  %v405 = vadd.f32 %v372, %v401
  %v406 = vadd.f32 %v373, %v402
  %v407 = vld [vmem:[%s83] sm:$0xff]
  %v408 = vld [vmem:[%s83 + $0x8] sm:$0xff]
  %v409 = vld [vmem:[%s83 + $0x10] sm:$0xff]
  %v410 = vld [vmem:[%s83 + $0x18] sm:$0xff]
  %v411 = vmul.f32 %v341, %v407
  %v412 = vmul.f32 %v342, %v408
  %v413 = vmul.f32 %v343, %v409
  %v414 = vmul.f32 %v344, %v410
  %v415 = vsel %vm26, %v411, 0.0
  %v416 = vsel %vm26, %v412, 0.0
  %v417 = vadd.f32 %v415, %v416
  %v418 = vsel %vm26, %v413, 0.0
  %v419 = vadd.f32 %v417, %v418
  %v420 = vsel %vm26, %v414, 0.0
  %v421 = vadd.f32 %v419, %v420
  %v422 = vrot.slane %v421, 4
  %v423 = vadd.f32 %v421, %v422
  %v424 = vrot.slane %v423, 2
  %v425 = vadd.f32 %v423, %v424
  %v426 = vrot.slane %v425, 1
  %v427 = vadd.f32 %v425, %v426
  %v428 = vld [vmem:[%s105] sm:$0xff]
  %v429 = vld [vmem:[%s105 + $0x8] sm:$0xff]
  %v430 = vld [vmem:[%s105 + $0x10] sm:$0xff]
  %v431 = vld [vmem:[%s105 + $0x18] sm:$0xff]
  %v432 = vmul.f32 %v427, %v428
  %v433 = vmul.f32 %v427, %v429
  %v434 = vmul.f32 %v427, %v430
  %v435 = vmul.f32 %v427, %v431
  %v436 = vadd.f32 %v403, %v432
  %v437 = vadd.f32 %v404, %v433
  %v438 = vadd.f32 %v405, %v434
  %v439 = vadd.f32 %v406, %v435
  %v440 = vld [vmem:[%s118] sm:$0xff]
  %v441 = vld [vmem:[%s118 + $0x8] sm:$0xff]
  %v442 = vld [vmem:[%s118 + $0x10] sm:$0xff]
  %v443 = vld [vmem:[%s118 + $0x18] sm:$0xff]
  %v444 = vmul.f32 %v341, %v440
  %v445 = vmul.f32 %v342, %v441
  %v446 = vmul.f32 %v343, %v442
  %v447 = vmul.f32 %v344, %v443
  %v448 = vsel %vm26, %v444, 0.0
  %v449 = vsel %vm26, %v445, 0.0
  %v450 = vadd.f32 %v448, %v449
  %v451 = vsel %vm26, %v446, 0.0
  %v452 = vadd.f32 %v450, %v451
  %v453 = vsel %vm26, %v447, 0.0
  %v454 = vadd.f32 %v452, %v453
  %v455 = vrot.slane %v454, 4
  %v456 = vadd.f32 %v454, %v455
  %v457 = vrot.slane %v456, 2
  %v458 = vadd.f32 %v456, %v457
  %v459 = vrot.slane %v458, 1
  %v460 = vadd.f32 %v458, %v459
  %v461 = vld [vmem:[%s140] sm:$0xff]
  %v462 = vld [vmem:[%s140 + $0x8] sm:$0xff]
  %v463 = vld [vmem:[%s140 + $0x10] sm:$0xff]
  %v464 = vld [vmem:[%s140 + $0x18] sm:$0xff]
  %v465 = vmul.f32 %v460, %v461
  %v466 = vmul.f32 %v460, %v462
  %v467 = vmul.f32 %v460, %v463
  %v468 = vmul.f32 %v460, %v464
  %v469 = vadd.f32 %v436, %v465
  %v470 = vadd.f32 %v437, %v466
  %v471 = vadd.f32 %v438, %v467
  %v472 = vadd.f32 %v439, %v468
  %v473 = vld [vmem:[%s153] sm:$0xff]
  %v474 = vld [vmem:[%s153 + $0x8] sm:$0xff]
  %v475 = vld [vmem:[%s153 + $0x10] sm:$0xff]
  %v476 = vld [vmem:[%s153 + $0x18] sm:$0xff]
  %v477 = vmul.f32 %v341, %v473
  %v478 = vmul.f32 %v342, %v474
  %v479 = vmul.f32 %v343, %v475
  %v480 = vmul.f32 %v344, %v476
  %v481 = vsel %vm26, %v477, 0.0
  %v482 = vsel %vm26, %v478, 0.0
  %v483 = vadd.f32 %v481, %v482
  %v484 = vsel %vm26, %v479, 0.0
  %v485 = vadd.f32 %v483, %v484
  %v486 = vsel %vm26, %v480, 0.0
  %v487 = vadd.f32 %v485, %v486
  %v488 = vrot.slane %v487, 4
  %v489 = vadd.f32 %v487, %v488
  %v490 = vrot.slane %v489, 2
  %v491 = vadd.f32 %v489, %v490
  %v492 = vrot.slane %v491, 1
  %v493 = vadd.f32 %v491, %v492
  %v494 = vld [vmem:[%s175] sm:$0xff]
  %v495 = vld [vmem:[%s175 + $0x8] sm:$0xff]
  %v496 = vld [vmem:[%s175 + $0x10] sm:$0xff]
  %v497 = vld [vmem:[%s175 + $0x18] sm:$0xff]
  %v498 = vmul.f32 %v493, %v494
  %v499 = vmul.f32 %v493, %v495
  %v500 = vmul.f32 %v493, %v496
  %v501 = vmul.f32 %v493, %v497
  %v502 = vadd.f32 %v469, %v498
  %v503 = vadd.f32 %v470, %v499
  %v504 = vadd.f32 %v471, %v500
  %v505 = vadd.f32 %v472, %v501
  %v506 = vld [vmem:[%s188] sm:$0xff]
  %v507 = vld [vmem:[%s188 + $0x8] sm:$0xff]
  %v508 = vld [vmem:[%s188 + $0x10] sm:$0xff]
  %v509 = vld [vmem:[%s188 + $0x18] sm:$0xff]
  %v510 = vmul.f32 %v341, %v506
  %v511 = vmul.f32 %v342, %v507
  %v512 = vmul.f32 %v343, %v508
  %v513 = vmul.f32 %v344, %v509
  %v514 = vsel %vm26, %v510, 0.0
  %v515 = vsel %vm26, %v511, 0.0
  %v516 = vadd.f32 %v514, %v515
  %v517 = vsel %vm26, %v512, 0.0
  %v518 = vadd.f32 %v516, %v517
  %v519 = vsel %vm26, %v513, 0.0
  %v520 = vadd.f32 %v518, %v519
  %v521 = vrot.slane %v520, 4
  %v522 = vadd.f32 %v520, %v521
  %v523 = vrot.slane %v522, 2
  %v524 = vadd.f32 %v522, %v523
  %v525 = vrot.slane %v524, 1
  %v526 = vadd.f32 %v524, %v525
  %v527 = vld [vmem:[%s210] sm:$0xff]
  %v528 = vld [vmem:[%s210 + $0x8] sm:$0xff]
  %v529 = vld [vmem:[%s210 + $0x10] sm:$0xff]
  %v530 = vld [vmem:[%s210 + $0x18] sm:$0xff]
  %v531 = vmul.f32 %v526, %v527
  %v532 = vmul.f32 %v526, %v528
  %v533 = vmul.f32 %v526, %v529
  %v534 = vmul.f32 %v526, %v530
  %v535 = vadd.f32 %v502, %v531
  %v536 = vadd.f32 %v503, %v532
  %v537 = vadd.f32 %v504, %v533
  %v538 = vadd.f32 %v505, %v534
  %v539 = vld [vmem:[%s223] sm:$0xff]
  %v540 = vld [vmem:[%s223 + $0x8] sm:$0xff]
  %v541 = vld [vmem:[%s223 + $0x10] sm:$0xff]
  %v542 = vld [vmem:[%s223 + $0x18] sm:$0xff]
  %v543 = vmul.f32 %v341, %v539
  %v544 = vmul.f32 %v342, %v540
  %v545 = vmul.f32 %v343, %v541
  %v546 = vmul.f32 %v344, %v542
  %v547 = vsel %vm26, %v543, 0.0
  %v548 = vsel %vm26, %v544, 0.0
  %v549 = vadd.f32 %v547, %v548
  %v550 = vsel %vm26, %v545, 0.0
  %v551 = vadd.f32 %v549, %v550
  %v552 = vsel %vm26, %v546, 0.0
  %v553 = vadd.f32 %v551, %v552
  %v554 = vrot.slane %v553, 4
  %v555 = vadd.f32 %v553, %v554
  %v556 = vrot.slane %v555, 2
  %v557 = vadd.f32 %v555, %v556
  %v558 = vrot.slane %v557, 1
  %v559 = vadd.f32 %v557, %v558
  %v560 = vld [vmem:[%s245] sm:$0xff]
  %v561 = vld [vmem:[%s245 + $0x8] sm:$0xff]
  %v562 = vld [vmem:[%s245 + $0x10] sm:$0xff]
  %v563 = vld [vmem:[%s245 + $0x18] sm:$0xff]
  %v564 = vmul.f32 %v559, %v560
  %v565 = vmul.f32 %v559, %v561
  %v566 = vmul.f32 %v559, %v562
  %v567 = vmul.f32 %v559, %v563
  %v568 = vadd.f32 %v535, %v564
  %v569 = vadd.f32 %v536, %v565
  %v570 = vadd.f32 %v537, %v566
  %v571 = vadd.f32 %v538, %v567
  %v572 = vld [vmem:[%s258] sm:$0xff]
  %v573 = vld [vmem:[%s258 + $0x8] sm:$0xff]
  %v574 = vld [vmem:[%s258 + $0x10] sm:$0xff]
  %v575 = vld [vmem:[%s258 + $0x18] sm:$0xff]
  %v576 = vmul.f32 %v341, %v572
  %v577 = vmul.f32 %v342, %v573
  %v578 = vmul.f32 %v343, %v574
  %v579 = vmul.f32 %v344, %v575
  %v580 = vsel %vm26, %v576, 0.0
  %v581 = vsel %vm26, %v577, 0.0
  %v582 = vadd.f32 %v580, %v581
  %v583 = vsel %vm26, %v578, 0.0
  %v584 = vadd.f32 %v582, %v583
  %v585 = vsel %vm26, %v579, 0.0
  %v586 = vadd.f32 %v584, %v585
  %v587 = vrot.slane %v586, 4
  %v588 = vadd.f32 %v586, %v587
  %v589 = vrot.slane %v588, 2
  %v590 = vadd.f32 %v588, %v589
  %v591 = vrot.slane %v590, 1
  %v592 = vadd.f32 %v590, %v591
  %v593 = vld [vmem:[%s280] sm:$0xff]
  %v594 = vld [vmem:[%s280 + $0x8] sm:$0xff]
  %v595 = vld [vmem:[%s280 + $0x10] sm:$0xff]
  %v596 = vld [vmem:[%s280 + $0x18] sm:$0xff]
  %v597 = vmul.f32 %v592, %v593
  %v598 = vmul.f32 %v592, %v594
  %v599 = vmul.f32 %v592, %v595
  %v600 = vmul.f32 %v592, %v596
  %v601 = vadd.f32 %v568, %v597
  %v602 = vadd.f32 %v569, %v598
  %v603 = vadd.f32 %v570, %v599
  %v604 = vadd.f32 %v571, %v600
  %v605 = vsel %vm26, %v601, -inf
  %v606 = vsel %vm26, %v602, -inf
  %v607 = vsel %vm26, %v603, -inf
  %v608 = vsel %vm26, %v604, -inf
  %v609 = vmax.f32 %v605, %v606
  %v610 = vmax.f32 %v607, %v608
  %v611 = vmax.f32 %v609, %v610
  %v612 = vrot.slane %v611, 4
  %v613 = vmax.f32 %v611, %v612
  %v614 = vrot.slane %v613, 2
  %v615 = vmax.f32 %v613, %v614
  %v616 = vrot.slane %v615, 1
  %v617 = vmax.f32 %v615, %v616
  %v618 = vsub.f32 %v601, %v617
  %v619 = vsub.f32 %v602, %v617
  %v620 = vsub.f32 %v603, %v617
  %v621 = vsub.f32 %v604, %v617
  %v622 = vmul.f32 %v618, 1.442695
  %v623 = vpow.pop %v622
  %v624 = vmul.f32 %v619, 1.442695
  %v625 = vpow.pop %v624
  %v626 = vmul.f32 %v620, 1.442695
  %v627 = vpow.pop %v626
  %v628 = vmul.f32 %v621, 1.442695
  %v629 = vpow.pop %v628
  %v630 = vsel %vm26, %v623, 0.0
  %v631 = vsel %vm26, %v625, 0.0
  %v632 = vadd.f32 %v630, %v631
  %v633 = vsel %vm26, %v627, 0.0
  %v634 = vadd.f32 %v632, %v633
  %v635 = vsel %vm26, %v629, 0.0
  %v636 = vadd.f32 %v634, %v635
  %v637 = vrot.slane %v636, 4
  %v638 = vadd.f32 %v636, %v637
  %v639 = vrot.slane %v638, 2
  %v640 = vadd.f32 %v638, %v639
  %v641 = vrot.slane %v640, 1
  %v642 = vadd.f32 %v640, %v641
  %v643 = vrcp.pop %v642
  %v644 = vmul.f32 %v623, %v643
  %v645 = vmul.f32 %v625, %v643
  %v646 = vmul.f32 %v627, %v643
  %v647 = vmul.f32 %v629, %v643
  %s648 = scalar_lea.vmem %s3, 32
  %649 = vst.msk [vmem:[%s648] sm:$0xff] %vm26, %v644
  %650 = vst.msk [vmem:[%s648 + $0x8] sm:$0xff] %vm26, %v645
  %651 = vst.msk [vmem:[%s648 + $0x10] sm:$0xff] %vm26, %v646
  %652 = vst.msk [vmem:[%s648 + $0x18] sm:$0xff] %vm26, %v647
  %s653 = scalar_lea.vmem %s0, 64
  %v654 = vld [vmem:[%s653] sm:$0xff]
  %v655 = vld [vmem:[%s653 + $0x8] sm:$0xff]
  %v656 = vld [vmem:[%s653 + $0x10] sm:$0xff]
  %v657 = vld [vmem:[%s653 + $0x18] sm:$0xff]
  %v658 = vld [vmem:[%s1] sm:$0xff]
  %v659 = vld [vmem:[%s1 + $0x8] sm:$0xff]
  %v660 = vld [vmem:[%s1 + $0x10] sm:$0xff]
  %v661 = vld [vmem:[%s1 + $0x18] sm:$0xff]
  %v662 = vmul.f32 %v654, %v658
  %v663 = vmul.f32 %v655, %v659
  %v664 = vmul.f32 %v656, %v660
  %v665 = vmul.f32 %v657, %v661
  %v666 = vsel %vm26, %v662, 0.0
  %v667 = vsel %vm26, %v663, 0.0
  %v668 = vadd.f32 %v666, %v667
  %v669 = vsel %vm26, %v664, 0.0
  %v670 = vadd.f32 %v668, %v669
  %v671 = vsel %vm26, %v665, 0.0
  %v672 = vadd.f32 %v670, %v671
  %v673 = vrot.slane %v672, 4
  %v674 = vadd.f32 %v672, %v673
  %v675 = vrot.slane %v674, 2
  %v676 = vadd.f32 %v674, %v675
  %v677 = vrot.slane %v676, 1
  %v678 = vadd.f32 %v676, %v677
  %v679 = vld [vmem:[%s2] sm:$0xff]
  %v680 = vld [vmem:[%s2 + $0x8] sm:$0xff]
  %v681 = vld [vmem:[%s2 + $0x10] sm:$0xff]
  %v682 = vld [vmem:[%s2 + $0x18] sm:$0xff]
  %v683 = vmul.f32 %v678, %v679
  %v684 = vmul.f32 %v678, %v680
  %v685 = vmul.f32 %v678, %v681
  %v686 = vmul.f32 %v678, %v682
  %v687 = vld [vmem:[%s48] sm:$0xff]
  %v688 = vld [vmem:[%s48 + $0x8] sm:$0xff]
  %v689 = vld [vmem:[%s48 + $0x10] sm:$0xff]
  %v690 = vld [vmem:[%s48 + $0x18] sm:$0xff]
  %v691 = vmul.f32 %v654, %v687
  %v692 = vmul.f32 %v655, %v688
  %v693 = vmul.f32 %v656, %v689
  %v694 = vmul.f32 %v657, %v690
  %v695 = vsel %vm26, %v691, 0.0
  %v696 = vsel %vm26, %v692, 0.0
  %v697 = vadd.f32 %v695, %v696
  %v698 = vsel %vm26, %v693, 0.0
  %v699 = vadd.f32 %v697, %v698
  %v700 = vsel %vm26, %v694, 0.0
  %v701 = vadd.f32 %v699, %v700
  %v702 = vrot.slane %v701, 4
  %v703 = vadd.f32 %v701, %v702
  %v704 = vrot.slane %v703, 2
  %v705 = vadd.f32 %v703, %v704
  %v706 = vrot.slane %v705, 1
  %v707 = vadd.f32 %v705, %v706
  %v708 = vld [vmem:[%s70] sm:$0xff]
  %v709 = vld [vmem:[%s70 + $0x8] sm:$0xff]
  %v710 = vld [vmem:[%s70 + $0x10] sm:$0xff]
  %v711 = vld [vmem:[%s70 + $0x18] sm:$0xff]
  %v712 = vmul.f32 %v707, %v708
  %v713 = vmul.f32 %v707, %v709
  %v714 = vmul.f32 %v707, %v710
  %v715 = vmul.f32 %v707, %v711
  %v716 = vadd.f32 %v683, %v712
  %v717 = vadd.f32 %v684, %v713
  %v718 = vadd.f32 %v685, %v714
  %v719 = vadd.f32 %v686, %v715
  %v720 = vld [vmem:[%s83] sm:$0xff]
  %v721 = vld [vmem:[%s83 + $0x8] sm:$0xff]
  %v722 = vld [vmem:[%s83 + $0x10] sm:$0xff]
  %v723 = vld [vmem:[%s83 + $0x18] sm:$0xff]
  %v724 = vmul.f32 %v654, %v720
  %v725 = vmul.f32 %v655, %v721
  %v726 = vmul.f32 %v656, %v722
  %v727 = vmul.f32 %v657, %v723
  %v728 = vsel %vm26, %v724, 0.0
  %v729 = vsel %vm26, %v725, 0.0
  %v730 = vadd.f32 %v728, %v729
  %v731 = vsel %vm26, %v726, 0.0
  %v732 = vadd.f32 %v730, %v731
  %v733 = vsel %vm26, %v727, 0.0
  %v734 = vadd.f32 %v732, %v733
  %v735 = vrot.slane %v734, 4
  %v736 = vadd.f32 %v734, %v735
  %v737 = vrot.slane %v736, 2
  %v738 = vadd.f32 %v736, %v737
  %v739 = vrot.slane %v738, 1
  %v740 = vadd.f32 %v738, %v739
  %v741 = vld [vmem:[%s105] sm:$0xff]
  %v742 = vld [vmem:[%s105 + $0x8] sm:$0xff]
  %v743 = vld [vmem:[%s105 + $0x10] sm:$0xff]
  %v744 = vld [vmem:[%s105 + $0x18] sm:$0xff]
  %v745 = vmul.f32 %v740, %v741
  %v746 = vmul.f32 %v740, %v742
  %v747 = vmul.f32 %v740, %v743
  %v748 = vmul.f32 %v740, %v744
  %v749 = vadd.f32 %v716, %v745
  %v750 = vadd.f32 %v717, %v746
  %v751 = vadd.f32 %v718, %v747
  %v752 = vadd.f32 %v719, %v748
  %v753 = vld [vmem:[%s118] sm:$0xff]
  %v754 = vld [vmem:[%s118 + $0x8] sm:$0xff]
  %v755 = vld [vmem:[%s118 + $0x10] sm:$0xff]
  %v756 = vld [vmem:[%s118 + $0x18] sm:$0xff]
  %v757 = vmul.f32 %v654, %v753
  %v758 = vmul.f32 %v655, %v754
  %v759 = vmul.f32 %v656, %v755
  %v760 = vmul.f32 %v657, %v756
  %v761 = vsel %vm26, %v757, 0.0
  %v762 = vsel %vm26, %v758, 0.0
  %v763 = vadd.f32 %v761, %v762
  %v764 = vsel %vm26, %v759, 0.0
  %v765 = vadd.f32 %v763, %v764
  %v766 = vsel %vm26, %v760, 0.0
  %v767 = vadd.f32 %v765, %v766
  %v768 = vrot.slane %v767, 4
  %v769 = vadd.f32 %v767, %v768
  %v770 = vrot.slane %v769, 2
  %v771 = vadd.f32 %v769, %v770
  %v772 = vrot.slane %v771, 1
  %v773 = vadd.f32 %v771, %v772
  %v774 = vld [vmem:[%s140] sm:$0xff]
  %v775 = vld [vmem:[%s140 + $0x8] sm:$0xff]
  %v776 = vld [vmem:[%s140 + $0x10] sm:$0xff]
  %v777 = vld [vmem:[%s140 + $0x18] sm:$0xff]
  %v778 = vmul.f32 %v773, %v774
  %v779 = vmul.f32 %v773, %v775
  %v780 = vmul.f32 %v773, %v776
  %v781 = vmul.f32 %v773, %v777
  %v782 = vadd.f32 %v749, %v778
  %v783 = vadd.f32 %v750, %v779
  %v784 = vadd.f32 %v751, %v780
  %v785 = vadd.f32 %v752, %v781
  %v786 = vld [vmem:[%s153] sm:$0xff]
  %v787 = vld [vmem:[%s153 + $0x8] sm:$0xff]
  %v788 = vld [vmem:[%s153 + $0x10] sm:$0xff]
  %v789 = vld [vmem:[%s153 + $0x18] sm:$0xff]
  %v790 = vmul.f32 %v654, %v786
  %v791 = vmul.f32 %v655, %v787
  %v792 = vmul.f32 %v656, %v788
  %v793 = vmul.f32 %v657, %v789
  %v794 = vsel %vm26, %v790, 0.0
  %v795 = vsel %vm26, %v791, 0.0
  %v796 = vadd.f32 %v794, %v795
  %v797 = vsel %vm26, %v792, 0.0
  %v798 = vadd.f32 %v796, %v797
  %v799 = vsel %vm26, %v793, 0.0
  %v800 = vadd.f32 %v798, %v799
  %v801 = vrot.slane %v800, 4
  %v802 = vadd.f32 %v800, %v801
  %v803 = vrot.slane %v802, 2
  %v804 = vadd.f32 %v802, %v803
  %v805 = vrot.slane %v804, 1
  %v806 = vadd.f32 %v804, %v805
  %v807 = vld [vmem:[%s175] sm:$0xff]
  %v808 = vld [vmem:[%s175 + $0x8] sm:$0xff]
  %v809 = vld [vmem:[%s175 + $0x10] sm:$0xff]
  %v810 = vld [vmem:[%s175 + $0x18] sm:$0xff]
  %v811 = vmul.f32 %v806, %v807
  %v812 = vmul.f32 %v806, %v808
  %v813 = vmul.f32 %v806, %v809
  %v814 = vmul.f32 %v806, %v810
  %v815 = vadd.f32 %v782, %v811
  %v816 = vadd.f32 %v783, %v812
  %v817 = vadd.f32 %v784, %v813
  %v818 = vadd.f32 %v785, %v814
  %v819 = vld [vmem:[%s188] sm:$0xff]
  %v820 = vld [vmem:[%s188 + $0x8] sm:$0xff]
  %v821 = vld [vmem:[%s188 + $0x10] sm:$0xff]
  %v822 = vld [vmem:[%s188 + $0x18] sm:$0xff]
  %v823 = vmul.f32 %v654, %v819
  %v824 = vmul.f32 %v655, %v820
  %v825 = vmul.f32 %v656, %v821
  %v826 = vmul.f32 %v657, %v822
  %v827 = vsel %vm26, %v823, 0.0
  %v828 = vsel %vm26, %v824, 0.0
  %v829 = vadd.f32 %v827, %v828
  %v830 = vsel %vm26, %v825, 0.0
  %v831 = vadd.f32 %v829, %v830
  %v832 = vsel %vm26, %v826, 0.0
  %v833 = vadd.f32 %v831, %v832
  %v834 = vrot.slane %v833, 4
  %v835 = vadd.f32 %v833, %v834
  %v836 = vrot.slane %v835, 2
  %v837 = vadd.f32 %v835, %v836
  %v838 = vrot.slane %v837, 1
  %v839 = vadd.f32 %v837, %v838
  %v840 = vld [vmem:[%s210] sm:$0xff]
  %v841 = vld [vmem:[%s210 + $0x8] sm:$0xff]
  %v842 = vld [vmem:[%s210 + $0x10] sm:$0xff]
  %v843 = vld [vmem:[%s210 + $0x18] sm:$0xff]
  %v844 = vmul.f32 %v839, %v840
  %v845 = vmul.f32 %v839, %v841
  %v846 = vmul.f32 %v839, %v842
  %v847 = vmul.f32 %v839, %v843
  %v848 = vadd.f32 %v815, %v844
  %v849 = vadd.f32 %v816, %v845
  %v850 = vadd.f32 %v817, %v846
  %v851 = vadd.f32 %v818, %v847
  %v852 = vld [vmem:[%s223] sm:$0xff]
  %v853 = vld [vmem:[%s223 + $0x8] sm:$0xff]
  %v854 = vld [vmem:[%s223 + $0x10] sm:$0xff]
  %v855 = vld [vmem:[%s223 + $0x18] sm:$0xff]
  %v856 = vmul.f32 %v654, %v852
  %v857 = vmul.f32 %v655, %v853
  %v858 = vmul.f32 %v656, %v854
  %v859 = vmul.f32 %v657, %v855
  %v860 = vsel %vm26, %v856, 0.0
  %v861 = vsel %vm26, %v857, 0.0
  %v862 = vadd.f32 %v860, %v861
  %v863 = vsel %vm26, %v858, 0.0
  %v864 = vadd.f32 %v862, %v863
  %v865 = vsel %vm26, %v859, 0.0
  %v866 = vadd.f32 %v864, %v865
  %v867 = vrot.slane %v866, 4
  %v868 = vadd.f32 %v866, %v867
  %v869 = vrot.slane %v868, 2
  %v870 = vadd.f32 %v868, %v869
  %v871 = vrot.slane %v870, 1
  %v872 = vadd.f32 %v870, %v871
  %v873 = vld [vmem:[%s245] sm:$0xff]
  %v874 = vld [vmem:[%s245 + $0x8] sm:$0xff]
  %v875 = vld [vmem:[%s245 + $0x10] sm:$0xff]
  %v876 = vld [vmem:[%s245 + $0x18] sm:$0xff]
  %v877 = vmul.f32 %v872, %v873
  %v878 = vmul.f32 %v872, %v874
  %v879 = vmul.f32 %v872, %v875
  %v880 = vmul.f32 %v872, %v876
  %v881 = vadd.f32 %v848, %v877
  %v882 = vadd.f32 %v849, %v878
  %v883 = vadd.f32 %v850, %v879
  %v884 = vadd.f32 %v851, %v880
  %v885 = vld [vmem:[%s258] sm:$0xff]
  %v886 = vld [vmem:[%s258 + $0x8] sm:$0xff]
  %v887 = vld [vmem:[%s258 + $0x10] sm:$0xff]
  %v888 = vld [vmem:[%s258 + $0x18] sm:$0xff]
  %v889 = vmul.f32 %v654, %v885
  %v890 = vmul.f32 %v655, %v886
  %v891 = vmul.f32 %v656, %v887
  %v892 = vmul.f32 %v657, %v888
  %v893 = vsel %vm26, %v889, 0.0
  %v894 = vsel %vm26, %v890, 0.0
  %v895 = vadd.f32 %v893, %v894
  %v896 = vsel %vm26, %v891, 0.0
  %v897 = vadd.f32 %v895, %v896
  %v898 = vsel %vm26, %v892, 0.0
  %v899 = vadd.f32 %v897, %v898
  %v900 = vrot.slane %v899, 4
  %v901 = vadd.f32 %v899, %v900
  %v902 = vrot.slane %v901, 2
  %v903 = vadd.f32 %v901, %v902
  %v904 = vrot.slane %v903, 1
  %v905 = vadd.f32 %v903, %v904
  %v906 = vld [vmem:[%s280] sm:$0xff]
  %v907 = vld [vmem:[%s280 + $0x8] sm:$0xff]
  %v908 = vld [vmem:[%s280 + $0x10] sm:$0xff]
  %v909 = vld [vmem:[%s280 + $0x18] sm:$0xff]
  %v910 = vmul.f32 %v905, %v906
  %v911 = vmul.f32 %v905, %v907
  %v912 = vmul.f32 %v905, %v908
  %v913 = vmul.f32 %v905, %v909
  %v914 = vadd.f32 %v881, %v910
  %v915 = vadd.f32 %v882, %v911
  %v916 = vadd.f32 %v883, %v912
  %v917 = vadd.f32 %v884, %v913
  %v918 = vsel %vm26, %v914, -inf
  %v919 = vsel %vm26, %v915, -inf
  %v920 = vsel %vm26, %v916, -inf
  %v921 = vsel %vm26, %v917, -inf
  %v922 = vmax.f32 %v918, %v919
  %v923 = vmax.f32 %v920, %v921
  %v924 = vmax.f32 %v922, %v923
  %v925 = vrot.slane %v924, 4
  %v926 = vmax.f32 %v924, %v925
  %v927 = vrot.slane %v926, 2
  %v928 = vmax.f32 %v926, %v927
  %v929 = vrot.slane %v928, 1
  %v930 = vmax.f32 %v928, %v929
  %v931 = vsub.f32 %v914, %v930
  %v932 = vsub.f32 %v915, %v930
  %v933 = vsub.f32 %v916, %v930
  %v934 = vsub.f32 %v917, %v930
  %v935 = vmul.f32 %v931, 1.442695
  %v936 = vpow.pop %v935
  %v937 = vmul.f32 %v932, 1.442695
  %v938 = vpow.pop %v937
  %v939 = vmul.f32 %v933, 1.442695
  %v940 = vpow.pop %v939
  %v941 = vmul.f32 %v934, 1.442695
  %v942 = vpow.pop %v941
  %v943 = vsel %vm26, %v936, 0.0
  %v944 = vsel %vm26, %v938, 0.0
  %v945 = vadd.f32 %v943, %v944
  %v946 = vsel %vm26, %v940, 0.0
  %v947 = vadd.f32 %v945, %v946
  %v948 = vsel %vm26, %v942, 0.0
  %v949 = vadd.f32 %v947, %v948
  %v950 = vrot.slane %v949, 4
  %v951 = vadd.f32 %v949, %v950
  %v952 = vrot.slane %v951, 2
  %v953 = vadd.f32 %v951, %v952
  %v954 = vrot.slane %v953, 1
  %v955 = vadd.f32 %v953, %v954
  %v956 = vrcp.pop %v955
  %v957 = vmul.f32 %v936, %v956
  %v958 = vmul.f32 %v938, %v956
  %v959 = vmul.f32 %v940, %v956
  %v960 = vmul.f32 %v942, %v956
  %s961 = scalar_lea.vmem %s3, 64
  %962 = vst.msk [vmem:[%s961] sm:$0xff] %vm26, %v957
  %963 = vst.msk [vmem:[%s961 + $0x8] sm:$0xff] %vm26, %v958
  %964 = vst.msk [vmem:[%s961 + $0x10] sm:$0xff] %vm26, %v959
  %965 = vst.msk [vmem:[%s961 + $0x18] sm:$0xff] %vm26, %v960
  %s966 = scalar_lea.vmem %s0, 96
  %v967 = vld [vmem:[%s966] sm:$0xff]
  %v968 = vld [vmem:[%s966 + $0x8] sm:$0xff]
  %v969 = vld [vmem:[%s966 + $0x10] sm:$0xff]
  %v970 = vld [vmem:[%s966 + $0x18] sm:$0xff]
  %v971 = vld [vmem:[%s1] sm:$0xff]
  %v972 = vld [vmem:[%s1 + $0x8] sm:$0xff]
  %v973 = vld [vmem:[%s1 + $0x10] sm:$0xff]
  %v974 = vld [vmem:[%s1 + $0x18] sm:$0xff]
  %v975 = vmul.f32 %v967, %v971
  %v976 = vmul.f32 %v968, %v972
  %v977 = vmul.f32 %v969, %v973
  %v978 = vmul.f32 %v970, %v974
  %v979 = vsel %vm26, %v975, 0.0
  %v980 = vsel %vm26, %v976, 0.0
  %v981 = vadd.f32 %v979, %v980
  %v982 = vsel %vm26, %v977, 0.0
  %v983 = vadd.f32 %v981, %v982
  %v984 = vsel %vm26, %v978, 0.0
  %v985 = vadd.f32 %v983, %v984
  %v986 = vrot.slane %v985, 4
  %v987 = vadd.f32 %v985, %v986
  %v988 = vrot.slane %v987, 2
  %v989 = vadd.f32 %v987, %v988
  %v990 = vrot.slane %v989, 1
  %v991 = vadd.f32 %v989, %v990
  %v992 = vld [vmem:[%s2] sm:$0xff]
  %v993 = vld [vmem:[%s2 + $0x8] sm:$0xff]
  %v994 = vld [vmem:[%s2 + $0x10] sm:$0xff]
  %v995 = vld [vmem:[%s2 + $0x18] sm:$0xff]
  %v996 = vmul.f32 %v991, %v992
  %v997 = vmul.f32 %v991, %v993
  %v998 = vmul.f32 %v991, %v994
  %v999 = vmul.f32 %v991, %v995
  %v1000 = vld [vmem:[%s48] sm:$0xff]
  %v1001 = vld [vmem:[%s48 + $0x8] sm:$0xff]
  %v1002 = vld [vmem:[%s48 + $0x10] sm:$0xff]
  %v1003 = vld [vmem:[%s48 + $0x18] sm:$0xff]
  %v1004 = vmul.f32 %v967, %v1000
  %v1005 = vmul.f32 %v968, %v1001
  %v1006 = vmul.f32 %v969, %v1002
  %v1007 = vmul.f32 %v970, %v1003
  %v1008 = vsel %vm26, %v1004, 0.0
  %v1009 = vsel %vm26, %v1005, 0.0
  %v1010 = vadd.f32 %v1008, %v1009
  %v1011 = vsel %vm26, %v1006, 0.0
  %v1012 = vadd.f32 %v1010, %v1011
  %v1013 = vsel %vm26, %v1007, 0.0
  %v1014 = vadd.f32 %v1012, %v1013
  %v1015 = vrot.slane %v1014, 4
  %v1016 = vadd.f32 %v1014, %v1015
  %v1017 = vrot.slane %v1016, 2
  %v1018 = vadd.f32 %v1016, %v1017
  %v1019 = vrot.slane %v1018, 1
  %v1020 = vadd.f32 %v1018, %v1019
  %v1021 = vld [vmem:[%s70] sm:$0xff]
  %v1022 = vld [vmem:[%s70 + $0x8] sm:$0xff]
  %v1023 = vld [vmem:[%s70 + $0x10] sm:$0xff]
  %v1024 = vld [vmem:[%s70 + $0x18] sm:$0xff]
  %v1025 = vmul.f32 %v1020, %v1021
  %v1026 = vmul.f32 %v1020, %v1022
  %v1027 = vmul.f32 %v1020, %v1023
  %v1028 = vmul.f32 %v1020, %v1024
  %v1029 = vadd.f32 %v996, %v1025
  %v1030 = vadd.f32 %v997, %v1026
  %v1031 = vadd.f32 %v998, %v1027
  %v1032 = vadd.f32 %v999, %v1028
  %v1033 = vld [vmem:[%s83] sm:$0xff]
  %v1034 = vld [vmem:[%s83 + $0x8] sm:$0xff]
  %v1035 = vld [vmem:[%s83 + $0x10] sm:$0xff]
  %v1036 = vld [vmem:[%s83 + $0x18] sm:$0xff]
  %v1037 = vmul.f32 %v967, %v1033
  %v1038 = vmul.f32 %v968, %v1034
  %v1039 = vmul.f32 %v969, %v1035
  %v1040 = vmul.f32 %v970, %v1036
  %v1041 = vsel %vm26, %v1037, 0.0
  %v1042 = vsel %vm26, %v1038, 0.0
  %v1043 = vadd.f32 %v1041, %v1042
  %v1044 = vsel %vm26, %v1039, 0.0
  %v1045 = vadd.f32 %v1043, %v1044
  %v1046 = vsel %vm26, %v1040, 0.0
  %v1047 = vadd.f32 %v1045, %v1046
  %v1048 = vrot.slane %v1047, 4
  %v1049 = vadd.f32 %v1047, %v1048
  %v1050 = vrot.slane %v1049, 2
  %v1051 = vadd.f32 %v1049, %v1050
  %v1052 = vrot.slane %v1051, 1
  %v1053 = vadd.f32 %v1051, %v1052
  %v1054 = vld [vmem:[%s105] sm:$0xff]
  %v1055 = vld [vmem:[%s105 + $0x8] sm:$0xff]
  %v1056 = vld [vmem:[%s105 + $0x10] sm:$0xff]
  %v1057 = vld [vmem:[%s105 + $0x18] sm:$0xff]
  %v1058 = vmul.f32 %v1053, %v1054
  %v1059 = vmul.f32 %v1053, %v1055
  %v1060 = vmul.f32 %v1053, %v1056
  %v1061 = vmul.f32 %v1053, %v1057
  %v1062 = vadd.f32 %v1029, %v1058
  %v1063 = vadd.f32 %v1030, %v1059
  %v1064 = vadd.f32 %v1031, %v1060
  %v1065 = vadd.f32 %v1032, %v1061
  %v1066 = vld [vmem:[%s118] sm:$0xff]
  %v1067 = vld [vmem:[%s118 + $0x8] sm:$0xff]
  %v1068 = vld [vmem:[%s118 + $0x10] sm:$0xff]
  %v1069 = vld [vmem:[%s118 + $0x18] sm:$0xff]
  %v1070 = vmul.f32 %v967, %v1066
  %v1071 = vmul.f32 %v968, %v1067
  %v1072 = vmul.f32 %v969, %v1068
  %v1073 = vmul.f32 %v970, %v1069
  %v1074 = vsel %vm26, %v1070, 0.0
  %v1075 = vsel %vm26, %v1071, 0.0
  %v1076 = vadd.f32 %v1074, %v1075
  %v1077 = vsel %vm26, %v1072, 0.0
  %v1078 = vadd.f32 %v1076, %v1077
  %v1079 = vsel %vm26, %v1073, 0.0
  %v1080 = vadd.f32 %v1078, %v1079
  %v1081 = vrot.slane %v1080, 4
  %v1082 = vadd.f32 %v1080, %v1081
  %v1083 = vrot.slane %v1082, 2
  %v1084 = vadd.f32 %v1082, %v1083
  %v1085 = vrot.slane %v1084, 1
  %v1086 = vadd.f32 %v1084, %v1085
  %v1087 = vld [vmem:[%s140] sm:$0xff]
  %v1088 = vld [vmem:[%s140 + $0x8] sm:$0xff]
  %v1089 = vld [vmem:[%s140 + $0x10] sm:$0xff]
  %v1090 = vld [vmem:[%s140 + $0x18] sm:$0xff]
  %v1091 = vmul.f32 %v1086, %v1087
  %v1092 = vmul.f32 %v1086, %v1088
  %v1093 = vmul.f32 %v1086, %v1089
  %v1094 = vmul.f32 %v1086, %v1090
  %v1095 = vadd.f32 %v1062, %v1091
  %v1096 = vadd.f32 %v1063, %v1092
  %v1097 = vadd.f32 %v1064, %v1093
  %v1098 = vadd.f32 %v1065, %v1094
  %v1099 = vld [vmem:[%s153] sm:$0xff]
  %v1100 = vld [vmem:[%s153 + $0x8] sm:$0xff]
  %v1101 = vld [vmem:[%s153 + $0x10] sm:$0xff]
  %v1102 = vld [vmem:[%s153 + $0x18] sm:$0xff]
  %v1103 = vmul.f32 %v967, %v1099
  %v1104 = vmul.f32 %v968, %v1100
  %v1105 = vmul.f32 %v969, %v1101
  %v1106 = vmul.f32 %v970, %v1102
  %v1107 = vsel %vm26, %v1103, 0.0
  %v1108 = vsel %vm26, %v1104, 0.0
  %v1109 = vadd.f32 %v1107, %v1108
  %v1110 = vsel %vm26, %v1105, 0.0
  %v1111 = vadd.f32 %v1109, %v1110
  %v1112 = vsel %vm26, %v1106, 0.0
  %v1113 = vadd.f32 %v1111, %v1112
  %v1114 = vrot.slane %v1113, 4
  %v1115 = vadd.f32 %v1113, %v1114
  %v1116 = vrot.slane %v1115, 2
  %v1117 = vadd.f32 %v1115, %v1116
  %v1118 = vrot.slane %v1117, 1
  %v1119 = vadd.f32 %v1117, %v1118
  %v1120 = vld [vmem:[%s175] sm:$0xff]
  %v1121 = vld [vmem:[%s175 + $0x8] sm:$0xff]
  %v1122 = vld [vmem:[%s175 + $0x10] sm:$0xff]
  %v1123 = vld [vmem:[%s175 + $0x18] sm:$0xff]
  %v1124 = vmul.f32 %v1119, %v1120
  %v1125 = vmul.f32 %v1119, %v1121
  %v1126 = vmul.f32 %v1119, %v1122
  %v1127 = vmul.f32 %v1119, %v1123
  %v1128 = vadd.f32 %v1095, %v1124
  %v1129 = vadd.f32 %v1096, %v1125
  %v1130 = vadd.f32 %v1097, %v1126
  %v1131 = vadd.f32 %v1098, %v1127
  %v1132 = vld [vmem:[%s188] sm:$0xff]
  %v1133 = vld [vmem:[%s188 + $0x8] sm:$0xff]
  %v1134 = vld [vmem:[%s188 + $0x10] sm:$0xff]
  %v1135 = vld [vmem:[%s188 + $0x18] sm:$0xff]
  %v1136 = vmul.f32 %v967, %v1132
  %v1137 = vmul.f32 %v968, %v1133
  %v1138 = vmul.f32 %v969, %v1134
  %v1139 = vmul.f32 %v970, %v1135
  %v1140 = vsel %vm26, %v1136, 0.0
  %v1141 = vsel %vm26, %v1137, 0.0
  %v1142 = vadd.f32 %v1140, %v1141
  %v1143 = vsel %vm26, %v1138, 0.0
  %v1144 = vadd.f32 %v1142, %v1143
  %v1145 = vsel %vm26, %v1139, 0.0
  %v1146 = vadd.f32 %v1144, %v1145
  %v1147 = vrot.slane %v1146, 4
  %v1148 = vadd.f32 %v1146, %v1147
  %v1149 = vrot.slane %v1148, 2
  %v1150 = vadd.f32 %v1148, %v1149
  %v1151 = vrot.slane %v1150, 1
  %v1152 = vadd.f32 %v1150, %v1151
  %v1153 = vld [vmem:[%s210] sm:$0xff]
  %v1154 = vld [vmem:[%s210 + $0x8] sm:$0xff]
  %v1155 = vld [vmem:[%s210 + $0x10] sm:$0xff]
  %v1156 = vld [vmem:[%s210 + $0x18] sm:$0xff]
  %v1157 = vmul.f32 %v1152, %v1153
  %v1158 = vmul.f32 %v1152, %v1154
  %v1159 = vmul.f32 %v1152, %v1155
  %v1160 = vmul.f32 %v1152, %v1156
  %v1161 = vadd.f32 %v1128, %v1157
  %v1162 = vadd.f32 %v1129, %v1158
  %v1163 = vadd.f32 %v1130, %v1159
  %v1164 = vadd.f32 %v1131, %v1160
  %v1165 = vld [vmem:[%s223] sm:$0xff]
  %v1166 = vld [vmem:[%s223 + $0x8] sm:$0xff]
  %v1167 = vld [vmem:[%s223 + $0x10] sm:$0xff]
  %v1168 = vld [vmem:[%s223 + $0x18] sm:$0xff]
  %v1169 = vmul.f32 %v967, %v1165
  %v1170 = vmul.f32 %v968, %v1166
  %v1171 = vmul.f32 %v969, %v1167
  %v1172 = vmul.f32 %v970, %v1168
  %v1173 = vsel %vm26, %v1169, 0.0
  %v1174 = vsel %vm26, %v1170, 0.0
  %v1175 = vadd.f32 %v1173, %v1174
  %v1176 = vsel %vm26, %v1171, 0.0
  %v1177 = vadd.f32 %v1175, %v1176
  %v1178 = vsel %vm26, %v1172, 0.0
  %v1179 = vadd.f32 %v1177, %v1178
  %v1180 = vrot.slane %v1179, 4
  %v1181 = vadd.f32 %v1179, %v1180
  %v1182 = vrot.slane %v1181, 2
  %v1183 = vadd.f32 %v1181, %v1182
  %v1184 = vrot.slane %v1183, 1
  %v1185 = vadd.f32 %v1183, %v1184
  %v1186 = vld [vmem:[%s245] sm:$0xff]
  %v1187 = vld [vmem:[%s245 + $0x8] sm:$0xff]
  %v1188 = vld [vmem:[%s245 + $0x10] sm:$0xff]
  %v1189 = vld [vmem:[%s245 + $0x18] sm:$0xff]
  %v1190 = vmul.f32 %v1185, %v1186
  %v1191 = vmul.f32 %v1185, %v1187
  %v1192 = vmul.f32 %v1185, %v1188
  %v1193 = vmul.f32 %v1185, %v1189
  %v1194 = vadd.f32 %v1161, %v1190
  %v1195 = vadd.f32 %v1162, %v1191
  %v1196 = vadd.f32 %v1163, %v1192
  %v1197 = vadd.f32 %v1164, %v1193
  %v1198 = vld [vmem:[%s258] sm:$0xff]
  %v1199 = vld [vmem:[%s258 + $0x8] sm:$0xff]
  %v1200 = vld [vmem:[%s258 + $0x10] sm:$0xff]
  %v1201 = vld [vmem:[%s258 + $0x18] sm:$0xff]
  %v1202 = vmul.f32 %v967, %v1198
  %v1203 = vmul.f32 %v968, %v1199
  %v1204 = vmul.f32 %v969, %v1200
  %v1205 = vmul.f32 %v970, %v1201
  %v1206 = vsel %vm26, %v1202, 0.0
  %v1207 = vsel %vm26, %v1203, 0.0
  %v1208 = vadd.f32 %v1206, %v1207
  %v1209 = vsel %vm26, %v1204, 0.0
  %v1210 = vadd.f32 %v1208, %v1209
  %v1211 = vsel %vm26, %v1205, 0.0
  %v1212 = vadd.f32 %v1210, %v1211
  %v1213 = vrot.slane %v1212, 4
  %v1214 = vadd.f32 %v1212, %v1213
  %v1215 = vrot.slane %v1214, 2
  %v1216 = vadd.f32 %v1214, %v1215
  %v1217 = vrot.slane %v1216, 1
  %v1218 = vadd.f32 %v1216, %v1217
  %v1219 = vld [vmem:[%s280] sm:$0xff]
  %v1220 = vld [vmem:[%s280 + $0x8] sm:$0xff]
  %v1221 = vld [vmem:[%s280 + $0x10] sm:$0xff]
  %v1222 = vld [vmem:[%s280 + $0x18] sm:$0xff]
  %v1223 = vmul.f32 %v1218, %v1219
  %v1224 = vmul.f32 %v1218, %v1220
  %v1225 = vmul.f32 %v1218, %v1221
  %v1226 = vmul.f32 %v1218, %v1222
  %v1227 = vadd.f32 %v1194, %v1223
  %v1228 = vadd.f32 %v1195, %v1224
  %v1229 = vadd.f32 %v1196, %v1225
  %v1230 = vadd.f32 %v1197, %v1226
  %v1231 = vsel %vm26, %v1227, -inf
  %v1232 = vsel %vm26, %v1228, -inf
  %v1233 = vsel %vm26, %v1229, -inf
  %v1234 = vsel %vm26, %v1230, -inf
  %v1235 = vmax.f32 %v1231, %v1232
  %v1236 = vmax.f32 %v1233, %v1234
  %v1237 = vmax.f32 %v1235, %v1236
  %v1238 = vrot.slane %v1237, 4
  %v1239 = vmax.f32 %v1237, %v1238
  %v1240 = vrot.slane %v1239, 2
  %v1241 = vmax.f32 %v1239, %v1240
  %v1242 = vrot.slane %v1241, 1
  %v1243 = vmax.f32 %v1241, %v1242
  %v1244 = vsub.f32 %v1227, %v1243
  %v1245 = vsub.f32 %v1228, %v1243
  %v1246 = vsub.f32 %v1229, %v1243
  %v1247 = vsub.f32 %v1230, %v1243
  %v1248 = vmul.f32 %v1244, 1.442695
  %v1249 = vpow.pop %v1248
  %v1250 = vmul.f32 %v1245, 1.442695
  %v1251 = vpow.pop %v1250
  %v1252 = vmul.f32 %v1246, 1.442695
  %v1253 = vpow.pop %v1252
  %v1254 = vmul.f32 %v1247, 1.442695
  %v1255 = vpow.pop %v1254
  %v1256 = vsel %vm26, %v1249, 0.0
  %v1257 = vsel %vm26, %v1251, 0.0
  %v1258 = vadd.f32 %v1256, %v1257
  %v1259 = vsel %vm26, %v1253, 0.0
  %v1260 = vadd.f32 %v1258, %v1259
  %v1261 = vsel %vm26, %v1255, 0.0
  %v1262 = vadd.f32 %v1260, %v1261
  %v1263 = vrot.slane %v1262, 4
  %v1264 = vadd.f32 %v1262, %v1263
  %v1265 = vrot.slane %v1264, 2
  %v1266 = vadd.f32 %v1264, %v1265
  %v1267 = vrot.slane %v1266, 1
  %v1268 = vadd.f32 %v1266, %v1267
  %v1269 = vrcp.pop %v1268
  %v1270 = vmul.f32 %v1249, %v1269
  %v1271 = vmul.f32 %v1251, %v1269
  %v1272 = vmul.f32 %v1253, %v1269
  %v1273 = vmul.f32 %v1255, %v1269
  %s1274 = scalar_lea.vmem %s3, 96
  %1275 = vst.msk [vmem:[%s1274] sm:$0xff] %vm26, %v1270
  %1276 = vst.msk [vmem:[%s1274 + $0x8] sm:$0xff] %vm26, %v1271
  %1277 = vst.msk [vmem:[%s1274 + $0x10] sm:$0xff] %vm26, %v1272
  %1278 = vst.msk [vmem:[%s1274 + $0x18] sm:$0xff] %vm26, %v1273
  %s1279 = scalar_lea.vmem %s0, 128
  %v1280 = vld [vmem:[%s1279] sm:$0xff]
  %v1281 = vld [vmem:[%s1279 + $0x8] sm:$0xff]
  %v1282 = vld [vmem:[%s1279 + $0x10] sm:$0xff]
  %v1283 = vld [vmem:[%s1279 + $0x18] sm:$0xff]
  %v1284 = vld [vmem:[%s1] sm:$0xff]
  %v1285 = vld [vmem:[%s1 + $0x8] sm:$0xff]
  %v1286 = vld [vmem:[%s1 + $0x10] sm:$0xff]
  %v1287 = vld [vmem:[%s1 + $0x18] sm:$0xff]
  %v1288 = vmul.f32 %v1280, %v1284
  %v1289 = vmul.f32 %v1281, %v1285
  %v1290 = vmul.f32 %v1282, %v1286
  %v1291 = vmul.f32 %v1283, %v1287
  %v1292 = vsel %vm26, %v1288, 0.0
  %v1293 = vsel %vm26, %v1289, 0.0
  %v1294 = vadd.f32 %v1292, %v1293
  %v1295 = vsel %vm26, %v1290, 0.0
  %v1296 = vadd.f32 %v1294, %v1295
  %v1297 = vsel %vm26, %v1291, 0.0
  %v1298 = vadd.f32 %v1296, %v1297
  %v1299 = vrot.slane %v1298, 4
  %v1300 = vadd.f32 %v1298, %v1299
  %v1301 = vrot.slane %v1300, 2
  %v1302 = vadd.f32 %v1300, %v1301
  %v1303 = vrot.slane %v1302, 1
  %v1304 = vadd.f32 %v1302, %v1303
  %v1305 = vld [vmem:[%s2] sm:$0xff]
  %v1306 = vld [vmem:[%s2 + $0x8] sm:$0xff]
  %v1307 = vld [vmem:[%s2 + $0x10] sm:$0xff]
  %v1308 = vld [vmem:[%s2 + $0x18] sm:$0xff]
  %v1309 = vmul.f32 %v1304, %v1305
  %v1310 = vmul.f32 %v1304, %v1306
  %v1311 = vmul.f32 %v1304, %v1307
  %v1312 = vmul.f32 %v1304, %v1308
  %v1313 = vld [vmem:[%s48] sm:$0xff]
  %v1314 = vld [vmem:[%s48 + $0x8] sm:$0xff]
  %v1315 = vld [vmem:[%s48 + $0x10] sm:$0xff]
  %v1316 = vld [vmem:[%s48 + $0x18] sm:$0xff]
  %v1317 = vmul.f32 %v1280, %v1313
  %v1318 = vmul.f32 %v1281, %v1314
  %v1319 = vmul.f32 %v1282, %v1315
  %v1320 = vmul.f32 %v1283, %v1316
  %v1321 = vsel %vm26, %v1317, 0.0
  %v1322 = vsel %vm26, %v1318, 0.0
  %v1323 = vadd.f32 %v1321, %v1322
  %v1324 = vsel %vm26, %v1319, 0.0
  %v1325 = vadd.f32 %v1323, %v1324
  %v1326 = vsel %vm26, %v1320, 0.0
  %v1327 = vadd.f32 %v1325, %v1326
  %v1328 = vrot.slane %v1327, 4
  %v1329 = vadd.f32 %v1327, %v1328
  %v1330 = vrot.slane %v1329, 2
  %v1331 = vadd.f32 %v1329, %v1330
  %v1332 = vrot.slane %v1331, 1
  %v1333 = vadd.f32 %v1331, %v1332
  %v1334 = vld [vmem:[%s70] sm:$0xff]
  %v1335 = vld [vmem:[%s70 + $0x8] sm:$0xff]
  %v1336 = vld [vmem:[%s70 + $0x10] sm:$0xff]
  %v1337 = vld [vmem:[%s70 + $0x18] sm:$0xff]
  %v1338 = vmul.f32 %v1333, %v1334
  %v1339 = vmul.f32 %v1333, %v1335
  %v1340 = vmul.f32 %v1333, %v1336
  %v1341 = vmul.f32 %v1333, %v1337
  %v1342 = vadd.f32 %v1309, %v1338
  %v1343 = vadd.f32 %v1310, %v1339
  %v1344 = vadd.f32 %v1311, %v1340
  %v1345 = vadd.f32 %v1312, %v1341
  %v1346 = vld [vmem:[%s83] sm:$0xff]
  %v1347 = vld [vmem:[%s83 + $0x8] sm:$0xff]
  %v1348 = vld [vmem:[%s83 + $0x10] sm:$0xff]
  %v1349 = vld [vmem:[%s83 + $0x18] sm:$0xff]
  %v1350 = vmul.f32 %v1280, %v1346
  %v1351 = vmul.f32 %v1281, %v1347
  %v1352 = vmul.f32 %v1282, %v1348
  %v1353 = vmul.f32 %v1283, %v1349
  %v1354 = vsel %vm26, %v1350, 0.0
  %v1355 = vsel %vm26, %v1351, 0.0
  %v1356 = vadd.f32 %v1354, %v1355
  %v1357 = vsel %vm26, %v1352, 0.0
  %v1358 = vadd.f32 %v1356, %v1357
  %v1359 = vsel %vm26, %v1353, 0.0
  %v1360 = vadd.f32 %v1358, %v1359
  %v1361 = vrot.slane %v1360, 4
  %v1362 = vadd.f32 %v1360, %v1361
  %v1363 = vrot.slane %v1362, 2
  %v1364 = vadd.f32 %v1362, %v1363
  %v1365 = vrot.slane %v1364, 1
  %v1366 = vadd.f32 %v1364, %v1365
  %v1367 = vld [vmem:[%s105] sm:$0xff]
  %v1368 = vld [vmem:[%s105 + $0x8] sm:$0xff]
  %v1369 = vld [vmem:[%s105 + $0x10] sm:$0xff]
  %v1370 = vld [vmem:[%s105 + $0x18] sm:$0xff]
  %v1371 = vmul.f32 %v1366, %v1367
  %v1372 = vmul.f32 %v1366, %v1368
  %v1373 = vmul.f32 %v1366, %v1369
  %v1374 = vmul.f32 %v1366, %v1370
  %v1375 = vadd.f32 %v1342, %v1371
  %v1376 = vadd.f32 %v1343, %v1372
  %v1377 = vadd.f32 %v1344, %v1373
  %v1378 = vadd.f32 %v1345, %v1374
  %v1379 = vld [vmem:[%s118] sm:$0xff]
  %v1380 = vld [vmem:[%s118 + $0x8] sm:$0xff]
  %v1381 = vld [vmem:[%s118 + $0x10] sm:$0xff]
  %v1382 = vld [vmem:[%s118 + $0x18] sm:$0xff]
  %v1383 = vmul.f32 %v1280, %v1379
  %v1384 = vmul.f32 %v1281, %v1380
  %v1385 = vmul.f32 %v1282, %v1381
  %v1386 = vmul.f32 %v1283, %v1382
  %v1387 = vsel %vm26, %v1383, 0.0
  %v1388 = vsel %vm26, %v1384, 0.0
  %v1389 = vadd.f32 %v1387, %v1388
  %v1390 = vsel %vm26, %v1385, 0.0
  %v1391 = vadd.f32 %v1389, %v1390
  %v1392 = vsel %vm26, %v1386, 0.0
  %v1393 = vadd.f32 %v1391, %v1392
  %v1394 = vrot.slane %v1393, 4
  %v1395 = vadd.f32 %v1393, %v1394
  %v1396 = vrot.slane %v1395, 2
  %v1397 = vadd.f32 %v1395, %v1396
  %v1398 = vrot.slane %v1397, 1
  %v1399 = vadd.f32 %v1397, %v1398
  %v1400 = vld [vmem:[%s140] sm:$0xff]
  %v1401 = vld [vmem:[%s140 + $0x8] sm:$0xff]
  %v1402 = vld [vmem:[%s140 + $0x10] sm:$0xff]
  %v1403 = vld [vmem:[%s140 + $0x18] sm:$0xff]
  %v1404 = vmul.f32 %v1399, %v1400
  %v1405 = vmul.f32 %v1399, %v1401
  %v1406 = vmul.f32 %v1399, %v1402
  %v1407 = vmul.f32 %v1399, %v1403
  %v1408 = vadd.f32 %v1375, %v1404
  %v1409 = vadd.f32 %v1376, %v1405
  %v1410 = vadd.f32 %v1377, %v1406
  %v1411 = vadd.f32 %v1378, %v1407
  %v1412 = vld [vmem:[%s153] sm:$0xff]
  %v1413 = vld [vmem:[%s153 + $0x8] sm:$0xff]
  %v1414 = vld [vmem:[%s153 + $0x10] sm:$0xff]
  %v1415 = vld [vmem:[%s153 + $0x18] sm:$0xff]
  %v1416 = vmul.f32 %v1280, %v1412
  %v1417 = vmul.f32 %v1281, %v1413
  %v1418 = vmul.f32 %v1282, %v1414
  %v1419 = vmul.f32 %v1283, %v1415
  %v1420 = vsel %vm26, %v1416, 0.0
  %v1421 = vsel %vm26, %v1417, 0.0
  %v1422 = vadd.f32 %v1420, %v1421
  %v1423 = vsel %vm26, %v1418, 0.0
  %v1424 = vadd.f32 %v1422, %v1423
  %v1425 = vsel %vm26, %v1419, 0.0
  %v1426 = vadd.f32 %v1424, %v1425
  %v1427 = vrot.slane %v1426, 4
  %v1428 = vadd.f32 %v1426, %v1427
  %v1429 = vrot.slane %v1428, 2
  %v1430 = vadd.f32 %v1428, %v1429
  %v1431 = vrot.slane %v1430, 1
  %v1432 = vadd.f32 %v1430, %v1431
  %v1433 = vld [vmem:[%s175] sm:$0xff]
  %v1434 = vld [vmem:[%s175 + $0x8] sm:$0xff]
  %v1435 = vld [vmem:[%s175 + $0x10] sm:$0xff]
  %v1436 = vld [vmem:[%s175 + $0x18] sm:$0xff]
  %v1437 = vmul.f32 %v1432, %v1433
  %v1438 = vmul.f32 %v1432, %v1434
  %v1439 = vmul.f32 %v1432, %v1435
  %v1440 = vmul.f32 %v1432, %v1436
  %v1441 = vadd.f32 %v1408, %v1437
  %v1442 = vadd.f32 %v1409, %v1438
  %v1443 = vadd.f32 %v1410, %v1439
  %v1444 = vadd.f32 %v1411, %v1440
  %v1445 = vld [vmem:[%s188] sm:$0xff]
  %v1446 = vld [vmem:[%s188 + $0x8] sm:$0xff]
  %v1447 = vld [vmem:[%s188 + $0x10] sm:$0xff]
  %v1448 = vld [vmem:[%s188 + $0x18] sm:$0xff]
  %v1449 = vmul.f32 %v1280, %v1445
  %v1450 = vmul.f32 %v1281, %v1446
  %v1451 = vmul.f32 %v1282, %v1447
  %v1452 = vmul.f32 %v1283, %v1448
  %v1453 = vsel %vm26, %v1449, 0.0
  %v1454 = vsel %vm26, %v1450, 0.0
  %v1455 = vadd.f32 %v1453, %v1454
  %v1456 = vsel %vm26, %v1451, 0.0
  %v1457 = vadd.f32 %v1455, %v1456
  %v1458 = vsel %vm26, %v1452, 0.0
  %v1459 = vadd.f32 %v1457, %v1458
  %v1460 = vrot.slane %v1459, 4
  %v1461 = vadd.f32 %v1459, %v1460
  %v1462 = vrot.slane %v1461, 2
  %v1463 = vadd.f32 %v1461, %v1462
  %v1464 = vrot.slane %v1463, 1
  %v1465 = vadd.f32 %v1463, %v1464
  %v1466 = vld [vmem:[%s210] sm:$0xff]
  %v1467 = vld [vmem:[%s210 + $0x8] sm:$0xff]
  %v1468 = vld [vmem:[%s210 + $0x10] sm:$0xff]
  %v1469 = vld [vmem:[%s210 + $0x18] sm:$0xff]
  %v1470 = vmul.f32 %v1465, %v1466
  %v1471 = vmul.f32 %v1465, %v1467
  %v1472 = vmul.f32 %v1465, %v1468
  %v1473 = vmul.f32 %v1465, %v1469
  %v1474 = vadd.f32 %v1441, %v1470
  %v1475 = vadd.f32 %v1442, %v1471
  %v1476 = vadd.f32 %v1443, %v1472
  %v1477 = vadd.f32 %v1444, %v1473
  %v1478 = vld [vmem:[%s223] sm:$0xff]
  %v1479 = vld [vmem:[%s223 + $0x8] sm:$0xff]
  %v1480 = vld [vmem:[%s223 + $0x10] sm:$0xff]
  %v1481 = vld [vmem:[%s223 + $0x18] sm:$0xff]
  %v1482 = vmul.f32 %v1280, %v1478
  %v1483 = vmul.f32 %v1281, %v1479
  %v1484 = vmul.f32 %v1282, %v1480
  %v1485 = vmul.f32 %v1283, %v1481
  %v1486 = vsel %vm26, %v1482, 0.0
  %v1487 = vsel %vm26, %v1483, 0.0
  %v1488 = vadd.f32 %v1486, %v1487
  %v1489 = vsel %vm26, %v1484, 0.0
  %v1490 = vadd.f32 %v1488, %v1489
  %v1491 = vsel %vm26, %v1485, 0.0
  %v1492 = vadd.f32 %v1490, %v1491
  %v1493 = vrot.slane %v1492, 4
  %v1494 = vadd.f32 %v1492, %v1493
  %v1495 = vrot.slane %v1494, 2
  %v1496 = vadd.f32 %v1494, %v1495
  %v1497 = vrot.slane %v1496, 1
  %v1498 = vadd.f32 %v1496, %v1497
  %v1499 = vld [vmem:[%s245] sm:$0xff]
  %v1500 = vld [vmem:[%s245 + $0x8] sm:$0xff]
  %v1501 = vld [vmem:[%s245 + $0x10] sm:$0xff]
  %v1502 = vld [vmem:[%s245 + $0x18] sm:$0xff]
  %v1503 = vmul.f32 %v1498, %v1499
  %v1504 = vmul.f32 %v1498, %v1500
  %v1505 = vmul.f32 %v1498, %v1501
  %v1506 = vmul.f32 %v1498, %v1502
  %v1507 = vadd.f32 %v1474, %v1503
  %v1508 = vadd.f32 %v1475, %v1504
  %v1509 = vadd.f32 %v1476, %v1505
  %v1510 = vadd.f32 %v1477, %v1506
  %v1511 = vld [vmem:[%s258] sm:$0xff]
  %v1512 = vld [vmem:[%s258 + $0x8] sm:$0xff]
  %v1513 = vld [vmem:[%s258 + $0x10] sm:$0xff]
  %v1514 = vld [vmem:[%s258 + $0x18] sm:$0xff]
  %v1515 = vmul.f32 %v1280, %v1511
  %v1516 = vmul.f32 %v1281, %v1512
  %v1517 = vmul.f32 %v1282, %v1513
  %v1518 = vmul.f32 %v1283, %v1514
  %v1519 = vsel %vm26, %v1515, 0.0
  %v1520 = vsel %vm26, %v1516, 0.0
  %v1521 = vadd.f32 %v1519, %v1520
  %v1522 = vsel %vm26, %v1517, 0.0
  %v1523 = vadd.f32 %v1521, %v1522
  %v1524 = vsel %vm26, %v1518, 0.0
  %v1525 = vadd.f32 %v1523, %v1524
  %v1526 = vrot.slane %v1525, 4
  %v1527 = vadd.f32 %v1525, %v1526
  %v1528 = vrot.slane %v1527, 2
  %v1529 = vadd.f32 %v1527, %v1528
  %v1530 = vrot.slane %v1529, 1
  %v1531 = vadd.f32 %v1529, %v1530
  %v1532 = vld [vmem:[%s280] sm:$0xff]
  %v1533 = vld [vmem:[%s280 + $0x8] sm:$0xff]
  %v1534 = vld [vmem:[%s280 + $0x10] sm:$0xff]
  %v1535 = vld [vmem:[%s280 + $0x18] sm:$0xff]
  %v1536 = vmul.f32 %v1531, %v1532
  %v1537 = vmul.f32 %v1531, %v1533
  %v1538 = vmul.f32 %v1531, %v1534
  %v1539 = vmul.f32 %v1531, %v1535
  %v1540 = vadd.f32 %v1507, %v1536
  %v1541 = vadd.f32 %v1508, %v1537
  %v1542 = vadd.f32 %v1509, %v1538
  %v1543 = vadd.f32 %v1510, %v1539
  %v1544 = vsel %vm26, %v1540, -inf
  %v1545 = vsel %vm26, %v1541, -inf
  %v1546 = vsel %vm26, %v1542, -inf
  %v1547 = vsel %vm26, %v1543, -inf
  %v1548 = vmax.f32 %v1544, %v1545
  %v1549 = vmax.f32 %v1546, %v1547
  %v1550 = vmax.f32 %v1548, %v1549
  %v1551 = vrot.slane %v1550, 4
  %v1552 = vmax.f32 %v1550, %v1551
  %v1553 = vrot.slane %v1552, 2
  %v1554 = vmax.f32 %v1552, %v1553
  %v1555 = vrot.slane %v1554, 1
  %v1556 = vmax.f32 %v1554, %v1555
  %v1557 = vsub.f32 %v1540, %v1556
  %v1558 = vsub.f32 %v1541, %v1556
  %v1559 = vsub.f32 %v1542, %v1556
  %v1560 = vsub.f32 %v1543, %v1556
  %v1561 = vmul.f32 %v1557, 1.442695
  %v1562 = vpow.pop %v1561
  %v1563 = vmul.f32 %v1558, 1.442695
  %v1564 = vpow.pop %v1563
  %v1565 = vmul.f32 %v1559, 1.442695
  %v1566 = vpow.pop %v1565
  %v1567 = vmul.f32 %v1560, 1.442695
  %v1568 = vpow.pop %v1567
  %v1569 = vsel %vm26, %v1562, 0.0
  %v1570 = vsel %vm26, %v1564, 0.0
  %v1571 = vadd.f32 %v1569, %v1570
  %v1572 = vsel %vm26, %v1566, 0.0
  %v1573 = vadd.f32 %v1571, %v1572
  %v1574 = vsel %vm26, %v1568, 0.0
  %v1575 = vadd.f32 %v1573, %v1574
  %v1576 = vrot.slane %v1575, 4
  %v1577 = vadd.f32 %v1575, %v1576
  %v1578 = vrot.slane %v1577, 2
  %v1579 = vadd.f32 %v1577, %v1578
  %v1580 = vrot.slane %v1579, 1
  %v1581 = vadd.f32 %v1579, %v1580
  %v1582 = vrcp.pop %v1581
  %v1583 = vmul.f32 %v1562, %v1582
  %v1584 = vmul.f32 %v1564, %v1582
  %v1585 = vmul.f32 %v1566, %v1582
  %v1586 = vmul.f32 %v1568, %v1582
  %s1587 = scalar_lea.vmem %s3, 128
  %1588 = vst.msk [vmem:[%s1587] sm:$0xff] %vm26, %v1583
  %1589 = vst.msk [vmem:[%s1587 + $0x8] sm:$0xff] %vm26, %v1584
  %1590 = vst.msk [vmem:[%s1587 + $0x10] sm:$0xff] %vm26, %v1585
  %1591 = vst.msk [vmem:[%s1587 + $0x18] sm:$0xff] %vm26, %v1586
  %s1592 = scalar_lea.vmem %s0, 160
  %v1593 = vld [vmem:[%s1592] sm:$0xff]
  %v1594 = vld [vmem:[%s1592 + $0x8] sm:$0xff]
  %v1595 = vld [vmem:[%s1592 + $0x10] sm:$0xff]
  %v1596 = vld [vmem:[%s1592 + $0x18] sm:$0xff]
  %v1597 = vld [vmem:[%s1] sm:$0xff]
  %v1598 = vld [vmem:[%s1 + $0x8] sm:$0xff]
  %v1599 = vld [vmem:[%s1 + $0x10] sm:$0xff]
  %v1600 = vld [vmem:[%s1 + $0x18] sm:$0xff]
  %v1601 = vmul.f32 %v1593, %v1597
  %v1602 = vmul.f32 %v1594, %v1598
  %v1603 = vmul.f32 %v1595, %v1599
  %v1604 = vmul.f32 %v1596, %v1600
  %v1605 = vsel %vm26, %v1601, 0.0
  %v1606 = vsel %vm26, %v1602, 0.0
  %v1607 = vadd.f32 %v1605, %v1606
  %v1608 = vsel %vm26, %v1603, 0.0
  %v1609 = vadd.f32 %v1607, %v1608
  %v1610 = vsel %vm26, %v1604, 0.0
  %v1611 = vadd.f32 %v1609, %v1610
  %v1612 = vrot.slane %v1611, 4
  %v1613 = vadd.f32 %v1611, %v1612
  %v1614 = vrot.slane %v1613, 2
  %v1615 = vadd.f32 %v1613, %v1614
  %v1616 = vrot.slane %v1615, 1
  %v1617 = vadd.f32 %v1615, %v1616
  %v1618 = vld [vmem:[%s2] sm:$0xff]
  %v1619 = vld [vmem:[%s2 + $0x8] sm:$0xff]
  %v1620 = vld [vmem:[%s2 + $0x10] sm:$0xff]
  %v1621 = vld [vmem:[%s2 + $0x18] sm:$0xff]
  %v1622 = vmul.f32 %v1617, %v1618
  %v1623 = vmul.f32 %v1617, %v1619
  %v1624 = vmul.f32 %v1617, %v1620
  %v1625 = vmul.f32 %v1617, %v1621
  %v1626 = vld [vmem:[%s48] sm:$0xff]
  %v1627 = vld [vmem:[%s48 + $0x8] sm:$0xff]
  %v1628 = vld [vmem:[%s48 + $0x10] sm:$0xff]
  %v1629 = vld [vmem:[%s48 + $0x18] sm:$0xff]
  %v1630 = vmul.f32 %v1593, %v1626
  %v1631 = vmul.f32 %v1594, %v1627
  %v1632 = vmul.f32 %v1595, %v1628
  %v1633 = vmul.f32 %v1596, %v1629
  %v1634 = vsel %vm26, %v1630, 0.0
  %v1635 = vsel %vm26, %v1631, 0.0
  %v1636 = vadd.f32 %v1634, %v1635
  %v1637 = vsel %vm26, %v1632, 0.0
  %v1638 = vadd.f32 %v1636, %v1637
  %v1639 = vsel %vm26, %v1633, 0.0
  %v1640 = vadd.f32 %v1638, %v1639
  %v1641 = vrot.slane %v1640, 4
  %v1642 = vadd.f32 %v1640, %v1641
  %v1643 = vrot.slane %v1642, 2
  %v1644 = vadd.f32 %v1642, %v1643
  %v1645 = vrot.slane %v1644, 1
  %v1646 = vadd.f32 %v1644, %v1645
  %v1647 = vld [vmem:[%s70] sm:$0xff]
  %v1648 = vld [vmem:[%s70 + $0x8] sm:$0xff]
  %v1649 = vld [vmem:[%s70 + $0x10] sm:$0xff]
  %v1650 = vld [vmem:[%s70 + $0x18] sm:$0xff]
  %v1651 = vmul.f32 %v1646, %v1647
  %v1652 = vmul.f32 %v1646, %v1648
  %v1653 = vmul.f32 %v1646, %v1649
  %v1654 = vmul.f32 %v1646, %v1650
  %v1655 = vadd.f32 %v1622, %v1651
  %v1656 = vadd.f32 %v1623, %v1652
  %v1657 = vadd.f32 %v1624, %v1653
  %v1658 = vadd.f32 %v1625, %v1654
  %v1659 = vld [vmem:[%s83] sm:$0xff]
  %v1660 = vld [vmem:[%s83 + $0x8] sm:$0xff]
  %v1661 = vld [vmem:[%s83 + $0x10] sm:$0xff]
  %v1662 = vld [vmem:[%s83 + $0x18] sm:$0xff]
  %v1663 = vmul.f32 %v1593, %v1659
  %v1664 = vmul.f32 %v1594, %v1660
  %v1665 = vmul.f32 %v1595, %v1661
  %v1666 = vmul.f32 %v1596, %v1662
  %v1667 = vsel %vm26, %v1663, 0.0
  %v1668 = vsel %vm26, %v1664, 0.0
  %v1669 = vadd.f32 %v1667, %v1668
  %v1670 = vsel %vm26, %v1665, 0.0
  %v1671 = vadd.f32 %v1669, %v1670
  %v1672 = vsel %vm26, %v1666, 0.0
  %v1673 = vadd.f32 %v1671, %v1672
  %v1674 = vrot.slane %v1673, 4
  %v1675 = vadd.f32 %v1673, %v1674
  %v1676 = vrot.slane %v1675, 2
  %v1677 = vadd.f32 %v1675, %v1676
  %v1678 = vrot.slane %v1677, 1
  %v1679 = vadd.f32 %v1677, %v1678
  %v1680 = vld [vmem:[%s105] sm:$0xff]
  %v1681 = vld [vmem:[%s105 + $0x8] sm:$0xff]
  %v1682 = vld [vmem:[%s105 + $0x10] sm:$0xff]
  %v1683 = vld [vmem:[%s105 + $0x18] sm:$0xff]
  %v1684 = vmul.f32 %v1679, %v1680
  %v1685 = vmul.f32 %v1679, %v1681
  %v1686 = vmul.f32 %v1679, %v1682
  %v1687 = vmul.f32 %v1679, %v1683
  %v1688 = vadd.f32 %v1655, %v1684
  %v1689 = vadd.f32 %v1656, %v1685
  %v1690 = vadd.f32 %v1657, %v1686
  %v1691 = vadd.f32 %v1658, %v1687
  %v1692 = vld [vmem:[%s118] sm:$0xff]
  %v1693 = vld [vmem:[%s118 + $0x8] sm:$0xff]
  %v1694 = vld [vmem:[%s118 + $0x10] sm:$0xff]
  %v1695 = vld [vmem:[%s118 + $0x18] sm:$0xff]
  %v1696 = vmul.f32 %v1593, %v1692
  %v1697 = vmul.f32 %v1594, %v1693
  %v1698 = vmul.f32 %v1595, %v1694
  %v1699 = vmul.f32 %v1596, %v1695
  %v1700 = vsel %vm26, %v1696, 0.0
  %v1701 = vsel %vm26, %v1697, 0.0
  %v1702 = vadd.f32 %v1700, %v1701
  %v1703 = vsel %vm26, %v1698, 0.0
  %v1704 = vadd.f32 %v1702, %v1703
  %v1705 = vsel %vm26, %v1699, 0.0
  %v1706 = vadd.f32 %v1704, %v1705
  %v1707 = vrot.slane %v1706, 4
  %v1708 = vadd.f32 %v1706, %v1707
  %v1709 = vrot.slane %v1708, 2
  %v1710 = vadd.f32 %v1708, %v1709
  %v1711 = vrot.slane %v1710, 1
  %v1712 = vadd.f32 %v1710, %v1711
  %v1713 = vld [vmem:[%s140] sm:$0xff]
  %v1714 = vld [vmem:[%s140 + $0x8] sm:$0xff]
  %v1715 = vld [vmem:[%s140 + $0x10] sm:$0xff]
  %v1716 = vld [vmem:[%s140 + $0x18] sm:$0xff]
  %v1717 = vmul.f32 %v1712, %v1713
  %v1718 = vmul.f32 %v1712, %v1714
  %v1719 = vmul.f32 %v1712, %v1715
  %v1720 = vmul.f32 %v1712, %v1716
  %v1721 = vadd.f32 %v1688, %v1717
  %v1722 = vadd.f32 %v1689, %v1718
  %v1723 = vadd.f32 %v1690, %v1719
  %v1724 = vadd.f32 %v1691, %v1720
  %v1725 = vld [vmem:[%s153] sm:$0xff]
  %v1726 = vld [vmem:[%s153 + $0x8] sm:$0xff]
  %v1727 = vld [vmem:[%s153 + $0x10] sm:$0xff]
  %v1728 = vld [vmem:[%s153 + $0x18] sm:$0xff]
  %v1729 = vmul.f32 %v1593, %v1725
  %v1730 = vmul.f32 %v1594, %v1726
  %v1731 = vmul.f32 %v1595, %v1727
  %v1732 = vmul.f32 %v1596, %v1728
  %v1733 = vsel %vm26, %v1729, 0.0
  %v1734 = vsel %vm26, %v1730, 0.0
  %v1735 = vadd.f32 %v1733, %v1734
  %v1736 = vsel %vm26, %v1731, 0.0
  %v1737 = vadd.f32 %v1735, %v1736
  %v1738 = vsel %vm26, %v1732, 0.0
  %v1739 = vadd.f32 %v1737, %v1738
  %v1740 = vrot.slane %v1739, 4
  %v1741 = vadd.f32 %v1739, %v1740
  %v1742 = vrot.slane %v1741, 2
  %v1743 = vadd.f32 %v1741, %v1742
  %v1744 = vrot.slane %v1743, 1
  %v1745 = vadd.f32 %v1743, %v1744
  %v1746 = vld [vmem:[%s175] sm:$0xff]
  %v1747 = vld [vmem:[%s175 + $0x8] sm:$0xff]
  %v1748 = vld [vmem:[%s175 + $0x10] sm:$0xff]
  %v1749 = vld [vmem:[%s175 + $0x18] sm:$0xff]
  %v1750 = vmul.f32 %v1745, %v1746
  %v1751 = vmul.f32 %v1745, %v1747
  %v1752 = vmul.f32 %v1745, %v1748
  %v1753 = vmul.f32 %v1745, %v1749
  %v1754 = vadd.f32 %v1721, %v1750
  %v1755 = vadd.f32 %v1722, %v1751
  %v1756 = vadd.f32 %v1723, %v1752
  %v1757 = vadd.f32 %v1724, %v1753
  %v1758 = vld [vmem:[%s188] sm:$0xff]
  %v1759 = vld [vmem:[%s188 + $0x8] sm:$0xff]
  %v1760 = vld [vmem:[%s188 + $0x10] sm:$0xff]
  %v1761 = vld [vmem:[%s188 + $0x18] sm:$0xff]
  %v1762 = vmul.f32 %v1593, %v1758
  %v1763 = vmul.f32 %v1594, %v1759
  %v1764 = vmul.f32 %v1595, %v1760
  %v1765 = vmul.f32 %v1596, %v1761
  %v1766 = vsel %vm26, %v1762, 0.0
  %v1767 = vsel %vm26, %v1763, 0.0
  %v1768 = vadd.f32 %v1766, %v1767
  %v1769 = vsel %vm26, %v1764, 0.0
  %v1770 = vadd.f32 %v1768, %v1769
  %v1771 = vsel %vm26, %v1765, 0.0
  %v1772 = vadd.f32 %v1770, %v1771
  %v1773 = vrot.slane %v1772, 4
  %v1774 = vadd.f32 %v1772, %v1773
  %v1775 = vrot.slane %v1774, 2
  %v1776 = vadd.f32 %v1774, %v1775
  %v1777 = vrot.slane %v1776, 1
  %v1778 = vadd.f32 %v1776, %v1777
  %v1779 = vld [vmem:[%s210] sm:$0xff]
  %v1780 = vld [vmem:[%s210 + $0x8] sm:$0xff]
  %v1781 = vld [vmem:[%s210 + $0x10] sm:$0xff]
  %v1782 = vld [vmem:[%s210 + $0x18] sm:$0xff]
  %v1783 = vmul.f32 %v1778, %v1779
  %v1784 = vmul.f32 %v1778, %v1780
  %v1785 = vmul.f32 %v1778, %v1781
  %v1786 = vmul.f32 %v1778, %v1782
  %v1787 = vadd.f32 %v1754, %v1783
  %v1788 = vadd.f32 %v1755, %v1784
  %v1789 = vadd.f32 %v1756, %v1785
  %v1790 = vadd.f32 %v1757, %v1786
  %v1791 = vld [vmem:[%s223] sm:$0xff]
  %v1792 = vld [vmem:[%s223 + $0x8] sm:$0xff]
  %v1793 = vld [vmem:[%s223 + $0x10] sm:$0xff]
  %v1794 = vld [vmem:[%s223 + $0x18] sm:$0xff]
  %v1795 = vmul.f32 %v1593, %v1791
  %v1796 = vmul.f32 %v1594, %v1792
  %v1797 = vmul.f32 %v1595, %v1793
  %v1798 = vmul.f32 %v1596, %v1794
  %v1799 = vsel %vm26, %v1795, 0.0
  %v1800 = vsel %vm26, %v1796, 0.0
  %v1801 = vadd.f32 %v1799, %v1800
  %v1802 = vsel %vm26, %v1797, 0.0
  %v1803 = vadd.f32 %v1801, %v1802
  %v1804 = vsel %vm26, %v1798, 0.0
  %v1805 = vadd.f32 %v1803, %v1804
  %v1806 = vrot.slane %v1805, 4
  %v1807 = vadd.f32 %v1805, %v1806
  %v1808 = vrot.slane %v1807, 2
  %v1809 = vadd.f32 %v1807, %v1808
  %v1810 = vrot.slane %v1809, 1
  %v1811 = vadd.f32 %v1809, %v1810
  %v1812 = vld [vmem:[%s245] sm:$0xff]
  %v1813 = vld [vmem:[%s245 + $0x8] sm:$0xff]
  %v1814 = vld [vmem:[%s245 + $0x10] sm:$0xff]
  %v1815 = vld [vmem:[%s245 + $0x18] sm:$0xff]
  %v1816 = vmul.f32 %v1811, %v1812
  %v1817 = vmul.f32 %v1811, %v1813
  %v1818 = vmul.f32 %v1811, %v1814
  %v1819 = vmul.f32 %v1811, %v1815
  %v1820 = vadd.f32 %v1787, %v1816
  %v1821 = vadd.f32 %v1788, %v1817
  %v1822 = vadd.f32 %v1789, %v1818
  %v1823 = vadd.f32 %v1790, %v1819
  %v1824 = vld [vmem:[%s258] sm:$0xff]
  %v1825 = vld [vmem:[%s258 + $0x8] sm:$0xff]
  %v1826 = vld [vmem:[%s258 + $0x10] sm:$0xff]
  %v1827 = vld [vmem:[%s258 + $0x18] sm:$0xff]
  %v1828 = vmul.f32 %v1593, %v1824
  %v1829 = vmul.f32 %v1594, %v1825
  %v1830 = vmul.f32 %v1595, %v1826
  %v1831 = vmul.f32 %v1596, %v1827
  %v1832 = vsel %vm26, %v1828, 0.0
  %v1833 = vsel %vm26, %v1829, 0.0
  %v1834 = vadd.f32 %v1832, %v1833
  %v1835 = vsel %vm26, %v1830, 0.0
  %v1836 = vadd.f32 %v1834, %v1835
  %v1837 = vsel %vm26, %v1831, 0.0
  %v1838 = vadd.f32 %v1836, %v1837
  %v1839 = vrot.slane %v1838, 4
  %v1840 = vadd.f32 %v1838, %v1839
  %v1841 = vrot.slane %v1840, 2
  %v1842 = vadd.f32 %v1840, %v1841
  %v1843 = vrot.slane %v1842, 1
  %v1844 = vadd.f32 %v1842, %v1843
  %v1845 = vld [vmem:[%s280] sm:$0xff]
  %v1846 = vld [vmem:[%s280 + $0x8] sm:$0xff]
  %v1847 = vld [vmem:[%s280 + $0x10] sm:$0xff]
  %v1848 = vld [vmem:[%s280 + $0x18] sm:$0xff]
  %v1849 = vmul.f32 %v1844, %v1845
  %v1850 = vmul.f32 %v1844, %v1846
  %v1851 = vmul.f32 %v1844, %v1847
  %v1852 = vmul.f32 %v1844, %v1848
  %v1853 = vadd.f32 %v1820, %v1849
  %v1854 = vadd.f32 %v1821, %v1850
  %v1855 = vadd.f32 %v1822, %v1851
  %v1856 = vadd.f32 %v1823, %v1852
  %v1857 = vsel %vm26, %v1853, -inf
  %v1858 = vsel %vm26, %v1854, -inf
  %v1859 = vsel %vm26, %v1855, -inf
  %v1860 = vsel %vm26, %v1856, -inf
  %v1861 = vmax.f32 %v1857, %v1858
  %v1862 = vmax.f32 %v1859, %v1860
  %v1863 = vmax.f32 %v1861, %v1862
  %v1864 = vrot.slane %v1863, 4
  %v1865 = vmax.f32 %v1863, %v1864
  %v1866 = vrot.slane %v1865, 2
  %v1867 = vmax.f32 %v1865, %v1866
  %v1868 = vrot.slane %v1867, 1
  %v1869 = vmax.f32 %v1867, %v1868
  %v1870 = vsub.f32 %v1853, %v1869
  %v1871 = vsub.f32 %v1854, %v1869
  %v1872 = vsub.f32 %v1855, %v1869
  %v1873 = vsub.f32 %v1856, %v1869
  %v1874 = vmul.f32 %v1870, 1.442695
  %v1875 = vpow.pop %v1874
  %v1876 = vmul.f32 %v1871, 1.442695
  %v1877 = vpow.pop %v1876
  %v1878 = vmul.f32 %v1872, 1.442695
  %v1879 = vpow.pop %v1878
  %v1880 = vmul.f32 %v1873, 1.442695
  %v1881 = vpow.pop %v1880
  %v1882 = vsel %vm26, %v1875, 0.0
  %v1883 = vsel %vm26, %v1877, 0.0
  %v1884 = vadd.f32 %v1882, %v1883
  %v1885 = vsel %vm26, %v1879, 0.0
  %v1886 = vadd.f32 %v1884, %v1885
  %v1887 = vsel %vm26, %v1881, 0.0
  %v1888 = vadd.f32 %v1886, %v1887
  %v1889 = vrot.slane %v1888, 4
  %v1890 = vadd.f32 %v1888, %v1889
  %v1891 = vrot.slane %v1890, 2
  %v1892 = vadd.f32 %v1890, %v1891
  %v1893 = vrot.slane %v1892, 1
  %v1894 = vadd.f32 %v1892, %v1893
  %v1895 = vrcp.pop %v1894
  %v1896 = vmul.f32 %v1875, %v1895
  %v1897 = vmul.f32 %v1877, %v1895
  %v1898 = vmul.f32 %v1879, %v1895
  %v1899 = vmul.f32 %v1881, %v1895
  %s1900 = scalar_lea.vmem %s3, 160
  %1901 = vst.msk [vmem:[%s1900] sm:$0xff] %vm26, %v1896
  %1902 = vst.msk [vmem:[%s1900 + $0x8] sm:$0xff] %vm26, %v1897
  %1903 = vst.msk [vmem:[%s1900 + $0x10] sm:$0xff] %vm26, %v1898
  %1904 = vst.msk [vmem:[%s1900 + $0x18] sm:$0xff] %vm26, %v1899
  %s1905 = scalar_lea.vmem %s0, 192
  %v1906 = vld [vmem:[%s1905] sm:$0xff]
  %v1907 = vld [vmem:[%s1905 + $0x8] sm:$0xff]
  %v1908 = vld [vmem:[%s1905 + $0x10] sm:$0xff]
  %v1909 = vld [vmem:[%s1905 + $0x18] sm:$0xff]
  %v1910 = vld [vmem:[%s1] sm:$0xff]
  %v1911 = vld [vmem:[%s1 + $0x8] sm:$0xff]
  %v1912 = vld [vmem:[%s1 + $0x10] sm:$0xff]
  %v1913 = vld [vmem:[%s1 + $0x18] sm:$0xff]
  %v1914 = vmul.f32 %v1906, %v1910
  %v1915 = vmul.f32 %v1907, %v1911
  %v1916 = vmul.f32 %v1908, %v1912
  %v1917 = vmul.f32 %v1909, %v1913
  %v1918 = vsel %vm26, %v1914, 0.0
  %v1919 = vsel %vm26, %v1915, 0.0
  %v1920 = vadd.f32 %v1918, %v1919
  %v1921 = vsel %vm26, %v1916, 0.0
  %v1922 = vadd.f32 %v1920, %v1921
  %v1923 = vsel %vm26, %v1917, 0.0
  %v1924 = vadd.f32 %v1922, %v1923
  %v1925 = vrot.slane %v1924, 4
  %v1926 = vadd.f32 %v1924, %v1925
  %v1927 = vrot.slane %v1926, 2
  %v1928 = vadd.f32 %v1926, %v1927
  %v1929 = vrot.slane %v1928, 1
  %v1930 = vadd.f32 %v1928, %v1929
  %v1931 = vld [vmem:[%s2] sm:$0xff]
  %v1932 = vld [vmem:[%s2 + $0x8] sm:$0xff]
  %v1933 = vld [vmem:[%s2 + $0x10] sm:$0xff]
  %v1934 = vld [vmem:[%s2 + $0x18] sm:$0xff]
  %v1935 = vmul.f32 %v1930, %v1931
  %v1936 = vmul.f32 %v1930, %v1932
  %v1937 = vmul.f32 %v1930, %v1933
  %v1938 = vmul.f32 %v1930, %v1934
  %v1939 = vld [vmem:[%s48] sm:$0xff]
  %v1940 = vld [vmem:[%s48 + $0x8] sm:$0xff]
  %v1941 = vld [vmem:[%s48 + $0x10] sm:$0xff]
  %v1942 = vld [vmem:[%s48 + $0x18] sm:$0xff]
  %v1943 = vmul.f32 %v1906, %v1939
  %v1944 = vmul.f32 %v1907, %v1940
  %v1945 = vmul.f32 %v1908, %v1941
  %v1946 = vmul.f32 %v1909, %v1942
  %v1947 = vsel %vm26, %v1943, 0.0
  %v1948 = vsel %vm26, %v1944, 0.0
  %v1949 = vadd.f32 %v1947, %v1948
  %v1950 = vsel %vm26, %v1945, 0.0
  %v1951 = vadd.f32 %v1949, %v1950
  %v1952 = vsel %vm26, %v1946, 0.0
  %v1953 = vadd.f32 %v1951, %v1952
  %v1954 = vrot.slane %v1953, 4
  %v1955 = vadd.f32 %v1953, %v1954
  %v1956 = vrot.slane %v1955, 2
  %v1957 = vadd.f32 %v1955, %v1956
  %v1958 = vrot.slane %v1957, 1
  %v1959 = vadd.f32 %v1957, %v1958
  %v1960 = vld [vmem:[%s70] sm:$0xff]
  %v1961 = vld [vmem:[%s70 + $0x8] sm:$0xff]
  %v1962 = vld [vmem:[%s70 + $0x10] sm:$0xff]
  %v1963 = vld [vmem:[%s70 + $0x18] sm:$0xff]
  %v1964 = vmul.f32 %v1959, %v1960
  %v1965 = vmul.f32 %v1959, %v1961
  %v1966 = vmul.f32 %v1959, %v1962
  %v1967 = vmul.f32 %v1959, %v1963
  %v1968 = vadd.f32 %v1935, %v1964
  %v1969 = vadd.f32 %v1936, %v1965
  %v1970 = vadd.f32 %v1937, %v1966
  %v1971 = vadd.f32 %v1938, %v1967
  %v1972 = vld [vmem:[%s83] sm:$0xff]
  %v1973 = vld [vmem:[%s83 + $0x8] sm:$0xff]
  %v1974 = vld [vmem:[%s83 + $0x10] sm:$0xff]
  %v1975 = vld [vmem:[%s83 + $0x18] sm:$0xff]
  %v1976 = vmul.f32 %v1906, %v1972
  %v1977 = vmul.f32 %v1907, %v1973
  %v1978 = vmul.f32 %v1908, %v1974
  %v1979 = vmul.f32 %v1909, %v1975
  %v1980 = vsel %vm26, %v1976, 0.0
  %v1981 = vsel %vm26, %v1977, 0.0
  %v1982 = vadd.f32 %v1980, %v1981
  %v1983 = vsel %vm26, %v1978, 0.0
  %v1984 = vadd.f32 %v1982, %v1983
  %v1985 = vsel %vm26, %v1979, 0.0
  %v1986 = vadd.f32 %v1984, %v1985
  %v1987 = vrot.slane %v1986, 4
  %v1988 = vadd.f32 %v1986, %v1987
  %v1989 = vrot.slane %v1988, 2
  %v1990 = vadd.f32 %v1988, %v1989
  %v1991 = vrot.slane %v1990, 1
  %v1992 = vadd.f32 %v1990, %v1991
  %v1993 = vld [vmem:[%s105] sm:$0xff]
  %v1994 = vld [vmem:[%s105 + $0x8] sm:$0xff]
  %v1995 = vld [vmem:[%s105 + $0x10] sm:$0xff]
  %v1996 = vld [vmem:[%s105 + $0x18] sm:$0xff]
  %v1997 = vmul.f32 %v1992, %v1993
  %v1998 = vmul.f32 %v1992, %v1994
  %v1999 = vmul.f32 %v1992, %v1995
  %v2000 = vmul.f32 %v1992, %v1996
  %v2001 = vadd.f32 %v1968, %v1997
  %v2002 = vadd.f32 %v1969, %v1998
  %v2003 = vadd.f32 %v1970, %v1999
  %v2004 = vadd.f32 %v1971, %v2000
  %v2005 = vld [vmem:[%s118] sm:$0xff]
  %v2006 = vld [vmem:[%s118 + $0x8] sm:$0xff]
  %v2007 = vld [vmem:[%s118 + $0x10] sm:$0xff]
  %v2008 = vld [vmem:[%s118 + $0x18] sm:$0xff]
  %v2009 = vmul.f32 %v1906, %v2005
  %v2010 = vmul.f32 %v1907, %v2006
  %v2011 = vmul.f32 %v1908, %v2007
  %v2012 = vmul.f32 %v1909, %v2008
  %v2013 = vsel %vm26, %v2009, 0.0
  %v2014 = vsel %vm26, %v2010, 0.0
  %v2015 = vadd.f32 %v2013, %v2014
  %v2016 = vsel %vm26, %v2011, 0.0
  %v2017 = vadd.f32 %v2015, %v2016
  %v2018 = vsel %vm26, %v2012, 0.0
  %v2019 = vadd.f32 %v2017, %v2018
  %v2020 = vrot.slane %v2019, 4
  %v2021 = vadd.f32 %v2019, %v2020
  %v2022 = vrot.slane %v2021, 2
  %v2023 = vadd.f32 %v2021, %v2022
  %v2024 = vrot.slane %v2023, 1
  %v2025 = vadd.f32 %v2023, %v2024
  %v2026 = vld [vmem:[%s140] sm:$0xff]
  %v2027 = vld [vmem:[%s140 + $0x8] sm:$0xff]
  %v2028 = vld [vmem:[%s140 + $0x10] sm:$0xff]
  %v2029 = vld [vmem:[%s140 + $0x18] sm:$0xff]
  %v2030 = vmul.f32 %v2025, %v2026
  %v2031 = vmul.f32 %v2025, %v2027
  %v2032 = vmul.f32 %v2025, %v2028
  %v2033 = vmul.f32 %v2025, %v2029
  %v2034 = vadd.f32 %v2001, %v2030
  %v2035 = vadd.f32 %v2002, %v2031
  %v2036 = vadd.f32 %v2003, %v2032
  %v2037 = vadd.f32 %v2004, %v2033
  %v2038 = vld [vmem:[%s153] sm:$0xff]
  %v2039 = vld [vmem:[%s153 + $0x8] sm:$0xff]
  %v2040 = vld [vmem:[%s153 + $0x10] sm:$0xff]
  %v2041 = vld [vmem:[%s153 + $0x18] sm:$0xff]
  %v2042 = vmul.f32 %v1906, %v2038
  %v2043 = vmul.f32 %v1907, %v2039
  %v2044 = vmul.f32 %v1908, %v2040
  %v2045 = vmul.f32 %v1909, %v2041
  %v2046 = vsel %vm26, %v2042, 0.0
  %v2047 = vsel %vm26, %v2043, 0.0
  %v2048 = vadd.f32 %v2046, %v2047
  %v2049 = vsel %vm26, %v2044, 0.0
  %v2050 = vadd.f32 %v2048, %v2049
  %v2051 = vsel %vm26, %v2045, 0.0
  %v2052 = vadd.f32 %v2050, %v2051
  %v2053 = vrot.slane %v2052, 4
  %v2054 = vadd.f32 %v2052, %v2053
  %v2055 = vrot.slane %v2054, 2
  %v2056 = vadd.f32 %v2054, %v2055
  %v2057 = vrot.slane %v2056, 1
  %v2058 = vadd.f32 %v2056, %v2057
  %v2059 = vld [vmem:[%s175] sm:$0xff]
  %v2060 = vld [vmem:[%s175 + $0x8] sm:$0xff]
  %v2061 = vld [vmem:[%s175 + $0x10] sm:$0xff]
  %v2062 = vld [vmem:[%s175 + $0x18] sm:$0xff]
  %v2063 = vmul.f32 %v2058, %v2059
  %v2064 = vmul.f32 %v2058, %v2060
  %v2065 = vmul.f32 %v2058, %v2061
  %v2066 = vmul.f32 %v2058, %v2062
  %v2067 = vadd.f32 %v2034, %v2063
  %v2068 = vadd.f32 %v2035, %v2064
  %v2069 = vadd.f32 %v2036, %v2065
  %v2070 = vadd.f32 %v2037, %v2066
  %v2071 = vld [vmem:[%s188] sm:$0xff]
  %v2072 = vld [vmem:[%s188 + $0x8] sm:$0xff]
  %v2073 = vld [vmem:[%s188 + $0x10] sm:$0xff]
  %v2074 = vld [vmem:[%s188 + $0x18] sm:$0xff]
  %v2075 = vmul.f32 %v1906, %v2071
  %v2076 = vmul.f32 %v1907, %v2072
  %v2077 = vmul.f32 %v1908, %v2073
  %v2078 = vmul.f32 %v1909, %v2074
  %v2079 = vsel %vm26, %v2075, 0.0
  %v2080 = vsel %vm26, %v2076, 0.0
  %v2081 = vadd.f32 %v2079, %v2080
  %v2082 = vsel %vm26, %v2077, 0.0
  %v2083 = vadd.f32 %v2081, %v2082
  %v2084 = vsel %vm26, %v2078, 0.0
  %v2085 = vadd.f32 %v2083, %v2084
  %v2086 = vrot.slane %v2085, 4
  %v2087 = vadd.f32 %v2085, %v2086
  %v2088 = vrot.slane %v2087, 2
  %v2089 = vadd.f32 %v2087, %v2088
  %v2090 = vrot.slane %v2089, 1
  %v2091 = vadd.f32 %v2089, %v2090
  %v2092 = vld [vmem:[%s210] sm:$0xff]
  %v2093 = vld [vmem:[%s210 + $0x8] sm:$0xff]
  %v2094 = vld [vmem:[%s210 + $0x10] sm:$0xff]
  %v2095 = vld [vmem:[%s210 + $0x18] sm:$0xff]
  %v2096 = vmul.f32 %v2091, %v2092
  %v2097 = vmul.f32 %v2091, %v2093
  %v2098 = vmul.f32 %v2091, %v2094
  %v2099 = vmul.f32 %v2091, %v2095
  %v2100 = vadd.f32 %v2067, %v2096
  %v2101 = vadd.f32 %v2068, %v2097
  %v2102 = vadd.f32 %v2069, %v2098
  %v2103 = vadd.f32 %v2070, %v2099
  %v2104 = vld [vmem:[%s223] sm:$0xff]
  %v2105 = vld [vmem:[%s223 + $0x8] sm:$0xff]
  %v2106 = vld [vmem:[%s223 + $0x10] sm:$0xff]
  %v2107 = vld [vmem:[%s223 + $0x18] sm:$0xff]
  %v2108 = vmul.f32 %v1906, %v2104
  %v2109 = vmul.f32 %v1907, %v2105
  %v2110 = vmul.f32 %v1908, %v2106
  %v2111 = vmul.f32 %v1909, %v2107
  %v2112 = vsel %vm26, %v2108, 0.0
  %v2113 = vsel %vm26, %v2109, 0.0
  %v2114 = vadd.f32 %v2112, %v2113
  %v2115 = vsel %vm26, %v2110, 0.0
  %v2116 = vadd.f32 %v2114, %v2115
  %v2117 = vsel %vm26, %v2111, 0.0
  %v2118 = vadd.f32 %v2116, %v2117
  %v2119 = vrot.slane %v2118, 4
  %v2120 = vadd.f32 %v2118, %v2119
  %v2121 = vrot.slane %v2120, 2
  %v2122 = vadd.f32 %v2120, %v2121
  %v2123 = vrot.slane %v2122, 1
  %v2124 = vadd.f32 %v2122, %v2123
  %v2125 = vld [vmem:[%s245] sm:$0xff]
  %v2126 = vld [vmem:[%s245 + $0x8] sm:$0xff]
  %v2127 = vld [vmem:[%s245 + $0x10] sm:$0xff]
  %v2128 = vld [vmem:[%s245 + $0x18] sm:$0xff]
  %v2129 = vmul.f32 %v2124, %v2125
  %v2130 = vmul.f32 %v2124, %v2126
  %v2131 = vmul.f32 %v2124, %v2127
  %v2132 = vmul.f32 %v2124, %v2128
  %v2133 = vadd.f32 %v2100, %v2129
  %v2134 = vadd.f32 %v2101, %v2130
  %v2135 = vadd.f32 %v2102, %v2131
  %v2136 = vadd.f32 %v2103, %v2132
  %v2137 = vld [vmem:[%s258] sm:$0xff]
  %v2138 = vld [vmem:[%s258 + $0x8] sm:$0xff]
  %v2139 = vld [vmem:[%s258 + $0x10] sm:$0xff]
  %v2140 = vld [vmem:[%s258 + $0x18] sm:$0xff]
  %v2141 = vmul.f32 %v1906, %v2137
  %v2142 = vmul.f32 %v1907, %v2138
  %v2143 = vmul.f32 %v1908, %v2139
  %v2144 = vmul.f32 %v1909, %v2140
  %v2145 = vsel %vm26, %v2141, 0.0
  %v2146 = vsel %vm26, %v2142, 0.0
  %v2147 = vadd.f32 %v2145, %v2146
  %v2148 = vsel %vm26, %v2143, 0.0
  %v2149 = vadd.f32 %v2147, %v2148
  %v2150 = vsel %vm26, %v2144, 0.0
  %v2151 = vadd.f32 %v2149, %v2150
  %v2152 = vrot.slane %v2151, 4
  %v2153 = vadd.f32 %v2151, %v2152
  %v2154 = vrot.slane %v2153, 2
  %v2155 = vadd.f32 %v2153, %v2154
  %v2156 = vrot.slane %v2155, 1
  %v2157 = vadd.f32 %v2155, %v2156
  %v2158 = vld [vmem:[%s280] sm:$0xff]
  %v2159 = vld [vmem:[%s280 + $0x8] sm:$0xff]
  %v2160 = vld [vmem:[%s280 + $0x10] sm:$0xff]
  %v2161 = vld [vmem:[%s280 + $0x18] sm:$0xff]
  %v2162 = vmul.f32 %v2157, %v2158
  %v2163 = vmul.f32 %v2157, %v2159
  %v2164 = vmul.f32 %v2157, %v2160
  %v2165 = vmul.f32 %v2157, %v2161
  %v2166 = vadd.f32 %v2133, %v2162
  %v2167 = vadd.f32 %v2134, %v2163
  %v2168 = vadd.f32 %v2135, %v2164
  %v2169 = vadd.f32 %v2136, %v2165
  %v2170 = vsel %vm26, %v2166, -inf
  %v2171 = vsel %vm26, %v2167, -inf
  %v2172 = vsel %vm26, %v2168, -inf
  %v2173 = vsel %vm26, %v2169, -inf
  %v2174 = vmax.f32 %v2170, %v2171
  %v2175 = vmax.f32 %v2172, %v2173
  %v2176 = vmax.f32 %v2174, %v2175
  %v2177 = vrot.slane %v2176, 4
  %v2178 = vmax.f32 %v2176, %v2177
  %v2179 = vrot.slane %v2178, 2
  %v2180 = vmax.f32 %v2178, %v2179
  %v2181 = vrot.slane %v2180, 1
  %v2182 = vmax.f32 %v2180, %v2181
  %v2183 = vsub.f32 %v2166, %v2182
  %v2184 = vsub.f32 %v2167, %v2182
  %v2185 = vsub.f32 %v2168, %v2182
  %v2186 = vsub.f32 %v2169, %v2182
  %v2187 = vmul.f32 %v2183, 1.442695
  %v2188 = vpow.pop %v2187
  %v2189 = vmul.f32 %v2184, 1.442695
  %v2190 = vpow.pop %v2189
  %v2191 = vmul.f32 %v2185, 1.442695
  %v2192 = vpow.pop %v2191
  %v2193 = vmul.f32 %v2186, 1.442695
  %v2194 = vpow.pop %v2193
  %v2195 = vsel %vm26, %v2188, 0.0
  %v2196 = vsel %vm26, %v2190, 0.0
  %v2197 = vadd.f32 %v2195, %v2196
  %v2198 = vsel %vm26, %v2192, 0.0
  %v2199 = vadd.f32 %v2197, %v2198
  %v2200 = vsel %vm26, %v2194, 0.0
  %v2201 = vadd.f32 %v2199, %v2200
  %v2202 = vrot.slane %v2201, 4
  %v2203 = vadd.f32 %v2201, %v2202
  %v2204 = vrot.slane %v2203, 2
  %v2205 = vadd.f32 %v2203, %v2204
  %v2206 = vrot.slane %v2205, 1
  %v2207 = vadd.f32 %v2205, %v2206
  %v2208 = vrcp.pop %v2207
  %v2209 = vmul.f32 %v2188, %v2208
  %v2210 = vmul.f32 %v2190, %v2208
  %v2211 = vmul.f32 %v2192, %v2208
  %v2212 = vmul.f32 %v2194, %v2208
  %s2213 = scalar_lea.vmem %s3, 192
  %2214 = vst.msk [vmem:[%s2213] sm:$0xff] %vm26, %v2209
  %2215 = vst.msk [vmem:[%s2213 + $0x8] sm:$0xff] %vm26, %v2210
  %2216 = vst.msk [vmem:[%s2213 + $0x10] sm:$0xff] %vm26, %v2211
  %2217 = vst.msk [vmem:[%s2213 + $0x18] sm:$0xff] %vm26, %v2212
  %s2218 = scalar_lea.vmem %s0, 224
  %v2219 = vld [vmem:[%s2218] sm:$0xff]
  %v2220 = vld [vmem:[%s2218 + $0x8] sm:$0xff]
  %v2221 = vld [vmem:[%s2218 + $0x10] sm:$0xff]
  %v2222 = vld [vmem:[%s2218 + $0x18] sm:$0xff]
  %v2223 = vld [vmem:[%s1] sm:$0xff]
  %v2224 = vld [vmem:[%s1 + $0x8] sm:$0xff]
  %v2225 = vld [vmem:[%s1 + $0x10] sm:$0xff]
  %v2226 = vld [vmem:[%s1 + $0x18] sm:$0xff]
  %v2227 = vmul.f32 %v2219, %v2223
  %v2228 = vmul.f32 %v2220, %v2224
  %v2229 = vmul.f32 %v2221, %v2225
  %v2230 = vmul.f32 %v2222, %v2226
  %v2231 = vsel %vm26, %v2227, 0.0
  %v2232 = vsel %vm26, %v2228, 0.0
  %v2233 = vadd.f32 %v2231, %v2232
  %v2234 = vsel %vm26, %v2229, 0.0
  %v2235 = vadd.f32 %v2233, %v2234
  %v2236 = vsel %vm26, %v2230, 0.0
  %v2237 = vadd.f32 %v2235, %v2236
  %v2238 = vrot.slane %v2237, 4
  %v2239 = vadd.f32 %v2237, %v2238
  %v2240 = vrot.slane %v2239, 2
  %v2241 = vadd.f32 %v2239, %v2240
  %v2242 = vrot.slane %v2241, 1
  %v2243 = vadd.f32 %v2241, %v2242
  %v2244 = vld [vmem:[%s2] sm:$0xff]
  %v2245 = vld [vmem:[%s2 + $0x8] sm:$0xff]
  %v2246 = vld [vmem:[%s2 + $0x10] sm:$0xff]
  %v2247 = vld [vmem:[%s2 + $0x18] sm:$0xff]
  %v2248 = vmul.f32 %v2243, %v2244
  %v2249 = vmul.f32 %v2243, %v2245
  %v2250 = vmul.f32 %v2243, %v2246
  %v2251 = vmul.f32 %v2243, %v2247
  %v2252 = vld [vmem:[%s48] sm:$0xff]
  %v2253 = vld [vmem:[%s48 + $0x8] sm:$0xff]
  %v2254 = vld [vmem:[%s48 + $0x10] sm:$0xff]
  %v2255 = vld [vmem:[%s48 + $0x18] sm:$0xff]
  %v2256 = vmul.f32 %v2219, %v2252
  %v2257 = vmul.f32 %v2220, %v2253
  %v2258 = vmul.f32 %v2221, %v2254
  %v2259 = vmul.f32 %v2222, %v2255
  %v2260 = vsel %vm26, %v2256, 0.0
  %v2261 = vsel %vm26, %v2257, 0.0
  %v2262 = vadd.f32 %v2260, %v2261
  %v2263 = vsel %vm26, %v2258, 0.0
  %v2264 = vadd.f32 %v2262, %v2263
  %v2265 = vsel %vm26, %v2259, 0.0
  %v2266 = vadd.f32 %v2264, %v2265
  %v2267 = vrot.slane %v2266, 4
  %v2268 = vadd.f32 %v2266, %v2267
  %v2269 = vrot.slane %v2268, 2
  %v2270 = vadd.f32 %v2268, %v2269
  %v2271 = vrot.slane %v2270, 1
  %v2272 = vadd.f32 %v2270, %v2271
  %v2273 = vld [vmem:[%s70] sm:$0xff]
  %v2274 = vld [vmem:[%s70 + $0x8] sm:$0xff]
  %v2275 = vld [vmem:[%s70 + $0x10] sm:$0xff]
  %v2276 = vld [vmem:[%s70 + $0x18] sm:$0xff]
  %v2277 = vmul.f32 %v2272, %v2273
  %v2278 = vmul.f32 %v2272, %v2274
  %v2279 = vmul.f32 %v2272, %v2275
  %v2280 = vmul.f32 %v2272, %v2276
  %v2281 = vadd.f32 %v2248, %v2277
  %v2282 = vadd.f32 %v2249, %v2278
  %v2283 = vadd.f32 %v2250, %v2279
  %v2284 = vadd.f32 %v2251, %v2280
  %v2285 = vld [vmem:[%s83] sm:$0xff]
  %v2286 = vld [vmem:[%s83 + $0x8] sm:$0xff]
  %v2287 = vld [vmem:[%s83 + $0x10] sm:$0xff]
  %v2288 = vld [vmem:[%s83 + $0x18] sm:$0xff]
  %v2289 = vmul.f32 %v2219, %v2285
  %v2290 = vmul.f32 %v2220, %v2286
  %v2291 = vmul.f32 %v2221, %v2287
  %v2292 = vmul.f32 %v2222, %v2288
  %v2293 = vsel %vm26, %v2289, 0.0
  %v2294 = vsel %vm26, %v2290, 0.0
  %v2295 = vadd.f32 %v2293, %v2294
  %v2296 = vsel %vm26, %v2291, 0.0
  %v2297 = vadd.f32 %v2295, %v2296
  %v2298 = vsel %vm26, %v2292, 0.0
  %v2299 = vadd.f32 %v2297, %v2298
  %v2300 = vrot.slane %v2299, 4
  %v2301 = vadd.f32 %v2299, %v2300
  %v2302 = vrot.slane %v2301, 2
  %v2303 = vadd.f32 %v2301, %v2302
  %v2304 = vrot.slane %v2303, 1
  %v2305 = vadd.f32 %v2303, %v2304
  %v2306 = vld [vmem:[%s105] sm:$0xff]
  %v2307 = vld [vmem:[%s105 + $0x8] sm:$0xff]
  %v2308 = vld [vmem:[%s105 + $0x10] sm:$0xff]
  %v2309 = vld [vmem:[%s105 + $0x18] sm:$0xff]
  %v2310 = vmul.f32 %v2305, %v2306
  %v2311 = vmul.f32 %v2305, %v2307
  %v2312 = vmul.f32 %v2305, %v2308
  %v2313 = vmul.f32 %v2305, %v2309
  %v2314 = vadd.f32 %v2281, %v2310
  %v2315 = vadd.f32 %v2282, %v2311
  %v2316 = vadd.f32 %v2283, %v2312
  %v2317 = vadd.f32 %v2284, %v2313
  %v2318 = vld [vmem:[%s118] sm:$0xff]
  %v2319 = vld [vmem:[%s118 + $0x8] sm:$0xff]
  %v2320 = vld [vmem:[%s118 + $0x10] sm:$0xff]
  %v2321 = vld [vmem:[%s118 + $0x18] sm:$0xff]
  %v2322 = vmul.f32 %v2219, %v2318
  %v2323 = vmul.f32 %v2220, %v2319
  %v2324 = vmul.f32 %v2221, %v2320
  %v2325 = vmul.f32 %v2222, %v2321
  %v2326 = vsel %vm26, %v2322, 0.0
  %v2327 = vsel %vm26, %v2323, 0.0
  %v2328 = vadd.f32 %v2326, %v2327
  %v2329 = vsel %vm26, %v2324, 0.0
  %v2330 = vadd.f32 %v2328, %v2329
  %v2331 = vsel %vm26, %v2325, 0.0
  %v2332 = vadd.f32 %v2330, %v2331
  %v2333 = vrot.slane %v2332, 4
  %v2334 = vadd.f32 %v2332, %v2333
  %v2335 = vrot.slane %v2334, 2
  %v2336 = vadd.f32 %v2334, %v2335
  %v2337 = vrot.slane %v2336, 1
  %v2338 = vadd.f32 %v2336, %v2337
  %v2339 = vld [vmem:[%s140] sm:$0xff]
  %v2340 = vld [vmem:[%s140 + $0x8] sm:$0xff]
  %v2341 = vld [vmem:[%s140 + $0x10] sm:$0xff]
  %v2342 = vld [vmem:[%s140 + $0x18] sm:$0xff]
  %v2343 = vmul.f32 %v2338, %v2339
  %v2344 = vmul.f32 %v2338, %v2340
  %v2345 = vmul.f32 %v2338, %v2341
  %v2346 = vmul.f32 %v2338, %v2342
  %v2347 = vadd.f32 %v2314, %v2343
  %v2348 = vadd.f32 %v2315, %v2344
  %v2349 = vadd.f32 %v2316, %v2345
  %v2350 = vadd.f32 %v2317, %v2346
  %v2351 = vld [vmem:[%s153] sm:$0xff]
  %v2352 = vld [vmem:[%s153 + $0x8] sm:$0xff]
  %v2353 = vld [vmem:[%s153 + $0x10] sm:$0xff]
  %v2354 = vld [vmem:[%s153 + $0x18] sm:$0xff]
  %v2355 = vmul.f32 %v2219, %v2351
  %v2356 = vmul.f32 %v2220, %v2352
  %v2357 = vmul.f32 %v2221, %v2353
  %v2358 = vmul.f32 %v2222, %v2354
  %v2359 = vsel %vm26, %v2355, 0.0
  %v2360 = vsel %vm26, %v2356, 0.0
  %v2361 = vadd.f32 %v2359, %v2360
  %v2362 = vsel %vm26, %v2357, 0.0
  %v2363 = vadd.f32 %v2361, %v2362
  %v2364 = vsel %vm26, %v2358, 0.0
  %v2365 = vadd.f32 %v2363, %v2364
  %v2366 = vrot.slane %v2365, 4
  %v2367 = vadd.f32 %v2365, %v2366
  %v2368 = vrot.slane %v2367, 2
  %v2369 = vadd.f32 %v2367, %v2368
  %v2370 = vrot.slane %v2369, 1
  %v2371 = vadd.f32 %v2369, %v2370
  %v2372 = vld [vmem:[%s175] sm:$0xff]
  %v2373 = vld [vmem:[%s175 + $0x8] sm:$0xff]
  %v2374 = vld [vmem:[%s175 + $0x10] sm:$0xff]
  %v2375 = vld [vmem:[%s175 + $0x18] sm:$0xff]
  %v2376 = vmul.f32 %v2371, %v2372
  %v2377 = vmul.f32 %v2371, %v2373
  %v2378 = vmul.f32 %v2371, %v2374
  %v2379 = vmul.f32 %v2371, %v2375
  %v2380 = vadd.f32 %v2347, %v2376
  %v2381 = vadd.f32 %v2348, %v2377
  %v2382 = vadd.f32 %v2349, %v2378
  %v2383 = vadd.f32 %v2350, %v2379
  %v2384 = vld [vmem:[%s188] sm:$0xff]
  %v2385 = vld [vmem:[%s188 + $0x8] sm:$0xff]
  %v2386 = vld [vmem:[%s188 + $0x10] sm:$0xff]
  %v2387 = vld [vmem:[%s188 + $0x18] sm:$0xff]
  %v2388 = vmul.f32 %v2219, %v2384
  %v2389 = vmul.f32 %v2220, %v2385
  %v2390 = vmul.f32 %v2221, %v2386
  %v2391 = vmul.f32 %v2222, %v2387
  %v2392 = vsel %vm26, %v2388, 0.0
  %v2393 = vsel %vm26, %v2389, 0.0
  %v2394 = vadd.f32 %v2392, %v2393
  %v2395 = vsel %vm26, %v2390, 0.0
  %v2396 = vadd.f32 %v2394, %v2395
  %v2397 = vsel %vm26, %v2391, 0.0
  %v2398 = vadd.f32 %v2396, %v2397
  %v2399 = vrot.slane %v2398, 4
  %v2400 = vadd.f32 %v2398, %v2399
  %v2401 = vrot.slane %v2400, 2
  %v2402 = vadd.f32 %v2400, %v2401
  %v2403 = vrot.slane %v2402, 1
  %v2404 = vadd.f32 %v2402, %v2403
  %v2405 = vld [vmem:[%s210] sm:$0xff]
  %v2406 = vld [vmem:[%s210 + $0x8] sm:$0xff]
  %v2407 = vld [vmem:[%s210 + $0x10] sm:$0xff]
  %v2408 = vld [vmem:[%s210 + $0x18] sm:$0xff]
  %v2409 = vmul.f32 %v2404, %v2405
  %v2410 = vmul.f32 %v2404, %v2406
  %v2411 = vmul.f32 %v2404, %v2407
  %v2412 = vmul.f32 %v2404, %v2408
  %v2413 = vadd.f32 %v2380, %v2409
  %v2414 = vadd.f32 %v2381, %v2410
  %v2415 = vadd.f32 %v2382, %v2411
  %v2416 = vadd.f32 %v2383, %v2412
  %v2417 = vld [vmem:[%s223] sm:$0xff]
  %v2418 = vld [vmem:[%s223 + $0x8] sm:$0xff]
  %v2419 = vld [vmem:[%s223 + $0x10] sm:$0xff]
  %v2420 = vld [vmem:[%s223 + $0x18] sm:$0xff]
  %v2421 = vmul.f32 %v2219, %v2417
  %v2422 = vmul.f32 %v2220, %v2418
  %v2423 = vmul.f32 %v2221, %v2419
  %v2424 = vmul.f32 %v2222, %v2420
  %v2425 = vsel %vm26, %v2421, 0.0
  %v2426 = vsel %vm26, %v2422, 0.0
  %v2427 = vadd.f32 %v2425, %v2426
  %v2428 = vsel %vm26, %v2423, 0.0
  %v2429 = vadd.f32 %v2427, %v2428
  %v2430 = vsel %vm26, %v2424, 0.0
  %v2431 = vadd.f32 %v2429, %v2430
  %v2432 = vrot.slane %v2431, 4
  %v2433 = vadd.f32 %v2431, %v2432
  %v2434 = vrot.slane %v2433, 2
  %v2435 = vadd.f32 %v2433, %v2434
  %v2436 = vrot.slane %v2435, 1
  %v2437 = vadd.f32 %v2435, %v2436
  %v2438 = vld [vmem:[%s245] sm:$0xff]
  %v2439 = vld [vmem:[%s245 + $0x8] sm:$0xff]
  %v2440 = vld [vmem:[%s245 + $0x10] sm:$0xff]
  %v2441 = vld [vmem:[%s245 + $0x18] sm:$0xff]
  %v2442 = vmul.f32 %v2437, %v2438
  %v2443 = vmul.f32 %v2437, %v2439
  %v2444 = vmul.f32 %v2437, %v2440
  %v2445 = vmul.f32 %v2437, %v2441
  %v2446 = vadd.f32 %v2413, %v2442
  %v2447 = vadd.f32 %v2414, %v2443
  %v2448 = vadd.f32 %v2415, %v2444
  %v2449 = vadd.f32 %v2416, %v2445
  %v2450 = vld [vmem:[%s258] sm:$0xff]
  %v2451 = vld [vmem:[%s258 + $0x8] sm:$0xff]
  %v2452 = vld [vmem:[%s258 + $0x10] sm:$0xff]
  %v2453 = vld [vmem:[%s258 + $0x18] sm:$0xff]
  %v2454 = vmul.f32 %v2219, %v2450
  %v2455 = vmul.f32 %v2220, %v2451
  %v2456 = vmul.f32 %v2221, %v2452
  %v2457 = vmul.f32 %v2222, %v2453
  %v2458 = vsel %vm26, %v2454, 0.0
  %v2459 = vsel %vm26, %v2455, 0.0
  %v2460 = vadd.f32 %v2458, %v2459
  %v2461 = vsel %vm26, %v2456, 0.0
  %v2462 = vadd.f32 %v2460, %v2461
  %v2463 = vsel %vm26, %v2457, 0.0
  %v2464 = vadd.f32 %v2462, %v2463
  %v2465 = vrot.slane %v2464, 4
  %v2466 = vadd.f32 %v2464, %v2465
  %v2467 = vrot.slane %v2466, 2
  %v2468 = vadd.f32 %v2466, %v2467
  %v2469 = vrot.slane %v2468, 1
  %v2470 = vadd.f32 %v2468, %v2469
  %v2471 = vld [vmem:[%s280] sm:$0xff]
  %v2472 = vld [vmem:[%s280 + $0x8] sm:$0xff]
  %v2473 = vld [vmem:[%s280 + $0x10] sm:$0xff]
  %v2474 = vld [vmem:[%s280 + $0x18] sm:$0xff]
  %v2475 = vmul.f32 %v2470, %v2471
  %v2476 = vmul.f32 %v2470, %v2472
  %v2477 = vmul.f32 %v2470, %v2473
  %v2478 = vmul.f32 %v2470, %v2474
  %v2479 = vadd.f32 %v2446, %v2475
  %v2480 = vadd.f32 %v2447, %v2476
  %v2481 = vadd.f32 %v2448, %v2477
  %v2482 = vadd.f32 %v2449, %v2478
  %v2483 = vsel %vm26, %v2479, -inf
  %v2484 = vsel %vm26, %v2480, -inf
  %v2485 = vsel %vm26, %v2481, -inf
  %v2486 = vsel %vm26, %v2482, -inf
  %v2487 = vmax.f32 %v2483, %v2484
  %v2488 = vmax.f32 %v2485, %v2486
  %v2489 = vmax.f32 %v2487, %v2488
  %v2490 = vrot.slane %v2489, 4
  %v2491 = vmax.f32 %v2489, %v2490
  %v2492 = vrot.slane %v2491, 2
  %v2493 = vmax.f32 %v2491, %v2492
  %v2494 = vrot.slane %v2493, 1
  %v2495 = vmax.f32 %v2493, %v2494
  %v2496 = vsub.f32 %v2479, %v2495
  %v2497 = vsub.f32 %v2480, %v2495
  %v2498 = vsub.f32 %v2481, %v2495
  %v2499 = vsub.f32 %v2482, %v2495
  %v2500 = vmul.f32 %v2496, 1.442695
  %v2501 = vpow.pop %v2500
  %v2502 = vmul.f32 %v2497, 1.442695
  %v2503 = vpow.pop %v2502
  %v2504 = vmul.f32 %v2498, 1.442695
  %v2505 = vpow.pop %v2504
  %v2506 = vmul.f32 %v2499, 1.442695
  %v2507 = vpow.pop %v2506
  %v2508 = vsel %vm26, %v2501, 0.0
  %v2509 = vsel %vm26, %v2503, 0.0
  %v2510 = vadd.f32 %v2508, %v2509
  %v2511 = vsel %vm26, %v2505, 0.0
  %v2512 = vadd.f32 %v2510, %v2511
  %v2513 = vsel %vm26, %v2507, 0.0
  %v2514 = vadd.f32 %v2512, %v2513
  %v2515 = vrot.slane %v2514, 4
  %v2516 = vadd.f32 %v2514, %v2515
  %v2517 = vrot.slane %v2516, 2
  %v2518 = vadd.f32 %v2516, %v2517
  %v2519 = vrot.slane %v2518, 1
  %v2520 = vadd.f32 %v2518, %v2519
  %v2521 = vrcp.pop %v2520
  %v2522 = vmul.f32 %v2501, %v2521
  %v2523 = vmul.f32 %v2503, %v2521
  %v2524 = vmul.f32 %v2505, %v2521
  %v2525 = vmul.f32 %v2507, %v2521
  %s2526 = scalar_lea.vmem %s3, 224
  %2527 = vst.msk [vmem:[%s2526] sm:$0xff] %vm26, %v2522
  %2528 = vst.msk [vmem:[%s2526 + $0x8] sm:$0xff] %vm26, %v2523
  %2529 = vst.msk [vmem:[%s2526 + $0x10] sm:$0xff] %vm26, %v2524
  %2530 = vst.msk [vmem:[%s2526 + $0x18] sm:$0xff] %vm26, %v2525
  // Predicated region
  $region14: #{tpu_custom_call.1} parent=0 // pred_check
    _
  $region15: #{tpu_custom_call.1} parent=0 // pred_check_branch
    %2532 = sbr.rel (0) target = $region17
  $region16: #{tpu_custom_call.1} parent=0 // pred_region
    _
  $region17: #{tpu_custom_call.1} parent=0 // pred_fallthru
    _
  // Predicated region
  $region18: #{tpu_custom_call.1} parent=0 // pred_check
    _
  $region19: #{tpu_custom_call.1} parent=0 // pred_check_branch
    %2534 = sbr.rel (0) target = $region21
  $region20: #{tpu_custom_call.1} parent=0 // pred_region
    _
  $region21: #{tpu_custom_call.1} parent=0 // pred_fallthru
    _

</llo_original>
